<compile_context>
chip_gen: v7x
topology: tpu7x:2x2x1
jax: 0.10.0
libtpu: 0.0.40
codegen_flags: <defaults>
</compile_context>

<pallas_src>
import math

import jax
import jax.numpy as jnp
import numpy as np
from jax.experimental import pallas as pl
from jax.experimental.pallas import tpu as pltpu

# ----------------------------------------------------------------------------
# Reduced config (mirrors InstantNGPConfig semantics at small sizes)
# ----------------------------------------------------------------------------
NUM_LEVELS = 8           # L
FEATURE_DIM = 2          # F
BASE_RESOLUTION = 16
LOG2_HASHMAP_SIZE = 10   # table size 1024
PER_LEVEL_SCALE = 2.0
HIDDEN_DIM = 32          # sigma net hidden
GEO_FEATURE_DIM = 15
HIDDEN_DIM_COLOR = 32
SH_DEGREE = 4            # 16 SH features
NUM_SAMPLES = 16         # S : samples per ray
NUM_RAYS = 256           # N : rays (two ray tiles of 128)
RAYS_PER_TILE = 128      # RT: lane-dense rgb output block; TP = S*RT = 2048
NEAR, FAR = 0.5, 3.0

RESOLUTIONS = [int(np.ceil(BASE_RESOLUTION * PER_LEVEL_SCALE ** i)) for i in range(NUM_LEVELS)]
TABLE_SIZES = [min(r ** 3, 2 ** LOG2_HASHMAP_SIZE) for r in RESOLUTIONS]
# torch reference uses embeddings[0].num_embeddings as the hash modulus for ALL levels
HASH_MOD = TABLE_SIZES[0]

ENC_DIM = NUM_LEVELS * FEATURE_DIM          # 16
SH_DIM = SH_DEGREE ** 2                     # 16
SIGMA_OUT = 1 + GEO_FEATURE_DIM             # 16


# ----------------------------------------------------------------------------
# Fused Pallas kernel: sigma MLP + color MLP + volume rendering.
# Points on lanes: enc/sh are [feat, TP]; every MLP layer is W^T @ X.
# Within a tile the lane index is sample*RT + ray, so per-ray scans are
# strided lane rolls.
# ----------------------------------------------------------------------------
def fused_kernel(enc_ref, sh_ref, dists_ref,
                 w1_ref, b1_ref, w2_ref, b2_ref, w3_ref, b3_ref,
                 wc1s_ref, wc1d_ref, bc1_ref, wc2_ref, bc2_ref,
                 wc3_ref, bc3_ref,
                 rgb_ref, den_ref):
    TP = enc_ref.shape[1]          # points per tile (= S * RT)
    RT = rgb_ref.shape[1]          # rays per tile
    S = TP // RT                   # samples per ray

    f32 = jnp.float32
    bf16 = jnp.bfloat16

    # ---- sigma net: bf16 MXU inputs, f32 accumulation, f32 elementwise ----
    h = jnp.dot(w1_ref[...], enc_ref[...], preferred_element_type=f32) + b1_ref[...]
    h = jnp.maximum(h, 0.0).astype(bf16)
    h = jnp.dot(w2_ref[...], h, preferred_element_type=f32) + b2_ref[...]
    h = jnp.maximum(h, 0.0).astype(bf16)
    sig = jnp.dot(w3_ref[...], h, preferred_element_type=f32) + b3_ref[...]   # [16, TP] f32

    density = jnp.maximum(sig[0:1, :], 0.0)                                   # [1, TP] f32

    # ---- color net: two K=16 matmuls instead of a [32, TP] concat.
    # wc1s has a zero column for row 0 (raw density), so only the 15 geo
    # features + 16 SH features contribute, matching cat([geo, sh]) in torch.
    c = (jnp.dot(wc1s_ref[...], sig.astype(bf16), preferred_element_type=f32)
         + jnp.dot(wc1d_ref[...], sh_ref[...], preferred_element_type=f32)
         + bc1_ref[...])
    c = jnp.maximum(c, 0.0).astype(bf16)
    c = jnp.dot(wc2_ref[...], c, preferred_element_type=f32) + bc2_ref[...]
    c = jnp.maximum(c, 0.0).astype(bf16)
    rgb = jax.nn.sigmoid(
        jnp.dot(wc3_ref[...], c, preferred_element_type=f32) + bc3_ref[...])  # [3, TP] f32

    # ---- volume rendering epilogue (f32, per-ray, no O(TP^2) constants) ----
    dists = dists_ref[...]                                                    # [1, TP]
    od = density * dists
    alpha = 1.0 - jnp.exp(-od)
    # log(1 - alpha + 1e-10) ~= -density*dists; they only differ for the 1e10
    # far-plane sample (exp underflow), whose term never feeds a later sample,
    # so the rendered output matches the torch reference.
    # TODO(synk): switch back to log(1-alpha+1e-10) if bit parity is required.
    log_om = -od

    lane = jax.lax.broadcasted_iota(jnp.int32, (1, TP), 1)
    # Inclusive Hillis-Steele cumsum over samples (stride-RT segments, log2(S)
    # steps); wrapped lanes (first k*RT) are masked to zero.
    x = log_om
    k = 1
    while k < S:
        d = k * RT
        x = x + jnp.where(lane >= d, pltpu.roll(x, shift=d, axis=1), 0.0)
        k *= 2
    log_trans = x - log_om                  # exclusive cumsum -> log transmittance
    weights = alpha * jnp.exp(log_trans)    # [1, TP]

    # Per-ray weighted RGB sum: roll tree-reduction; ray r's total lands in
    # lane r (no wraparound reaches lanes < RT).
    wr = rgb * weights                      # [3, TP]
    k = 1
    while k < S:
        wr = wr + pltpu.roll(wr, shift=TP - k * RT, axis=1)   # == shift by -k*RT
        k *= 2
    rgb_ref[...] = wr[:, 0:RT]              # [3, RT] lane-dense per-tile rays
    den_ref[...] = density                  # [1, TP] lane-dense per-point density


def run_fused_kernel(enc_t, sh_t, dists_b, params, S, RT):
    P = enc_t.shape[1]
    TP = S * RT
    num_tiles = P // TP
    N = num_tiles * RT
    H, HC = HIDDEN_DIM, HIDDEN_DIM_COLOR

    # bf16 MXU inputs at the pallas_call boundary; f32 accumulation in-kernel.
    enc_bf = enc_t.astype(jnp.bfloat16)
    sh_bf = sh_t.astype(jnp.bfloat16)

    def tiled(shape):
        return pl.BlockSpec(shape, lambda i: (0, i))

    def resident(shape):                       # constant index map -> stays resident
        return pl.BlockSpec(shape, lambda i: (0, 0))

    in_specs = [
        tiled((ENC_DIM, TP)), tiled((SH_DIM, TP)), tiled((1, TP)),
        resident((H, ENC_DIM)), resident((H, 1)),
        resident((H, H)), resident((H, 1)),
        resident((SIGMA_OUT, H)), resident((SIGMA_OUT, 1)),
        resident((HC, SIGMA_OUT)), resident((HC, SH_DIM)), resident((HC, 1)),
        resident((HC, HC)), resident((HC, 1)),
        resident((3, HC)), resident((3, 1)),
    ]
    out_specs = [
        pl.BlockSpec((3, RT), lambda i: (0, i)),     # per-tile rays (disjoint)
        pl.BlockSpec((1, TP), lambda i: (0, i)),     # per-tile points (disjoint)
    ]
    out_shape = [jax.ShapeDtypeStruct((3, N), jnp.float32),
                 jax.ShapeDtypeStruct((1, P), jnp.float32)]

    rgb_t, den = pl.pallas_call(
        fused_kernel,
        grid=(num_tiles,),
        in_specs=in_specs,
        out_specs=out_specs,
        out_shape=out_shape,
        compiler_params=pltpu.CompilerParams(
            dimension_semantics=("parallel",),       # ray tiles are independent
            vmem_limit_bytes=32 * 1024 * 1024),
    )(enc_bf, sh_bf, dists_b,
      params["w1t"], params["b1"], params["w2t"], params["b2"],
      params["w3t"], params["b3"],
      params["wc1s"], params["wc1d"], params["bc1"],
      params["wc2t"], params["bc2"], params["wc3t"], params["bc3"])
    return rgb_t, den


# ----------------------------------------------------------------------------
# Glue: multiresolution hash encoding.  All levels are handled at once with a
# single stacked table, so there are 8 gathers (one per corner), not 64.
# ----------------------------------------------------------------------------
def hash_encode(pts, table):
    """pts: [P,3] in [-1,1] -> enc [P, L*F].

    The torch reference hashes with int64 primes then takes `% HASH_MOD`
    (level-0 table size) for every level; HASH_MOD is a power of two, so
    wrapping uint32 multiply/xor yields identical low bits -> same indices.
    """
    P = pts.shape[0]
    res_f = jnp.asarray(RESOLUTIONS, jnp.float32)                 # [L]
    res_i = jnp.asarray(RESOLUTIONS, jnp.int32)                   # [L]
    lvl_off = jnp.arange(NUM_LEVELS, dtype=jnp.int32) * HASH_MOD  # [L]

    scaled = (pts[:, None, :] + 1.0) * 0.5 * (res_f[None, :, None] - 1.0)   # [P,L,3]
    gridf = jnp.floor(scaled)
    w = scaled - gridf                                            # [P,L,3]
    gridi = gridf.astype(jnp.int32)
    fx, fy, fz = w[..., 0], w[..., 1], w[..., 2]                  # [P,L]

    p1 = jnp.uint32(1)
    p2 = jnp.uint32(2654435761)
    p3 = jnp.uint32(805459861)

    acc = jnp.zeros((P, NUM_LEVELS, FEATURE_DIM), jnp.float32)
    for dx in (0, 1):
        for dy in (0, 1):
            for dz in (0, 1):
                corner = jnp.clip(gridi + jnp.array([dx, dy, dz], jnp.int32),
                                  0, res_i[None, :, None] - 1)    # [P,L,3]
                cu = corner.astype(jnp.uint32)
                h = (cu[..., 0] * p1) ^ (cu[..., 1] * p2) ^ (cu[..., 2] * p3)
                idx = (h % jnp.uint32(HASH_MOD)).astype(jnp.int32) + lvl_off[None, :]
                # Matches the torch trilinear pairing exactly: the x-lerp
                # weight pairs with the dz bit, the z-lerp weight with dx.
                cw = ((fx if dz else (1.0 - fx)) *
                      (fy if dy else (1.0 - fy)) *
                      (fz if dx else (1.0 - fz)))                 # [P,L]
                # TODO(synk): at production scale move this data-dependent
                # gather in-kernel via PrefetchScalarGridSpec + manual DMA.
                acc = acc + cw[..., None] * jnp.take(table, idx, axis=0)
    return acc.reshape(P, NUM_LEVELS * FEATURE_DIM)


def sh_encode(dirs):
    """Spherical harmonics (degree 4) for [N,3] directions -> [N,16]."""
    nrm = jnp.sqrt(jnp.sum(dirs * dirs, axis=-1, keepdims=True))
    d = dirs / jnp.maximum(nrm, 1e-12)
    x, y, z = d[:, 0:1], d[:, 1:2], d[:, 2:3]
    xx, yy, zz = x * x, y * y, z * z
    sh = [
        0.28209479177387814 * jnp.ones_like(x),
        -0.48860251190291987 * y,
        0.48860251190291987 * z,
        -0.48860251190291987 * x,
        1.0925484305920792 * x * y,
        -1.0925484305920792 * y * z,
        0.31539156525252005 * (2.0 * zz - xx - yy),
        -1.0925484305920792 * x * z,
        0.5462742152960396 * (xx - yy),
        -0.5900435899266435 * y * (3.0 * xx - yy),
        2.890611442640554 * x * y * z,
        -0.4570457994644658 * y * (4.0 * zz - xx - yy),
        0.3731763325901154 * z * (2.0 * zz - 3.0 * xx - 3.0 * yy),
        -0.4570457994644658 * x * (4.0 * zz - xx - yy),
        1.445305721320277 * z * (xx - yy),
        -0.5900435899266435 * x * (xx - 3.0 * yy),
    ]
    return jnp.concatenate(sh, axis=-1)


# ----------------------------------------------------------------------------
# Parameter init (deterministic, synthetic; stored pre-transposed / bf16)
# ----------------------------------------------------------------------------
def init_params(key):
    def linear(k, fan_in, fan_out):
        k1, k2 = jax.random.split(k)
        bound = 1.0 / math.sqrt(fan_in)
        W = jax.random.uniform(k1, (fan_in, fan_out), jnp.float32, -bound, bound)
        b = jax.random.uniform(k2, (fan_out,), jnp.float32, -bound, bound)
        return W, b

    keys = jax.random.split(key, 7)
    w1, b1 = linear(keys[0], ENC_DIM, HIDDEN_DIM)
    w2, b2 = linear(keys[1], HIDDEN_DIM, HIDDEN_DIM)
    w3, b3 = linear(keys[2], HIDDEN_DIM, SIGMA_OUT)
    wc1, bc1 = linear(keys[3], GEO_FEATURE_DIM + SH_DIM, HIDDEN_DIM_COLOR)
    wc2, bc2 = linear(keys[4], HIDDEN_DIM_COLOR, HIDDEN_DIM_COLOR)
    wc3, bc3 = linear(keys[5], HIDDEN_DIM_COLOR, 3)

    bf16 = jnp.bfloat16
    wc1t = wc1.T                                              # [HC, 31]
    params = {
        # kernel layout: out = W^T @ x + b (points on lanes); bf16 MXU weights,
        # f32 biases (added after f32 accumulation).
        "w1t": w1.T.astype(bf16), "b1": b1[:, None],
        "w2t": w2.T.astype(bf16), "b2": b2[:, None],
        "w3t": w3.T.astype(bf16), "b3": b3[:, None],
        # color layer 1 split into a sigma/geo branch (zero column 0 ignores
        # the raw-density row of the sigma-net output) and an SH branch.
        "wc1s": jnp.concatenate(
            [jnp.zeros((HIDDEN_DIM_COLOR, 1), jnp.float32),
             wc1t[:, :GEO_FEATURE_DIM]], axis=1).astype(bf16),
        "wc1d": wc1t[:, GEO_FEATURE_DIM:].astype(bf16),
        "bc1": bc1[:, None],
        "wc2t": wc2.T.astype(bf16), "bc2": bc2[:, None],
        "wc3t": wc3.T.astype(bf16), "bc3": bc3[:, None],
        # All hash levels stacked into one table.  Only the first HASH_MOD rows
        # of each level are ever addressed (the reference hashes every level
        # modulo the level-0 table size), so this is exactly equivalent.
        "table": jax.random.uniform(
            keys[6], (NUM_LEVELS * HASH_MOD, FEATURE_DIM), jnp.float32,
            -1e-4, 1e-4),
    }
    return params


# ----------------------------------------------------------------------------
# Full forward pass (matches InstantNGPModel.forward semantics, eval path)
# ----------------------------------------------------------------------------
def instant_ngp_forward(params, rays_o, rays_d, near=NEAR, far=FAR,
                        num_samples=NUM_SAMPLES, rays_per_tile=RAYS_PER_TILE):
    N = rays_o.shape[0]
    S = num_samples
    RT = min(rays_per_tile, N)
    assert N % RT == 0 and (S * RT) % 128 == 0
    num_tiles = N // RT
    P = N * S
    TP = S * RT

    # sample_rays (eval path: uniform z)
    t_vals = jnp.linspace(0.0, 1.0, S, dtype=jnp.float32)
    z_vals = near * (1.0 - t_vals)[None, :] + far * t_vals[None, :]
    z_vals = jnp.broadcast_to(z_vals, (N, S)).astype(jnp.float32)
    pts = rays_o[:, None, :] + rays_d[:, None, :] * z_vals[:, :, None]     # [N,S,3]

    # Blocked sample-major point layout: flat index = tile*TP + sample*RT + ray
    # (each ray lives entirely in one tile, samples are RT lanes apart).
    def block_points(x):                      # [N, S, ...] -> [P, ...]
        t = x.reshape((num_tiles, RT, S) + x.shape[2:])
        perm = (0, 2, 1) + tuple(range(3, t.ndim))
        return t.transpose(perm).reshape((P,) + x.shape[2:])

    pts_b = block_points(pts)                                               # [P,3]

    # hash encoding (8 batched corner gathers + fused trilinear interp)
    enc_t = hash_encode(pts_b, params["table"]).T                           # [16,P]

    # SH view encoding computed once per ray, broadcast across samples
    dnorm = jnp.sqrt(jnp.sum(rays_d * rays_d, axis=-1, keepdims=True))      # [N,1]
    sh_ray = sh_encode(rays_d)                                              # [N,16]
    sh_t = jnp.broadcast_to(
        sh_ray.reshape(num_tiles, 1, RT, SH_DIM),
        (num_tiles, S, RT, SH_DIM)).reshape(P, SH_DIM).T                    # [16,P]

    # per-point dists in the same blocked layout
    dists = jnp.concatenate(
        [z_vals[:, 1:] - z_vals[:, :-1], jnp.full((N, 1), 1e10, jnp.float32)],
        axis=1) * dnorm                                                     # [N,S]
    dists_b = block_points(dists).reshape(1, P)

    rgb_t, den = run_fused_kernel(enc_t, sh_t, dists_b, params, S, RT)

    # un-block per-point density back to the reference (ray-major) ordering
    density = den.reshape(num_tiles, S, RT).transpose(0, 2, 1).reshape(N * S)
    return rgb_t.T, density


if __name__ == "__main__":
    key = jax.random.PRNGKey(0)
    kp, ko, kd = jax.random.split(key, 3)
    params = init_params(kp)

    rays_o = 0.5 * jax.random.normal(ko, (NUM_RAYS, 3), jnp.float32)
    rays_d = jax.random.normal(kd, (NUM_RAYS, 3), jnp.float32)

    fwd = jax.jit(instant_ngp_forward)
    rgb, density = fwd(params, rays_o, rays_d)
    jax.block_until_ready((rgb, density))

    assert rgb.shape == (NUM_RAYS, 3)
    assert density.shape == (NUM_RAYS * NUM_SAMPLES,)
    assert bool(jnp.all(jnp.isfinite(rgb))) and bool(jnp.all(jnp.isfinite(density)))
    print("KERNEL_OK")
</pallas_src>

<mosaic_0001>
module attributes {stable_mosaic.version = 11 : i64} {
  func.func @fused_kernel(%arg0: i32, %arg1: memref<16x2048xbf16, #tpu.memory_space<vmem>>, %arg2: memref<16x2048xbf16, #tpu.memory_space<vmem>>, %arg3: memref<1x2048xf32, #tpu.memory_space<vmem>>, %arg4: memref<32x16xbf16, #tpu.memory_space<vmem>>, %arg5: memref<32x1xf32, #tpu.memory_space<vmem>>, %arg6: memref<32x32xbf16, #tpu.memory_space<vmem>>, %arg7: memref<32x1xf32, #tpu.memory_space<vmem>>, %arg8: memref<16x32xbf16, #tpu.memory_space<vmem>>, %arg9: memref<16x1xf32, #tpu.memory_space<vmem>>, %arg10: memref<32x16xbf16, #tpu.memory_space<vmem>>, %arg11: memref<32x16xbf16, #tpu.memory_space<vmem>>, %arg12: memref<32x1xf32, #tpu.memory_space<vmem>>, %arg13: memref<32x32xbf16, #tpu.memory_space<vmem>>, %arg14: memref<32x1xf32, #tpu.memory_space<vmem>>, %arg15: memref<3x32xbf16, #tpu.memory_space<vmem>>, %arg16: memref<3x1xf32, #tpu.memory_space<vmem>>, %arg17: memref<3x128xf32, #tpu.memory_space<vmem>>, %arg18: memref<1x2048xf32, #tpu.memory_space<vmem>>) attributes {dimension_semantics = [#tpu.dimension_semantics<parallel>], iteration_bounds = array<i64: 2>, scalar_prefetch = 0 : i64, scratch_operands = 0 : i64, tpu.core_type = #tpu.core_type<tc>, window_params = [{transform_indices = @transform_0, window_bounds = array<i64: 16, 2048>}, {transform_indices = @transform_1, window_bounds = array<i64: 16, 2048>}, {transform_indices = @transform_2, window_bounds = array<i64: 1, 2048>}, {pipeline_mode = #tpu.pipeline_mode<synchronous>, transform_indices = @transform_3, window_bounds = array<i64: 32, 16>}, {pipeline_mode = #tpu.pipeline_mode<synchronous>, transform_indices = @transform_4, window_bounds = array<i64: 32, 1>}, {pipeline_mode = #tpu.pipeline_mode<synchronous>, transform_indices = @transform_5, window_bounds = array<i64: 32, 32>}, {pipeline_mode = #tpu.pipeline_mode<synchronous>, transform_indices = @transform_6, window_bounds = array<i64: 32, 1>}, {pipeline_mode = #tpu.pipeline_mode<synchronous>, transform_indices = @transform_7, window_bounds = array<i64: 16, 32>}, {pipeline_mode = #tpu.pipeline_mode<synchronous>, transform_indices = @transform_8, window_bounds = array<i64: 16, 1>}, {pipeline_mode = #tpu.pipeline_mode<synchronous>, transform_indices = @transform_9, window_bounds = array<i64: 32, 16>}, {pipeline_mode = #tpu.pipeline_mode<synchronous>, transform_indices = @transform_10, window_bounds = array<i64: 32, 16>}, {pipeline_mode = #tpu.pipeline_mode<synchronous>, transform_indices = @transform_11, window_bounds = array<i64: 32, 1>}, {pipeline_mode = #tpu.pipeline_mode<synchronous>, transform_indices = @transform_12, window_bounds = array<i64: 32, 32>}, {pipeline_mode = #tpu.pipeline_mode<synchronous>, transform_indices = @transform_13, window_bounds = array<i64: 32, 1>}, {pipeline_mode = #tpu.pipeline_mode<synchronous>, transform_indices = @transform_14, window_bounds = array<i64: 3, 32>}, {pipeline_mode = #tpu.pipeline_mode<synchronous>, transform_indices = @transform_15, window_bounds = array<i64: 3, 1>}, {transform_indices = @transform_16, window_bounds = array<i64: 3, 128>}, {transform_indices = @transform_17, window_bounds = array<i64: 1, 2048>}]} {
    %c0 = arith.constant 0 : index
    %c0_0 = arith.constant 0 : index
    %0 = vector.load %arg4[%c0, %c0_0] : memref<32x16xbf16, #tpu.memory_space<vmem>>, vector<32x16xbf16>
    %c0_1 = arith.constant 0 : index
    %c0_2 = arith.constant 0 : index
    %1 = vector.load %arg1[%c0_1, %c0_2] : memref<16x2048xbf16, #tpu.memory_space<vmem>>, vector<16x2048xbf16>
    %cst = arith.constant dense<0.000000e+00> : vector<32x2048xf32>
    %2 = tpu.matmul %0, %1, %cst {dimension_numbers = #tpu.dot_dimension_numbers<[1], [0], [0], [1], [0, 0, 1, 1], [], []>} : vector<32x16xbf16>, vector<16x2048xbf16>, vector<32x2048xf32> -> vector<32x2048xf32>
    %c0_3 = arith.constant 0 : index
    %c0_4 = arith.constant 0 : index
    %3 = vector.load %arg5[%c0_3, %c0_4] : memref<32x1xf32, #tpu.memory_space<vmem>>, vector<32x1xf32>
    %4 = vector.broadcast %3 : vector<32x1xf32> to vector<32x2048xf32>
    %5 = arith.addf %2, %4 : vector<32x2048xf32>
    %cst_5 = arith.constant 0.000000e+00 : f32
    %6 = vector.broadcast %cst_5 : f32 to vector<32x2048xf32>
    %7 = arith.maximumf %5, %6 : vector<32x2048xf32>
    %8 = arith.truncf %7 : vector<32x2048xf32> to vector<32x2048xbf16>
    %c0_6 = arith.constant 0 : index
    %c0_7 = arith.constant 0 : index
    %9 = vector.load %arg6[%c0_6, %c0_7] : memref<32x32xbf16, #tpu.memory_space<vmem>>, vector<32x32xbf16>
    %cst_8 = arith.constant dense<0.000000e+00> : vector<32x2048xf32>
    %10 = tpu.matmul %9, %8, %cst_8 {dimension_numbers = #tpu.dot_dimension_numbers<[1], [0], [0], [1], [0, 0, 1, 1], [], []>} : vector<32x32xbf16>, vector<32x2048xbf16>, vector<32x2048xf32> -> vector<32x2048xf32>
    %c0_9 = arith.constant 0 : index
    %c0_10 = arith.constant 0 : index
    %11 = vector.load %arg7[%c0_9, %c0_10] : memref<32x1xf32, #tpu.memory_space<vmem>>, vector<32x1xf32>
    %12 = vector.broadcast %11 : vector<32x1xf32> to vector<32x2048xf32>
    %13 = arith.addf %10, %12 : vector<32x2048xf32>
    %cst_11 = arith.constant 0.000000e+00 : f32
    %14 = vector.broadcast %cst_11 : f32 to vector<32x2048xf32>
    %15 = arith.maximumf %13, %14 : vector<32x2048xf32>
    %16 = arith.truncf %15 : vector<32x2048xf32> to vector<32x2048xbf16>
    %c0_12 = arith.constant 0 : index
    %c0_13 = arith.constant 0 : index
    %17 = vector.load %arg8[%c0_12, %c0_13] : memref<16x32xbf16, #tpu.memory_space<vmem>>, vector<16x32xbf16>
    %cst_14 = arith.constant dense<0.000000e+00> : vector<16x2048xf32>
    %18 = tpu.matmul %17, %16, %cst_14 {dimension_numbers = #tpu.dot_dimension_numbers<[1], [0], [0], [1], [0, 0, 1, 1], [], []>} : vector<16x32xbf16>, vector<32x2048xbf16>, vector<16x2048xf32> -> vector<16x2048xf32>
    %c0_15 = arith.constant 0 : index
    %c0_16 = arith.constant 0 : index
    %19 = vector.load %arg9[%c0_15, %c0_16] : memref<16x1xf32, #tpu.memory_space<vmem>>, vector<16x1xf32>
    %20 = vector.broadcast %19 : vector<16x1xf32> to vector<16x2048xf32>
    %21 = arith.addf %18, %20 : vector<16x2048xf32>
    %22 = vector.extract_strided_slice %21 {offsets = [0, 0], sizes = [1, 2048], strides = [1, 1]} : vector<16x2048xf32> to vector<1x2048xf32>
    %cst_17 = arith.constant 0.000000e+00 : f32
    %23 = vector.broadcast %cst_17 : f32 to vector<1x2048xf32>
    %24 = arith.maximumf %22, %23 : vector<1x2048xf32>
    %c0_18 = arith.constant 0 : index
    %c0_19 = arith.constant 0 : index
    %25 = vector.load %arg10[%c0_18, %c0_19] : memref<32x16xbf16, #tpu.memory_space<vmem>>, vector<32x16xbf16>
    %26 = arith.truncf %21 : vector<16x2048xf32> to vector<16x2048xbf16>
    %cst_20 = arith.constant dense<0.000000e+00> : vector<32x2048xf32>
    %27 = tpu.matmul %25, %26, %cst_20 {dimension_numbers = #tpu.dot_dimension_numbers<[1], [0], [0], [1], [0, 0, 1, 1], [], []>} : vector<32x16xbf16>, vector<16x2048xbf16>, vector<32x2048xf32> -> vector<32x2048xf32>
    %c0_21 = arith.constant 0 : index
    %c0_22 = arith.constant 0 : index
    %28 = vector.load %arg11[%c0_21, %c0_22] : memref<32x16xbf16, #tpu.memory_space<vmem>>, vector<32x16xbf16>
    %c0_23 = arith.constant 0 : index
    %c0_24 = arith.constant 0 : index
    %29 = vector.load %arg2[%c0_23, %c0_24] : memref<16x2048xbf16, #tpu.memory_space<vmem>>, vector<16x2048xbf16>
    %cst_25 = arith.constant dense<0.000000e+00> : vector<32x2048xf32>
    %30 = tpu.matmul %28, %29, %cst_25 {dimension_numbers = #tpu.dot_dimension_numbers<[1], [0], [0], [1], [0, 0, 1, 1], [], []>} : vector<32x16xbf16>, vector<16x2048xbf16>, vector<32x2048xf32> -> vector<32x2048xf32>
    %31 = arith.addf %27, %30 : vector<32x2048xf32>
    %c0_26 = arith.constant 0 : index
    %c0_27 = arith.constant 0 : index
    %32 = vector.load %arg12[%c0_26, %c0_27] : memref<32x1xf32, #tpu.memory_space<vmem>>, vector<32x1xf32>
    %33 = vector.broadcast %32 : vector<32x1xf32> to vector<32x2048xf32>
    %34 = arith.addf %31, %33 : vector<32x2048xf32>
    %cst_28 = arith.constant 0.000000e+00 : f32
    %35 = vector.broadcast %cst_28 : f32 to vector<32x2048xf32>
    %36 = arith.maximumf %34, %35 : vector<32x2048xf32>
    %37 = arith.truncf %36 : vector<32x2048xf32> to vector<32x2048xbf16>
    %c0_29 = arith.constant 0 : index
    %c0_30 = arith.constant 0 : index
    %38 = vector.load %arg13[%c0_29, %c0_30] : memref<32x32xbf16, #tpu.memory_space<vmem>>, vector<32x32xbf16>
    %cst_31 = arith.constant dense<0.000000e+00> : vector<32x2048xf32>
    %39 = tpu.matmul %38, %37, %cst_31 {dimension_numbers = #tpu.dot_dimension_numbers<[1], [0], [0], [1], [0, 0, 1, 1], [], []>} : vector<32x32xbf16>, vector<32x2048xbf16>, vector<32x2048xf32> -> vector<32x2048xf32>
    %c0_32 = arith.constant 0 : index
    %c0_33 = arith.constant 0 : index
    %40 = vector.load %arg14[%c0_32, %c0_33] : memref<32x1xf32, #tpu.memory_space<vmem>>, vector<32x1xf32>
    %41 = vector.broadcast %40 : vector<32x1xf32> to vector<32x2048xf32>
    %42 = arith.addf %39, %41 : vector<32x2048xf32>
    %cst_34 = arith.constant 0.000000e+00 : f32
    %43 = vector.broadcast %cst_34 : f32 to vector<32x2048xf32>
    %44 = arith.maximumf %42, %43 : vector<32x2048xf32>
    %45 = arith.truncf %44 : vector<32x2048xf32> to vector<32x2048xbf16>
    %c0_35 = arith.constant 0 : index
    %c0_36 = arith.constant 0 : index
    %46 = vector.load %arg15[%c0_35, %c0_36] : memref<3x32xbf16, #tpu.memory_space<vmem>>, vector<3x32xbf16>
    %cst_37 = arith.constant dense<0.000000e+00> : vector<3x2048xf32>
    %47 = tpu.matmul %46, %45, %cst_37 {dimension_numbers = #tpu.dot_dimension_numbers<[1], [0], [0], [1], [0, 0, 1, 1], [], []>} : vector<3x32xbf16>, vector<32x2048xbf16>, vector<3x2048xf32> -> vector<3x2048xf32>
    %c0_38 = arith.constant 0 : index
    %c0_39 = arith.constant 0 : index
    %48 = vector.load %arg16[%c0_38, %c0_39] : memref<3x1xf32, #tpu.memory_space<vmem>>, vector<3x1xf32>
    %49 = vector.broadcast %48 : vector<3x1xf32> to vector<3x2048xf32>
    %50 = arith.addf %47, %49 : vector<3x2048xf32>
    %51 = arith.negf %50 : vector<3x2048xf32>
    %52 = math.exp %51 : vector<3x2048xf32>
    %cst_40 = arith.constant 1.000000e+00 : f32
    %53 = vector.broadcast %cst_40 : f32 to vector<3x2048xf32>
    %54 = arith.addf %53, %52 : vector<3x2048xf32>
    %55 = arith.divf %53, %54 : vector<3x2048xf32>
    %c0_41 = arith.constant 0 : index
    %c0_42 = arith.constant 0 : index
    %56 = vector.load %arg3[%c0_41, %c0_42] : memref<1x2048xf32, #tpu.memory_space<vmem>>, vector<1x2048xf32>
    %57 = arith.mulf %24, %56 : vector<1x2048xf32>
    %cst_43 = arith.constant 0.000000e+00 : f32
    %58 = vector.broadcast %cst_43 : f32 to vector<1x2048xf32>
    %59 = arith.subf %58, %57 : vector<1x2048xf32>
    %60 = math.exp %59 : vector<1x2048xf32>
    %cst_44 = arith.constant 1.000000e+00 : f32
    %61 = vector.broadcast %cst_44 : f32 to vector<1x2048xf32>
    %62 = arith.subf %61, %60 : vector<1x2048xf32>
    %cst_45 = arith.constant 0.000000e+00 : f32
    %63 = vector.broadcast %cst_45 : f32 to vector<1x2048xf32>
    %64 = arith.subf %63, %57 : vector<1x2048xf32>
    %65 = tpu.iota {dimensions = array<i32: 1>} : vector<1x2048xi32>
    %c128_i32 = arith.constant 128 : i32
    %66 = vector.broadcast %c128_i32 : i32 to vector<1x2048xi32>
    %67 = arith.cmpi sge, %65, %66 : vector<1x2048xi32>
    %c128_i32_46 = arith.constant 128 : i32
    %68 = tpu.dynamic_rotate %64 by %c128_i32_46 dim 1 : vector<1x2048xf32>, i32 -> vector<1x2048xf32>
    %cst_47 = arith.constant 0.000000e+00 : f32
    %69 = vector.broadcast %cst_47 : f32 to vector<1x2048xf32>
    %70 = arith.select %67, %68, %69 : vector<1x2048xi1>, vector<1x2048xf32>
    %71 = arith.addf %64, %70 : vector<1x2048xf32>
    %c256_i32 = arith.constant 256 : i32
    %72 = vector.broadcast %c256_i32 : i32 to vector<1x2048xi32>
    %73 = arith.cmpi sge, %65, %72 : vector<1x2048xi32>
    %c256_i32_48 = arith.constant 256 : i32
    %74 = tpu.dynamic_rotate %71 by %c256_i32_48 dim 1 : vector<1x2048xf32>, i32 -> vector<1x2048xf32>
    %cst_49 = arith.constant 0.000000e+00 : f32
    %75 = vector.broadcast %cst_49 : f32 to vector<1x2048xf32>
    %76 = arith.select %73, %74, %75 : vector<1x2048xi1>, vector<1x2048xf32>
    %77 = arith.addf %71, %76 : vector<1x2048xf32>
    %c512_i32 = arith.constant 512 : i32
    %78 = vector.broadcast %c512_i32 : i32 to vector<1x2048xi32>
    %79 = arith.cmpi sge, %65, %78 : vector<1x2048xi32>
    %c512_i32_50 = arith.constant 512 : i32
    %80 = tpu.dynamic_rotate %77 by %c512_i32_50 dim 1 : vector<1x2048xf32>, i32 -> vector<1x2048xf32>
    %cst_51 = arith.constant 0.000000e+00 : f32
    %81 = vector.broadcast %cst_51 : f32 to vector<1x2048xf32>
    %82 = arith.select %79, %80, %81 : vector<1x2048xi1>, vector<1x2048xf32>
    %83 = arith.addf %77, %82 : vector<1x2048xf32>
    %c1024_i32 = arith.constant 1024 : i32
    %84 = vector.broadcast %c1024_i32 : i32 to vector<1x2048xi32>
    %85 = arith.cmpi sge, %65, %84 : vector<1x2048xi32>
    %c1024_i32_52 = arith.constant 1024 : i32
    %86 = tpu.dynamic_rotate %83 by %c1024_i32_52 dim 1 : vector<1x2048xf32>, i32 -> vector<1x2048xf32>
    %cst_53 = arith.constant 0.000000e+00 : f32
    %87 = vector.broadcast %cst_53 : f32 to vector<1x2048xf32>
    %88 = arith.select %85, %86, %87 : vector<1x2048xi1>, vector<1x2048xf32>
    %89 = arith.addf %83, %88 : vector<1x2048xf32>
    %90 = arith.subf %89, %64 : vector<1x2048xf32>
    %91 = math.exp %90 : vector<1x2048xf32>
    %92 = arith.mulf %62, %91 : vector<1x2048xf32>
    %93 = vector.broadcast %92 : vector<1x2048xf32> to vector<3x2048xf32>
    %94 = arith.mulf %55, %93 : vector<3x2048xf32>
    %c1920_i32 = arith.constant 1920 : i32
    %95 = tpu.dynamic_rotate %94 by %c1920_i32 dim 1 : vector<3x2048xf32>, i32 -> vector<3x2048xf32>
    %96 = arith.addf %94, %95 : vector<3x2048xf32>
    %c1792_i32 = arith.constant 1792 : i32
    %97 = tpu.dynamic_rotate %96 by %c1792_i32 dim 1 : vector<3x2048xf32>, i32 -> vector<3x2048xf32>
    %98 = arith.addf %96, %97 : vector<3x2048xf32>
    %c1536_i32 = arith.constant 1536 : i32
    %99 = tpu.dynamic_rotate %98 by %c1536_i32 dim 1 : vector<3x2048xf32>, i32 -> vector<3x2048xf32>
    %100 = arith.addf %98, %99 : vector<3x2048xf32>
    %c1024_i32_54 = arith.constant 1024 : i32
    %101 = tpu.dynamic_rotate %100 by %c1024_i32_54 dim 1 : vector<3x2048xf32>, i32 -> vector<3x2048xf32>
    %102 = arith.addf %100, %101 : vector<3x2048xf32>
    %103 = vector.extract_strided_slice %102 {offsets = [0, 0], sizes = [3, 128], strides = [1, 1]} : vector<3x2048xf32> to vector<3x128xf32>
    %c0_55 = arith.constant 0 : index
    %c0_56 = arith.constant 0 : index
    %104 = vector.load %arg17[%c0_55, %c0_56] : memref<3x128xf32, #tpu.memory_space<vmem>>, vector<3x128xf32>
    tpu.vector_store %arg17[%c0_55, %c0_56], %103 {strides = array<i32>} : memref<3x128xf32, #tpu.memory_space<vmem>>, vector<3x128xf32>,
    %c0_57 = arith.constant 0 : index
    %c0_58 = arith.constant 0 : index
    %105 = vector.load %arg18[%c0_57, %c0_58] : memref<1x2048xf32, #tpu.memory_space<vmem>>, vector<1x2048xf32>
    tpu.vector_store %arg18[%c0_57, %c0_58], %24 {strides = array<i32>} : memref<1x2048xf32, #tpu.memory_space<vmem>>, vector<1x2048xf32>,
    return
  }
  func.func @transform_0(%arg0: i32) -> (i32, i32) {
    %c0_i32 = arith.constant 0 : i32
    %c0_i32_0 = arith.constant 0 : i32
    return %c0_i32, %arg0 : i32, i32
  }
  func.func @transform_1(%arg0: i32) -> (i32, i32) {
    %c0_i32 = arith.constant 0 : i32
    %c0_i32_0 = arith.constant 0 : i32
    return %c0_i32, %arg0 : i32, i32
  }
  func.func @transform_2(%arg0: i32) -> (i32, i32) {
    %c0_i32 = arith.constant 0 : i32
    %c0_i32_0 = arith.constant 0 : i32
    return %c0_i32, %arg0 : i32, i32
  }
  func.func @transform_3(%arg0: i32) -> (i32, i32) {
    %c0_i32 = arith.constant 0 : i32
    %c0_i32_0 = arith.constant 0 : i32
    %c0_i32_1 = arith.constant 0 : i32
    return %c0_i32, %c0_i32_0 : i32, i32
  }
  func.func @transform_4(%arg0: i32) -> (i32, i32) {
    %c0_i32 = arith.constant 0 : i32
    %c0_i32_0 = arith.constant 0 : i32
    %c0_i32_1 = arith.constant 0 : i32
    return %c0_i32, %c0_i32_0 : i32, i32
  }
  func.func @transform_5(%arg0: i32) -> (i32, i32) {
    %c0_i32 = arith.constant 0 : i32
    %c0_i32_0 = arith.constant 0 : i32
    %c0_i32_1 = arith.constant 0 : i32
    return %c0_i32, %c0_i32_0 : i32, i32
  }
  func.func @transform_6(%arg0: i32) -> (i32, i32) {
    %c0_i32 = arith.constant 0 : i32
    %c0_i32_0 = arith.constant 0 : i32
    %c0_i32_1 = arith.constant 0 : i32
    return %c0_i32, %c0_i32_0 : i32, i32
  }
  func.func @transform_7(%arg0: i32) -> (i32, i32) {
    %c0_i32 = arith.constant 0 : i32
    %c0_i32_0 = arith.constant 0 : i32
    %c0_i32_1 = arith.constant 0 : i32
    return %c0_i32, %c0_i32_0 : i32, i32
  }
  func.func @transform_8(%arg0: i32) -> (i32, i32) {
    %c0_i32 = arith.constant 0 : i32
    %c0_i32_0 = arith.constant 0 : i32
    %c0_i32_1 = arith.constant 0 : i32
    return %c0_i32, %c0_i32_0 : i32, i32
  }
  func.func @transform_9(%arg0: i32) -> (i32, i32) {
    %c0_i32 = arith.constant 0 : i32
    %c0_i32_0 = arith.constant 0 : i32
    %c0_i32_1 = arith.constant 0 : i32
    return %c0_i32, %c0_i32_0 : i32, i32
  }
  func.func @transform_10(%arg0: i32) -> (i32, i32) {
    %c0_i32 = arith.constant 0 : i32
    %c0_i32_0 = arith.constant 0 : i32
    %c0_i32_1 = arith.constant 0 : i32
    return %c0_i32, %c0_i32_0 : i32, i32
  }
  func.func @transform_11(%arg0: i32) -> (i32, i32) {
    %c0_i32 = arith.constant 0 : i32
    %c0_i32_0 = arith.constant 0 : i32
    %c0_i32_1 = arith.constant 0 : i32
    return %c0_i32, %c0_i32_0 : i32, i32
  }
  func.func @transform_12(%arg0: i32) -> (i32, i32) {
    %c0_i32 = arith.constant 0 : i32
    %c0_i32_0 = arith.constant 0 : i32
    %c0_i32_1 = arith.constant 0 : i32
    return %c0_i32, %c0_i32_0 : i32, i32
  }
  func.func @transform_13(%arg0: i32) -> (i32, i32) {
    %c0_i32 = arith.constant 0 : i32
    %c0_i32_0 = arith.constant 0 : i32
    %c0_i32_1 = arith.constant 0 : i32
    return %c0_i32, %c0_i32_0 : i32, i32
  }
  func.func @transform_14(%arg0: i32) -> (i32, i32) {
    %c0_i32 = arith.constant 0 : i32
    %c0_i32_0 = arith.constant 0 : i32
    %c0_i32_1 = arith.constant 0 : i32
    return %c0_i32, %c0_i32_0 : i32, i32
  }
  func.func @transform_15(%arg0: i32) -> (i32, i32) {
    %c0_i32 = arith.constant 0 : i32
    %c0_i32_0 = arith.constant 0 : i32
    %c0_i32_1 = arith.constant 0 : i32
    return %c0_i32, %c0_i32_0 : i32, i32
  }
  func.func @transform_16(%arg0: i32) -> (i32, i32) {
    %c0_i32 = arith.constant 0 : i32
    %c0_i32_0 = arith.constant 0 : i32
    return %c0_i32, %arg0 : i32, i32
  }
  func.func @transform_17(%arg0: i32) -> (i32, i32) {
    %c0_i32 = arith.constant 0 : i32
    %c0_i32_0 = arith.constant 0 : i32
    return %c0_i32, %arg0 : i32, i32
  }
}

</mosaic_0001>

<llo_original>
// kernel: instant_ngp_forward.1
$region0: #{instant_ngp_forward.1}
  #allocation0 [shape = 'u32[]', space=smem, size = 0x4, offset = 0x4, fixed_abs, tag = 'smem constant byte address 0x4 - core index']
  #allocation1 [shape = 'u32[144,128]{1,0:T(1,128)}', space=vmem, size = 0x12000, scoped, tag = 'internal scratch']
  %s0 = inlined_call_operand.vmem [shape: bf16[16,4096], index: 0, kind: input, shape index: {}]
  %s1 = inlined_call_operand.vmem [shape: bf16[16,4096], index: 1, kind: input, shape index: {}]
  %s2 = inlined_call_operand.vmem [shape: f32[1,4096], index: 2, kind: input, shape index: {}]
  %s3 = inlined_call_operand.vmem [shape: bf16[32,16], index: 3, kind: input, shape index: {}]
  %s4 = inlined_call_operand.vmem [shape: f32[32,1], index: 4, kind: input, shape index: {}]
  %s5 = inlined_call_operand.vmem [shape: bf16[32,32], index: 5, kind: input, shape index: {}]
  %s6 = inlined_call_operand.vmem [shape: f32[32,1], index: 6, kind: input, shape index: {}]
  %s7 = inlined_call_operand.vmem [shape: bf16[16,32], index: 7, kind: input, shape index: {}]
  %s8 = inlined_call_operand.vmem [shape: f32[16,1], index: 8, kind: input, shape index: {}]
  %s9 = inlined_call_operand.vmem [shape: bf16[32,16], index: 9, kind: input, shape index: {}]
  %s10 = inlined_call_operand.vmem [shape: bf16[32,16], index: 10, kind: input, shape index: {}]
  %s11 = inlined_call_operand.vmem [shape: f32[32,1], index: 11, kind: input, shape index: {}]
  %s12 = inlined_call_operand.vmem [shape: bf16[32,32], index: 12, kind: input, shape index: {}]
  %s13 = inlined_call_operand.vmem [shape: f32[32,1], index: 13, kind: input, shape index: {}]
  %s14 = inlined_call_operand.vmem [shape: bf16[3,32], index: 14, kind: input, shape index: {}]
  %s15 = inlined_call_operand.vmem [shape: f32[3,1], index: 15, kind: input, shape index: {}]
  %s16 = inlined_call_operand.hbm [shape: f32[3,256], index: 16, kind: output, shape index: {0}]
  %s17 = inlined_call_operand.vmem [shape: f32[1,4096], index: 17, kind: output, shape index: {1}]
  %18 = xla_tuple %s16, %s17
  %s19 = sld [smem:[#allocation0]]
  $region151: #{instant_ngp_forward.1} parent=0
    _
  %s21 = ssub.s32 1, %s19
  %s22 = scalar_select 0, %s21, %s19
  $region1: #{instant_ngp_forward.1} parent=0
    #allocation2 [shape = 'u8[131072]{0}', space=vmem, size = 0x20000, scoped, tag = 'input window, operand 0']
    #allocation3 [shape = 'u8[131072]{0}', space=vmem, size = 0x20000, scoped, tag = 'input window, operand 1']
    #allocation4 [shape = 'u8[4096]{0}', space=vmem, size = 0x1000, scoped, tag = 'output window, operand 0']
    #allocation5 [shape = 's32[2]{0}', space=sflag, size = 0x8, scoped, tag = 'scoped memory for instant_ngp_forward.1']
    %23 = vsyncpa [#allocation5], 0
    %s24 = scalar_lea.sflag [#allocation5], 1
    %25 = vsyncpa %s24, 0
    loop: start=0, step=1, limit=4
    $region2: #{instant_ngp_forward.1} parent=1 // loop_pre_header
      _
    $region3: #{instant_ngp_forward.1} parent=1 // loop_header
      %s27 = sphi 0, %s31
      %p28 = scmp.ge.s32.totalorder %s27, 4
      %s37 = sphi 0, %s39
      %s40 = sphi 0, %s37
      %s41 = sphi 0, %s40
      %s57 = sphi 0, %s41
      %s63 = sphi 0, %s65
      %s66 = sphi 0, %s63
      %s67 = sphi 0, %s66
      %s83 = sphi 0, %s67
      %s89 = sphi 0, %s91
      %s92 = sphi 0, %s89
      %s93 = sphi 0, %s92
      %s109 = sphi 0, %s93
      %s113 = sphi 0, %s113
      %s115 = sphi 0, %s113
      %s116 = sphi 0, %s115
      %s130 = sphi 0, %s116
      %s134 = sphi 0, %s134
      %s136 = sphi 0, %s134
      %s137 = sphi 0, %s136
      %s151 = sphi 0, %s137
      %s155 = sphi 0, %s155
      %s157 = sphi 0, %s155
      %s158 = sphi 0, %s157
      %s172 = sphi 0, %s158
      %s176 = sphi 0, %s176
      %s178 = sphi 0, %s176
      %s179 = sphi 0, %s178
      %s193 = sphi 0, %s179
      %s197 = sphi 0, %s197
      %s199 = sphi 0, %s197
      %s200 = sphi 0, %s199
      %s214 = sphi 0, %s200
      %s218 = sphi 0, %s218
      %s220 = sphi 0, %s218
      %s221 = sphi 0, %s220
      %s235 = sphi 0, %s221
      %s239 = sphi 0, %s239
      %s241 = sphi 0, %s239
      %s242 = sphi 0, %s241
      %s256 = sphi 0, %s242
      %s260 = sphi 0, %s260
      %s262 = sphi 0, %s260
      %s263 = sphi 0, %s262
      %s277 = sphi 0, %s263
      %s281 = sphi 0, %s281
      %s283 = sphi 0, %s281
      %s284 = sphi 0, %s283
      %s298 = sphi 0, %s284
      %s302 = sphi 0, %s302
      %s304 = sphi 0, %s302
      %s305 = sphi 0, %s304
      %s319 = sphi 0, %s305
      %s323 = sphi 0, %s323
      %s325 = sphi 0, %s323
      %s326 = sphi 0, %s325
      %s340 = sphi 0, %s326
      %s344 = sphi 0, %s344
      %s346 = sphi 0, %s344
      %s347 = sphi 0, %s346
      %s361 = sphi 0, %s347
      %s365 = sphi 0, %s365
      %s367 = sphi 0, %s365
      %s368 = sphi 0, %s367
      %s382 = sphi 0, %s368
      %s388 = sphi 0, %s390
      %s391 = sphi 0, %s388
      %s392 = sphi 0, %s391
      %s408 = sphi 0, %s392
      %s414 = sphi 0, %s416
      %s417 = sphi 0, %s414
      %s418 = sphi 0, %s417
      %s434 = sphi 0, %s418
    $region4: #{instant_ngp_forward.1} parent=1 // loop_header_branch
      %30 = sbr.rel (%p28) target = $region8
    $region5: #{instant_ngp_forward.1} parent=1 // loop_body
      %s32 = ssub.s32 %s27, 1
      %s33 = ssub.s32 %s27, 2
      %s34 = sadd.s32 %s27, 1
      %s35 = ssub.s32 %s27, %s34
      %p36 = scmp.eq.s32.totalorder %s35, 0
      %s38 = sadd.s32 %s37, 1
      %s39 = scalar_select %p36, %s37, %s38
      %p42 = pneg %p36
      %p43 = scmp.eq.s32.totalorder %s27, 1
      %p44 = por %p42, %p43
      %p45 = scmp.ne.s32.totalorder %s37, %s40
      %p46 = scmp.eq.s32.totalorder %s27, 0
      %p47 = por %p45, %p46
      %p48 = scmp.ne.s32.totalorder %s37, %s40
      %p49 = scmp.eq.s32.totalorder %s32, 1
      %p50 = por %p48, %p49
      %p51 = scmp.ne.s32.totalorder %s40, %s41
      %p52 = scmp.eq.s32.totalorder %s32, 0
      %p53 = por %p51, %p52
      %p54 = scmp.ne.s32.totalorder %s40, %s41
      %p55 = scmp.eq.s32.totalorder %s33, 1
      %p56 = por %p54, %p55
      %p58 = scmp.ne.s32.totalorder %s41, %s57
      %p59 = scmp.eq.s32.totalorder %s33, 0
      %p60 = por %p58, %p59
      %s61 = ssub.s32 %s27, %s34
      %p62 = scmp.eq.s32.totalorder %s61, 0
      %s64 = sadd.s32 %s63, 1
      %s65 = scalar_select %p62, %s63, %s64
      %p68 = pneg %p62
      %p69 = scmp.eq.s32.totalorder %s27, 1
      %p70 = por %p68, %p69
      %p71 = scmp.ne.s32.totalorder %s63, %s66
      %p72 = scmp.eq.s32.totalorder %s27, 0
      %p73 = por %p71, %p72
      %p74 = scmp.ne.s32.totalorder %s63, %s66
      %p75 = scmp.eq.s32.totalorder %s32, 1
      %p76 = por %p74, %p75
      %p77 = scmp.ne.s32.totalorder %s66, %s67
      %p78 = scmp.eq.s32.totalorder %s32, 0
      %p79 = por %p77, %p78
      %p80 = scmp.ne.s32.totalorder %s66, %s67
      %p81 = scmp.eq.s32.totalorder %s33, 1
      %p82 = por %p80, %p81
      %p84 = scmp.ne.s32.totalorder %s67, %s83
      %p85 = scmp.eq.s32.totalorder %s33, 0
      %p86 = por %p84, %p85
      %s87 = ssub.s32 %s27, %s34
      %p88 = scmp.eq.s32.totalorder %s87, 0
      %s90 = sadd.s32 %s89, 1
      %s91 = scalar_select %p88, %s89, %s90
      %p94 = pneg %p88
      %p95 = scmp.eq.s32.totalorder %s27, 1
      %p96 = por %p94, %p95
      %p97 = scmp.ne.s32.totalorder %s89, %s92
      %p98 = scmp.eq.s32.totalorder %s27, 0
      %p99 = por %p97, %p98
      %p100 = scmp.ne.s32.totalorder %s89, %s92
      %p101 = scmp.eq.s32.totalorder %s32, 1
      %p102 = por %p100, %p101
      %p103 = scmp.ne.s32.totalorder %s92, %s93
      %p104 = scmp.eq.s32.totalorder %s32, 0
      %p105 = por %p103, %p104
      %p106 = scmp.ne.s32.totalorder %s92, %s93
      %p107 = scmp.eq.s32.totalorder %s33, 1
      %p108 = por %p106, %p107
      %p110 = scmp.ne.s32.totalorder %s93, %s109
      %p111 = scmp.eq.s32.totalorder %s33, 0
      %p112 = por %p110, %p111
      %s114 = sadd.s32 %s113, 1
      %p117 = scmp.eq.s32.totalorder %s27, 1
      %p118 = scmp.ne.s32.totalorder %s113, %s115
      %p119 = scmp.eq.s32.totalorder %s27, 0
      %p120 = por %p118, %p119
      %p121 = scmp.ne.s32.totalorder %s113, %s115
      %p122 = scmp.eq.s32.totalorder %s32, 1
      %p123 = por %p121, %p122
      %p124 = scmp.ne.s32.totalorder %s115, %s116
      %p125 = scmp.eq.s32.totalorder %s32, 0
      %p126 = por %p124, %p125
      %p127 = scmp.ne.s32.totalorder %s115, %s116
      %p128 = scmp.eq.s32.totalorder %s33, 1
      %p129 = por %p127, %p128
      %p131 = scmp.ne.s32.totalorder %s116, %s130
      %p132 = scmp.eq.s32.totalorder %s33, 0
      %p133 = por %p131, %p132
      %s135 = sadd.s32 %s134, 1
      %p138 = scmp.eq.s32.totalorder %s27, 1
      %p139 = scmp.ne.s32.totalorder %s134, %s136
      %p140 = scmp.eq.s32.totalorder %s27, 0
      %p141 = por %p139, %p140
      %p142 = scmp.ne.s32.totalorder %s134, %s136
      %p143 = scmp.eq.s32.totalorder %s32, 1
      %p144 = por %p142, %p143
      %p145 = scmp.ne.s32.totalorder %s136, %s137
      %p146 = scmp.eq.s32.totalorder %s32, 0
      %p147 = por %p145, %p146
      %p148 = scmp.ne.s32.totalorder %s136, %s137
      %p149 = scmp.eq.s32.totalorder %s33, 1
      %p150 = por %p148, %p149
      %p152 = scmp.ne.s32.totalorder %s137, %s151
      %p153 = scmp.eq.s32.totalorder %s33, 0
      %p154 = por %p152, %p153
      %s156 = sadd.s32 %s155, 1
      %p159 = scmp.eq.s32.totalorder %s27, 1
      %p160 = scmp.ne.s32.totalorder %s155, %s157
      %p161 = scmp.eq.s32.totalorder %s27, 0
      %p162 = por %p160, %p161
      %p163 = scmp.ne.s32.totalorder %s155, %s157
      %p164 = scmp.eq.s32.totalorder %s32, 1
      %p165 = por %p163, %p164
      %p166 = scmp.ne.s32.totalorder %s157, %s158
      %p167 = scmp.eq.s32.totalorder %s32, 0
      %p168 = por %p166, %p167
      %p169 = scmp.ne.s32.totalorder %s157, %s158
      %p170 = scmp.eq.s32.totalorder %s33, 1
      %p171 = por %p169, %p170
      %p173 = scmp.ne.s32.totalorder %s158, %s172
      %p174 = scmp.eq.s32.totalorder %s33, 0
      %p175 = por %p173, %p174
      %s177 = sadd.s32 %s176, 1
      %p180 = scmp.eq.s32.totalorder %s27, 1
      %p181 = scmp.ne.s32.totalorder %s176, %s178
      %p182 = scmp.eq.s32.totalorder %s27, 0
      %p183 = por %p181, %p182
      %p184 = scmp.ne.s32.totalorder %s176, %s178
      %p185 = scmp.eq.s32.totalorder %s32, 1
      %p186 = por %p184, %p185
      %p187 = scmp.ne.s32.totalorder %s178, %s179
      %p188 = scmp.eq.s32.totalorder %s32, 0
      %p189 = por %p187, %p188
      %p190 = scmp.ne.s32.totalorder %s178, %s179
      %p191 = scmp.eq.s32.totalorder %s33, 1
      %p192 = por %p190, %p191
      %p194 = scmp.ne.s32.totalorder %s179, %s193
      %p195 = scmp.eq.s32.totalorder %s33, 0
      %p196 = por %p194, %p195
      %s198 = sadd.s32 %s197, 1
      %p201 = scmp.eq.s32.totalorder %s27, 1
      %p202 = scmp.ne.s32.totalorder %s197, %s199
      %p203 = scmp.eq.s32.totalorder %s27, 0
      %p204 = por %p202, %p203
      %p205 = scmp.ne.s32.totalorder %s197, %s199
      %p206 = scmp.eq.s32.totalorder %s32, 1
      %p207 = por %p205, %p206
      %p208 = scmp.ne.s32.totalorder %s199, %s200
      %p209 = scmp.eq.s32.totalorder %s32, 0
      %p210 = por %p208, %p209
      %p211 = scmp.ne.s32.totalorder %s199, %s200
      %p212 = scmp.eq.s32.totalorder %s33, 1
      %p213 = por %p211, %p212
      %p215 = scmp.ne.s32.totalorder %s200, %s214
      %p216 = scmp.eq.s32.totalorder %s33, 0
      %p217 = por %p215, %p216
      %s219 = sadd.s32 %s218, 1
      %p222 = scmp.eq.s32.totalorder %s27, 1
      %p223 = scmp.ne.s32.totalorder %s218, %s220
      %p224 = scmp.eq.s32.totalorder %s27, 0
      %p225 = por %p223, %p224
      %p226 = scmp.ne.s32.totalorder %s218, %s220
      %p227 = scmp.eq.s32.totalorder %s32, 1
      %p228 = por %p226, %p227
      %p229 = scmp.ne.s32.totalorder %s220, %s221
      %p230 = scmp.eq.s32.totalorder %s32, 0
      %p231 = por %p229, %p230
      %p232 = scmp.ne.s32.totalorder %s220, %s221
      %p233 = scmp.eq.s32.totalorder %s33, 1
      %p234 = por %p232, %p233
      %p236 = scmp.ne.s32.totalorder %s221, %s235
      %p237 = scmp.eq.s32.totalorder %s33, 0
      %p238 = por %p236, %p237
      %s240 = sadd.s32 %s239, 1
      %p243 = scmp.eq.s32.totalorder %s27, 1
      %p244 = scmp.ne.s32.totalorder %s239, %s241
      %p245 = scmp.eq.s32.totalorder %s27, 0
      %p246 = por %p244, %p245
      %p247 = scmp.ne.s32.totalorder %s239, %s241
      %p248 = scmp.eq.s32.totalorder %s32, 1
      %p249 = por %p247, %p248
      %p250 = scmp.ne.s32.totalorder %s241, %s242
      %p251 = scmp.eq.s32.totalorder %s32, 0
      %p252 = por %p250, %p251
      %p253 = scmp.ne.s32.totalorder %s241, %s242
      %p254 = scmp.eq.s32.totalorder %s33, 1
      %p255 = por %p253, %p254
      %p257 = scmp.ne.s32.totalorder %s242, %s256
      %p258 = scmp.eq.s32.totalorder %s33, 0
      %p259 = por %p257, %p258
      %s261 = sadd.s32 %s260, 1
      %p264 = scmp.eq.s32.totalorder %s27, 1
      %p265 = scmp.ne.s32.totalorder %s260, %s262
      %p266 = scmp.eq.s32.totalorder %s27, 0
      %p267 = por %p265, %p266
      %p268 = scmp.ne.s32.totalorder %s260, %s262
      %p269 = scmp.eq.s32.totalorder %s32, 1
      %p270 = por %p268, %p269
      %p271 = scmp.ne.s32.totalorder %s262, %s263
      %p272 = scmp.eq.s32.totalorder %s32, 0
      %p273 = por %p271, %p272
      %p274 = scmp.ne.s32.totalorder %s262, %s263
      %p275 = scmp.eq.s32.totalorder %s33, 1
      %p276 = por %p274, %p275
      %p278 = scmp.ne.s32.totalorder %s263, %s277
      %p279 = scmp.eq.s32.totalorder %s33, 0
      %p280 = por %p278, %p279
      %s282 = sadd.s32 %s281, 1
      %p285 = scmp.eq.s32.totalorder %s27, 1
      %p286 = scmp.ne.s32.totalorder %s281, %s283
      %p287 = scmp.eq.s32.totalorder %s27, 0
      %p288 = por %p286, %p287
      %p289 = scmp.ne.s32.totalorder %s281, %s283
      %p290 = scmp.eq.s32.totalorder %s32, 1
      %p291 = por %p289, %p290
      %p292 = scmp.ne.s32.totalorder %s283, %s284
      %p293 = scmp.eq.s32.totalorder %s32, 0
      %p294 = por %p292, %p293
      %p295 = scmp.ne.s32.totalorder %s283, %s284
      %p296 = scmp.eq.s32.totalorder %s33, 1
      %p297 = por %p295, %p296
      %p299 = scmp.ne.s32.totalorder %s284, %s298
      %p300 = scmp.eq.s32.totalorder %s33, 0
      %p301 = por %p299, %p300
      %s303 = sadd.s32 %s302, 1
      %p306 = scmp.eq.s32.totalorder %s27, 1
      %p307 = scmp.ne.s32.totalorder %s302, %s304
      %p308 = scmp.eq.s32.totalorder %s27, 0
      %p309 = por %p307, %p308
      %p310 = scmp.ne.s32.totalorder %s302, %s304
      %p311 = scmp.eq.s32.totalorder %s32, 1
      %p312 = por %p310, %p311
      %p313 = scmp.ne.s32.totalorder %s304, %s305
      %p314 = scmp.eq.s32.totalorder %s32, 0
      %p315 = por %p313, %p314
      %p316 = scmp.ne.s32.totalorder %s304, %s305
      %p317 = scmp.eq.s32.totalorder %s33, 1
      %p318 = por %p316, %p317
      %p320 = scmp.ne.s32.totalorder %s305, %s319
      %p321 = scmp.eq.s32.totalorder %s33, 0
      %p322 = por %p320, %p321
      %s324 = sadd.s32 %s323, 1
      %p327 = scmp.eq.s32.totalorder %s27, 1
      %p328 = scmp.ne.s32.totalorder %s323, %s325
      %p329 = scmp.eq.s32.totalorder %s27, 0
      %p330 = por %p328, %p329
      %p331 = scmp.ne.s32.totalorder %s323, %s325
      %p332 = scmp.eq.s32.totalorder %s32, 1
      %p333 = por %p331, %p332
      %p334 = scmp.ne.s32.totalorder %s325, %s326
      %p335 = scmp.eq.s32.totalorder %s32, 0
      %p336 = por %p334, %p335
      %p337 = scmp.ne.s32.totalorder %s325, %s326
      %p338 = scmp.eq.s32.totalorder %s33, 1
      %p339 = por %p337, %p338
      %p341 = scmp.ne.s32.totalorder %s326, %s340
      %p342 = scmp.eq.s32.totalorder %s33, 0
      %p343 = por %p341, %p342
      %s345 = sadd.s32 %s344, 1
      %p348 = scmp.eq.s32.totalorder %s27, 1
      %p349 = scmp.ne.s32.totalorder %s344, %s346
      %p350 = scmp.eq.s32.totalorder %s27, 0
      %p351 = por %p349, %p350
      %p352 = scmp.ne.s32.totalorder %s344, %s346
      %p353 = scmp.eq.s32.totalorder %s32, 1
      %p354 = por %p352, %p353
      %p355 = scmp.ne.s32.totalorder %s346, %s347
      %p356 = scmp.eq.s32.totalorder %s32, 0
      %p357 = por %p355, %p356
      %p358 = scmp.ne.s32.totalorder %s346, %s347
      %p359 = scmp.eq.s32.totalorder %s33, 1
      %p360 = por %p358, %p359
      %p362 = scmp.ne.s32.totalorder %s347, %s361
      %p363 = scmp.eq.s32.totalorder %s33, 0
      %p364 = por %p362, %p363
      %s366 = sadd.s32 %s365, 1
      %p369 = scmp.eq.s32.totalorder %s27, 1
      %p370 = scmp.ne.s32.totalorder %s365, %s367
      %p371 = scmp.eq.s32.totalorder %s27, 0
      %p372 = por %p370, %p371
      %p373 = scmp.ne.s32.totalorder %s365, %s367
      %p374 = scmp.eq.s32.totalorder %s32, 1
      %p375 = por %p373, %p374
      %p376 = scmp.ne.s32.totalorder %s367, %s368
      %p377 = scmp.eq.s32.totalorder %s32, 0
      %p378 = por %p376, %p377
      %p379 = scmp.ne.s32.totalorder %s367, %s368
      %p380 = scmp.eq.s32.totalorder %s33, 1
      %p381 = por %p379, %p380
      %p383 = scmp.ne.s32.totalorder %s368, %s382
      %p384 = scmp.eq.s32.totalorder %s33, 0
      %p385 = por %p383, %p384
      %s386 = ssub.s32 %s27, %s34
      %p387 = scmp.eq.s32.totalorder %s386, 0
      %s389 = sadd.s32 %s388, 1
      %s390 = scalar_select %p387, %s388, %s389
      %p393 = pneg %p387
      %p394 = scmp.eq.s32.totalorder %s27, 1
      %p395 = por %p393, %p394
      %p396 = scmp.ne.s32.totalorder %s388, %s391
      %p397 = scmp.eq.s32.totalorder %s27, 0
      %p398 = por %p396, %p397
      %p399 = scmp.ne.s32.totalorder %s388, %s391
      %p400 = scmp.eq.s32.totalorder %s32, 1
      %p401 = por %p399, %p400
      %p402 = scmp.ne.s32.totalorder %s391, %s392
      %p403 = scmp.eq.s32.totalorder %s32, 0
      %p404 = por %p402, %p403
      %p405 = scmp.ne.s32.totalorder %s391, %s392
      %p406 = scmp.eq.s32.totalorder %s33, 1
      %p407 = por %p405, %p406
      %p409 = scmp.ne.s32.totalorder %s392, %s408
      %p410 = scmp.eq.s32.totalorder %s33, 0
      %p411 = por %p409, %p410
      %s412 = ssub.s32 %s27, %s34
      %p413 = scmp.eq.s32.totalorder %s412, 0
      %s415 = sadd.s32 %s414, 1
      %s416 = scalar_select %p413, %s414, %s415
      %p419 = pneg %p413
      %p420 = scmp.eq.s32.totalorder %s27, 1
      %p421 = por %p419, %p420
      %p422 = scmp.ne.s32.totalorder %s414, %s417
      %p423 = scmp.eq.s32.totalorder %s27, 0
      %p424 = por %p422, %p423
      %p425 = scmp.ne.s32.totalorder %s414, %s417
      %p426 = scmp.eq.s32.totalorder %s32, 1
      %p427 = por %p425, %p426
      %p428 = scmp.ne.s32.totalorder %s417, %s418
      %p429 = scmp.eq.s32.totalorder %s32, 0
      %p430 = por %p428, %p429
      %p431 = scmp.ne.s32.totalorder %s417, %s418
      %p432 = scmp.eq.s32.totalorder %s33, 1
      %p433 = por %p431, %p432
      %p435 = scmp.ne.s32.totalorder %s418, %s434
      %p436 = scmp.eq.s32.totalorder %s33, 0
      %p437 = por %p435, %p436
      %p438 = scmp.le.s32.totalorder 1, %s27
      %p439 = scmp.lt.s32.totalorder %s27, 3
      %p440 = pnand %p438, %p439
      %p441 = pneg %p440
      // Predicated region
      $region9: #{instant_ngp_forward.1} parent=5 // pred_check
        _
      $region10: #{instant_ngp_forward.1} parent=5 // pred_check_branch
        %443 = sbr.rel (%p440) target = $region12
      $region11: #{instant_ngp_forward.1} parent=5 // pred_region
        %s444 = ssub.s32 %s27, 1
        // Predicated region
        $region13: #{instant_ngp_forward.1} parent=11 // pred_check
          %p445 = pneg %p126
        $region14: #{instant_ngp_forward.1} parent=11 // pred_check_branch
          %447 = sbr.rel (%p445) target = $region16
        $region15: #{instant_ngp_forward.1} parent=11 // pred_region
          _
        $region16: #{instant_ngp_forward.1} parent=11 // pred_fallthru
          _
        // Predicated region
        $region17: #{instant_ngp_forward.1} parent=11 // pred_check
          %p448 = pneg %p147
        $region18: #{instant_ngp_forward.1} parent=11 // pred_check_branch
          %450 = sbr.rel (%p448) target = $region20
        $region19: #{instant_ngp_forward.1} parent=11 // pred_region
          _
        $region20: #{instant_ngp_forward.1} parent=11 // pred_fallthru
          _
        // Predicated region
        $region21: #{instant_ngp_forward.1} parent=11 // pred_check
          %p451 = pneg %p168
        $region22: #{instant_ngp_forward.1} parent=11 // pred_check_branch
          %453 = sbr.rel (%p451) target = $region24
        $region23: #{instant_ngp_forward.1} parent=11 // pred_region
          _
        $region24: #{instant_ngp_forward.1} parent=11 // pred_fallthru
          _
        // Predicated region
        $region25: #{instant_ngp_forward.1} parent=11 // pred_check
          %p454 = pneg %p189
        $region26: #{instant_ngp_forward.1} parent=11 // pred_check_branch
          %456 = sbr.rel (%p454) target = $region28
        $region27: #{instant_ngp_forward.1} parent=11 // pred_region
          _
        $region28: #{instant_ngp_forward.1} parent=11 // pred_fallthru
          _
        // Predicated region
        $region29: #{instant_ngp_forward.1} parent=11 // pred_check
          %p457 = pneg %p210
        $region30: #{instant_ngp_forward.1} parent=11 // pred_check_branch
          %459 = sbr.rel (%p457) target = $region32
        $region31: #{instant_ngp_forward.1} parent=11 // pred_region
          _
        $region32: #{instant_ngp_forward.1} parent=11 // pred_fallthru
          _
        // Predicated region
        $region33: #{instant_ngp_forward.1} parent=11 // pred_check
          %p460 = pneg %p231
        $region34: #{instant_ngp_forward.1} parent=11 // pred_check_branch
          %462 = sbr.rel (%p460) target = $region36
        $region35: #{instant_ngp_forward.1} parent=11 // pred_region
          _
        $region36: #{instant_ngp_forward.1} parent=11 // pred_fallthru
          _
        // Predicated region
        $region37: #{instant_ngp_forward.1} parent=11 // pred_check
          %p463 = pneg %p252
        $region38: #{instant_ngp_forward.1} parent=11 // pred_check_branch
          %465 = sbr.rel (%p463) target = $region40
        $region39: #{instant_ngp_forward.1} parent=11 // pred_region
          _
        $region40: #{instant_ngp_forward.1} parent=11 // pred_fallthru
          _
        // Predicated region
        $region41: #{instant_ngp_forward.1} parent=11 // pred_check
          %p466 = pneg %p273
        $region42: #{instant_ngp_forward.1} parent=11 // pred_check_branch
          %468 = sbr.rel (%p466) target = $region44
        $region43: #{instant_ngp_forward.1} parent=11 // pred_region
          _
        $region44: #{instant_ngp_forward.1} parent=11 // pred_fallthru
          _
        // Predicated region
        $region45: #{instant_ngp_forward.1} parent=11 // pred_check
          %p469 = pneg %p294
        $region46: #{instant_ngp_forward.1} parent=11 // pred_check_branch
          %471 = sbr.rel (%p469) target = $region48
        $region47: #{instant_ngp_forward.1} parent=11 // pred_region
          _
        $region48: #{instant_ngp_forward.1} parent=11 // pred_fallthru
          _
        // Predicated region
        $region49: #{instant_ngp_forward.1} parent=11 // pred_check
          %p472 = pneg %p315
        $region50: #{instant_ngp_forward.1} parent=11 // pred_check_branch
          %474 = sbr.rel (%p472) target = $region52
        $region51: #{instant_ngp_forward.1} parent=11 // pred_region
          _
        $region52: #{instant_ngp_forward.1} parent=11 // pred_fallthru
          _
        // Predicated region
        $region53: #{instant_ngp_forward.1} parent=11 // pred_check
          %p475 = pneg %p336
        $region54: #{instant_ngp_forward.1} parent=11 // pred_check_branch
          %477 = sbr.rel (%p475) target = $region56
        $region55: #{instant_ngp_forward.1} parent=11 // pred_region
          _
        $region56: #{instant_ngp_forward.1} parent=11 // pred_fallthru
          _
        // Predicated region
        $region57: #{instant_ngp_forward.1} parent=11 // pred_check
          %p478 = pneg %p357
        $region58: #{instant_ngp_forward.1} parent=11 // pred_check_branch
          %480 = sbr.rel (%p478) target = $region60
        $region59: #{instant_ngp_forward.1} parent=11 // pred_region
          _
        $region60: #{instant_ngp_forward.1} parent=11 // pred_fallthru
          _
        // Predicated region
        $region61: #{instant_ngp_forward.1} parent=11 // pred_check
          %p481 = pneg %p378
        $region62: #{instant_ngp_forward.1} parent=11 // pred_check_branch
          %483 = sbr.rel (%p481) target = $region64
        $region63: #{instant_ngp_forward.1} parent=11 // pred_region
          _
        $region64: #{instant_ngp_forward.1} parent=11 // pred_fallthru
          _
      $region12: #{instant_ngp_forward.1} parent=5 // pred_fallthru
        _
      %p484 = scmp.lt.s32.totalorder %s27, 2
      // Predicated region
      $region65: #{instant_ngp_forward.1} parent=5 // pred_check
        %p485 = pneg %p484
      $region66: #{instant_ngp_forward.1} parent=5 // pred_check_branch
        %487 = sbr.rel (%p485) target = $region68
      $region67: #{instant_ngp_forward.1} parent=5 // pred_region
        // Predicated region
        $region69: #{instant_ngp_forward.1} parent=67 // pred_check
          %p488 = pneg %p47
        $region70: #{instant_ngp_forward.1} parent=67 // pred_check_branch
          %490 = sbr.rel (%p488) target = $region72
        $region71: #{instant_ngp_forward.1} parent=67 // pred_region
          %s491 = sand.u32 %s37, 1
          %s492 = sand.u32 %s37, 1
          %s493 = smul.addr %s492, 128
          %s494 = scalar_lea.vmem [#allocation2], %s493
          %s495 = smul.u32 16, %s27
          %s496 = smul.addr %s495, 4
          %s497 = scalar_lea.vmem %s0, %s496
          // Predicated region
          $region73: #{instant_ngp_forward.1} parent=71 // pred_check
            _
          $region74: #{instant_ngp_forward.1} parent=71 // pred_check_branch
            %499 = sbr.rel (0) target = $region76
          $region75: #{instant_ngp_forward.1} parent=71 // pred_region
            // Predicated region
            $region77: #{instant_ngp_forward.1} parent=75 // pred_check
              _
            $region78: #{instant_ngp_forward.1} parent=75 // pred_check_branch
              %501 = sbr.rel (0) target = $region80
            $region79: #{instant_ngp_forward.1} parent=75 // pred_region
              loop: start=0, step=1, limit=1
              $region81: #{instant_ngp_forward.1} parent=79 // loop_pre_header
                _
              $region82: #{instant_ngp_forward.1} parent=79 // loop_header
                %s503 = sphi 0, %s507
                %p504 = scmp.ge.s32.totalorder %s503, 1
                %s508 = sphi %s497, %s497
                %s509 = sphi %s494, %s494
              $region83: #{instant_ngp_forward.1} parent=79 // loop_header_branch
                %506 = sbr.rel (%p504) target = $region87
              $region84: #{instant_ngp_forward.1} parent=79 // loop_body
                %v510 = vld [vmem:[%s508] sm:$0xff]
                %511 = vst [vmem:[%s509] sm:$0xff] %v510
                %v512 = vld [vmem:[%s508 + $0x8] sm:$0xff]
                %513 = vst [vmem:[%s509 + $0x8] sm:$0xff] %v512
                %v514 = vld [vmem:[%s508 + $0x10] sm:$0xff]
                %515 = vst [vmem:[%s509 + $0x10] sm:$0xff] %v514
                %v516 = vld [vmem:[%s508 + $0x18] sm:$0xff]
                %517 = vst [vmem:[%s509 + $0x18] sm:$0xff] %v516
                %v518 = vld [vmem:[%s508 + $0x20] sm:$0xff]
                %519 = vst [vmem:[%s509 + $0x20] sm:$0xff] %v518
                %v520 = vld [vmem:[%s508 + $0x28] sm:$0xff]
                %521 = vst [vmem:[%s509 + $0x28] sm:$0xff] %v520
                %v522 = vld [vmem:[%s508 + $0x30] sm:$0xff]
                %523 = vst [vmem:[%s509 + $0x30] sm:$0xff] %v522
                %v524 = vld [vmem:[%s508 + $0x38] sm:$0xff]
                %525 = vst [vmem:[%s509 + $0x38] sm:$0xff] %v524
                %v526 = vld [vmem:[%s508 + $0x80] sm:$0xff]
                %527 = vst [vmem:[%s509 + $0x40] sm:$0xff] %v526
                %v528 = vld [vmem:[%s508 + $0x88] sm:$0xff]
                %529 = vst [vmem:[%s509 + $0x48] sm:$0xff] %v528
                %v530 = vld [vmem:[%s508 + $0x90] sm:$0xff]
                %531 = vst [vmem:[%s509 + $0x50] sm:$0xff] %v530
                %v532 = vld [vmem:[%s508 + $0x98] sm:$0xff]
                %533 = vst [vmem:[%s509 + $0x58] sm:$0xff] %v532
                %v534 = vld [vmem:[%s508 + $0xa0] sm:$0xff]
                %535 = vst [vmem:[%s509 + $0x60] sm:$0xff] %v534
                %v536 = vld [vmem:[%s508 + $0xa8] sm:$0xff]
                %537 = vst [vmem:[%s509 + $0x68] sm:$0xff] %v536
                %v538 = vld [vmem:[%s508 + $0xb0] sm:$0xff]
                %539 = vst [vmem:[%s509 + $0x70] sm:$0xff] %v538
                %v540 = vld [vmem:[%s508 + $0xb8] sm:$0xff]
                %541 = vst [vmem:[%s509 + $0x78] sm:$0xff] %v540
              $region85: #{instant_ngp_forward.1} parent=79 // loop_footer
                %s507 = sadd.s32 1, %s503
              $region86: #{instant_ngp_forward.1} parent=79 // loop_footer_branch
                %502 = sbr.rel target = $region82
              $region87: #{instant_ngp_forward.1} parent=79 // loop_exit
                _
            $region80: #{instant_ngp_forward.1} parent=75 // pred_fallthru
              _
            // Predicated region
            $region88: #{instant_ngp_forward.1} parent=75 // pred_check
              _
            $region89: #{instant_ngp_forward.1} parent=75 // pred_check_branch
              %543 = sbr.rel target = $region91
            $region90: #{instant_ngp_forward.1} parent=75 // pred_region
              _
            $region91: #{instant_ngp_forward.1} parent=75 // pred_fallthru
              _
          $region76: #{instant_ngp_forward.1} parent=71 // pred_fallthru
            _
          %544 = vnop
        $region72: #{instant_ngp_forward.1} parent=67 // pred_fallthru
          _
        // Predicated region
        $region92: #{instant_ngp_forward.1} parent=67 // pred_check
          %p545 = pneg %p73
        $region93: #{instant_ngp_forward.1} parent=67 // pred_check_branch
          %547 = sbr.rel (%p545) target = $region95
        $region94: #{instant_ngp_forward.1} parent=67 // pred_region
          %s548 = sand.u32 %s63, 1
          %s549 = sand.u32 %s63, 1
          %s550 = smul.addr %s549, 128
          %s551 = scalar_lea.vmem [#allocation3], %s550
          %s552 = smul.u32 16, %s27
          %s553 = smul.addr %s552, 4
          %s554 = scalar_lea.vmem %s1, %s553
          // Predicated region
          $region96: #{instant_ngp_forward.1} parent=94 // pred_check
            _
          $region97: #{instant_ngp_forward.1} parent=94 // pred_check_branch
            %556 = sbr.rel (0) target = $region99
          $region98: #{instant_ngp_forward.1} parent=94 // pred_region
            // Predicated region
            $region100: #{instant_ngp_forward.1} parent=98 // pred_check
              _
            $region101: #{instant_ngp_forward.1} parent=98 // pred_check_branch
              %558 = sbr.rel (0) target = $region103
            $region102: #{instant_ngp_forward.1} parent=98 // pred_region
              loop: start=0, step=1, limit=1
              $region104: #{instant_ngp_forward.1} parent=102 // loop_pre_header
                _
              $region105: #{instant_ngp_forward.1} parent=102 // loop_header
                %s560 = sphi 0, %s564
                %p561 = scmp.ge.s32.totalorder %s560, 1
                %s565 = sphi %s554, %s554
                %s566 = sphi %s551, %s551
              $region106: #{instant_ngp_forward.1} parent=102 // loop_header_branch
                %563 = sbr.rel (%p561) target = $region110
              $region107: #{instant_ngp_forward.1} parent=102 // loop_body
                %v567 = vld [vmem:[%s565] sm:$0xff]
                %568 = vst [vmem:[%s566] sm:$0xff] %v567
                %v569 = vld [vmem:[%s565 + $0x8] sm:$0xff]
                %570 = vst [vmem:[%s566 + $0x8] sm:$0xff] %v569
                %v571 = vld [vmem:[%s565 + $0x10] sm:$0xff]
                %572 = vst [vmem:[%s566 + $0x10] sm:$0xff] %v571
                %v573 = vld [vmem:[%s565 + $0x18] sm:$0xff]
                %574 = vst [vmem:[%s566 + $0x18] sm:$0xff] %v573
                %v575 = vld [vmem:[%s565 + $0x20] sm:$0xff]
                %576 = vst [vmem:[%s566 + $0x20] sm:$0xff] %v575
                %v577 = vld [vmem:[%s565 + $0x28] sm:$0xff]
                %578 = vst [vmem:[%s566 + $0x28] sm:$0xff] %v577
                %v579 = vld [vmem:[%s565 + $0x30] sm:$0xff]
                %580 = vst [vmem:[%s566 + $0x30] sm:$0xff] %v579
                %v581 = vld [vmem:[%s565 + $0x38] sm:$0xff]
                %582 = vst [vmem:[%s566 + $0x38] sm:$0xff] %v581
                %v583 = vld [vmem:[%s565 + $0x80] sm:$0xff]
                %584 = vst [vmem:[%s566 + $0x40] sm:$0xff] %v583
                %v585 = vld [vmem:[%s565 + $0x88] sm:$0xff]
                %586 = vst [vmem:[%s566 + $0x48] sm:$0xff] %v585
                %v587 = vld [vmem:[%s565 + $0x90] sm:$0xff]
                %588 = vst [vmem:[%s566 + $0x50] sm:$0xff] %v587
                %v589 = vld [vmem:[%s565 + $0x98] sm:$0xff]
                %590 = vst [vmem:[%s566 + $0x58] sm:$0xff] %v589
                %v591 = vld [vmem:[%s565 + $0xa0] sm:$0xff]
                %592 = vst [vmem:[%s566 + $0x60] sm:$0xff] %v591
                %v593 = vld [vmem:[%s565 + $0xa8] sm:$0xff]
                %594 = vst [vmem:[%s566 + $0x68] sm:$0xff] %v593
                %v595 = vld [vmem:[%s565 + $0xb0] sm:$0xff]
                %596 = vst [vmem:[%s566 + $0x70] sm:$0xff] %v595
                %v597 = vld [vmem:[%s565 + $0xb8] sm:$0xff]
                %598 = vst [vmem:[%s566 + $0x78] sm:$0xff] %v597
              $region108: #{instant_ngp_forward.1} parent=102 // loop_footer
                %s564 = sadd.s32 1, %s560
              $region109: #{instant_ngp_forward.1} parent=102 // loop_footer_branch
                %559 = sbr.rel target = $region105
              $region110: #{instant_ngp_forward.1} parent=102 // loop_exit
                _
            $region103: #{instant_ngp_forward.1} parent=98 // pred_fallthru
              _
            // Predicated region
            $region111: #{instant_ngp_forward.1} parent=98 // pred_check
              _
            $region112: #{instant_ngp_forward.1} parent=98 // pred_check_branch
              %600 = sbr.rel target = $region114
            $region113: #{instant_ngp_forward.1} parent=98 // pred_region
              _
            $region114: #{instant_ngp_forward.1} parent=98 // pred_fallthru
              _
          $region99: #{instant_ngp_forward.1} parent=94 // pred_fallthru
            _
          %601 = vnop
        $region95: #{instant_ngp_forward.1} parent=67 // pred_fallthru
          _
        // Predicated region
        $region115: #{instant_ngp_forward.1} parent=67 // pred_check
          %p602 = pneg %p99
        $region116: #{instant_ngp_forward.1} parent=67 // pred_check_branch
          %604 = sbr.rel (%p602) target = $region118
        $region117: #{instant_ngp_forward.1} parent=67 // pred_region
          %s605 = smul.u32 16, %s27
          %p606 = scmp.lt.s32.totalorder %s605, 31
          %s607 = scalar_select %p606, %s605, 31
          %s608 = scalar_lea.vmem %s2, %s607
          %s609 = smul.u32 16, %s27
        $region118: #{instant_ngp_forward.1} parent=67 // pred_fallthru
          _
      $region68: #{instant_ngp_forward.1} parent=5 // pred_fallthru
        _
      %p610 = scmp.le.s32.totalorder 1, %s27
      %p611 = scmp.lt.s32.totalorder %s27, 3
      %p612 = pnand %p610, %p611
      %p613 = pneg %p612
      // Predicated region
      $region119: #{instant_ngp_forward.1} parent=5 // pred_check
        _
      $region120: #{instant_ngp_forward.1} parent=5 // pred_check_branch
        %615 = sbr.rel (%p612) target = $region122
      $region121: #{instant_ngp_forward.1} parent=5 // pred_region
        %s616 = ssub.s32 %s27, 1
        %s617 = sand.u32 %s40, 1
        %s618 = sand.u32 %s40, 1
        %s619 = smul.addr %s618, 128
        %s620 = scalar_lea.vmem [#allocation2], %s619
        // Predicated region
        $region123: #{instant_ngp_forward.1} parent=121 // pred_check
          %p621 = pneg %p53
        $region124: #{instant_ngp_forward.1} parent=121 // pred_check_branch
          %623 = sbr.rel (%p621) target = $region126
        $region125: #{instant_ngp_forward.1} parent=121 // pred_region
          _
        $region126: #{instant_ngp_forward.1} parent=121 // pred_fallthru
          _
        %s624 = sand.u32 %s66, 1
        %s625 = sand.u32 %s66, 1
        %s626 = smul.addr %s625, 128
        %s627 = scalar_lea.vmem [#allocation3], %s626
        // Predicated region
        $region127: #{instant_ngp_forward.1} parent=121 // pred_check
          %p628 = pneg %p79
        $region128: #{instant_ngp_forward.1} parent=121 // pred_check_branch
          %630 = sbr.rel (%p628) target = $region130
        $region129: #{instant_ngp_forward.1} parent=121 // pred_region
          _
        $region130: #{instant_ngp_forward.1} parent=121 // pred_fallthru
          _
        %s631 = sand.u32 %s40, 1
        %s632 = sand.u32 %s40, 1
        %s633 = smul.addr %s632, 128
        %s634 = scalar_lea.vmem [#allocation2], %s633
        %p635 = pneg %p53
        %p636 = pneg %p50
        %s637 = sand.u32 %s66, 1
        %s638 = sand.u32 %s66, 1
        %s639 = smul.addr %s638, 128
        %s640 = scalar_lea.vmem [#allocation3], %s639
        %p641 = pneg %p79
        %p642 = pneg %p76
        %s643 = smul.u32 16, %s32
        %p644 = scmp.lt.s32.totalorder %s643, 31
        %s645 = scalar_select %p644, %s643, 31
        %s646 = scalar_lea.vmem %s2, %s645
        %p647 = pneg %p105
        %p648 = pneg %p102
        %p649 = pneg %p126
        %p650 = pneg %p123
        %p651 = pneg %p147
        %p652 = pneg %p144
        %p653 = pneg %p168
        %p654 = pneg %p165
        %p655 = pneg %p189
        %p656 = pneg %p186
        %p657 = pneg %p210
        %p658 = pneg %p207
        %p659 = pneg %p231
        %p660 = pneg %p228
        %p661 = pneg %p252
        %p662 = pneg %p249
        %p663 = pneg %p273
        %p664 = pneg %p270
        %p665 = pneg %p294
        %p666 = pneg %p291
        %p667 = pneg %p315
        %p668 = pneg %p312
        %p669 = pneg %p336
        %p670 = pneg %p333
        %p671 = pneg %p357
        %p672 = pneg %p354
        %p673 = pneg %p378
        %p674 = pneg %p375
        %p675 = pneg %p404
        %p676 = pneg %p401
        %s677 = sand.u32 %s391, 1
        %s678 = scalar_lea.sflag [#allocation5], %s677
        %s679 = sand.u32 %s391, 1
        %s680 = smul.addr %s679, 4
        %s681 = scalar_lea.vmem [#allocation4], %s680
        %p682 = pneg %p430
        %p683 = pneg %p427
        %s684 = smul.u32 16, %s32
        %p685 = scmp.lt.s32.totalorder %s684, 31
        %s686 = scalar_select %p685, %s684, 31
        %s687 = scalar_lea.vmem %s17, %s686
        %s688 = smul.u32 16, %s32
        %s689 = smul.u32 16, %s32
        %s690 = smul.u32 16, %s32
        %p691 = scmp.lt.s32.totalorder %s690, 31
        %s692 = scalar_select %p691, %s690, 31
        %s693 = scalar_lea.vmem %s2, %s692
        %s694 = smul.u32 16, %s32
        %s695 = smul.u32 16, %s32
        %p696 = scmp.lt.s32.totalorder %s695, 31
        %s697 = scalar_select %p696, %s695, 31
        %s698 = scalar_lea.vmem %s17, %s697
        %s699 = smul.u32 16, %s32
        %v701 = vld [vmem:[%s3] sm:$0xf]
        %v702 = vld [vmem:[%s3 + $0x4] sm:$0xf]
        %v703 = vld [vmem:[%s3 + $0x8] sm:$0xf]
        %v704 = vld [vmem:[%s3 + $0xc] sm:$0xf]
        %v705 = vld [vmem:[%s620] sm:$0xff]
        %v706 = vld [vmem:[%s620 + $0x8] sm:$0xff]
        %v707 = vld [vmem:[%s620 + $0x10] sm:$0xff]
        %v708 = vld [vmem:[%s620 + $0x18] sm:$0xff]
        %v709 = vld [vmem:[%s620 + $0x20] sm:$0xff]
        %v710 = vld [vmem:[%s620 + $0x28] sm:$0xff]
        %v711 = vld [vmem:[%s620 + $0x30] sm:$0xff]
        %v712 = vld [vmem:[%s620 + $0x38] sm:$0xff]
        %v713 = vld [vmem:[%s620 + $0x40] sm:$0xff]
        %v714 = vld [vmem:[%s620 + $0x48] sm:$0xff]
        %v715 = vld [vmem:[%s620 + $0x50] sm:$0xff]
        %v716 = vld [vmem:[%s620 + $0x58] sm:$0xff]
        %v717 = vld [vmem:[%s620 + $0x60] sm:$0xff]
        %v718 = vld [vmem:[%s620 + $0x68] sm:$0xff]
        %v719 = vld [vmem:[%s620 + $0x70] sm:$0xff]
        %v720 = vld [vmem:[%s620 + $0x78] sm:$0xff]
        %v721 = vld [vmem:[%s4] sm:$0xff]
        %v722 = vld [vmem:[%s4 + $0x8] sm:$0xff]
        %v723 = vld [vmem:[%s4 + $0x10] sm:$0xff]
        %v724 = vld [vmem:[%s4 + $0x18] sm:$0xff]
        %726 = vset.pattern.permute.xlu0 0
        %727 = vperm.xlu0 %726, %v721
        %v728 = vpop.permute.xlu0 %727
        %731 = vset.pattern.permute.xlu0 0
        %732 = vperm.xlu0 %731, %v722
        %v733 = vpop.permute.xlu0 %732
        %736 = vset.pattern.permute.xlu0 0
        %737 = vperm.xlu0 %736, %v723
        %v738 = vpop.permute.xlu0 %737
        %741 = vset.pattern.permute.xlu0 0
        %742 = vperm.xlu0 %741, %v724
        %v743 = vpop.permute.xlu0 %742
        %v749 = vunpack.c.l.b16 %v701
        %v750 = vunpack.c.l.b16 %v702
        %v751 = vunpack.c.l.b16 %v703
        %v752 = vunpack.c.l.b16 %v704
        %v753 = vpack.c.b16 %v750, %v749
        %v754 = vpack.c.b16 %v752, %v751
        %v771 = vunpack.c.l.b16 %v705
        %v772 = vunpack.c.h.b16 %v705
        %v773 = vunpack.c.l.b16 %v706
        %v774 = vunpack.c.h.b16 %v706
        %v775 = vunpack.c.l.b16 %v707
        %v776 = vunpack.c.h.b16 %v707
        %v777 = vunpack.c.l.b16 %v708
        %v778 = vunpack.c.h.b16 %v708
        %v779 = vunpack.c.l.b16 %v709
        %v780 = vunpack.c.h.b16 %v709
        %v781 = vunpack.c.l.b16 %v710
        %v782 = vunpack.c.h.b16 %v710
        %v783 = vunpack.c.l.b16 %v711
        %v784 = vunpack.c.h.b16 %v711
        %v785 = vunpack.c.l.b16 %v712
        %v786 = vunpack.c.h.b16 %v712
        %v787 = vunpack.c.l.b16 %v713
        %v788 = vunpack.c.h.b16 %v713
        %v789 = vunpack.c.l.b16 %v714
        %v790 = vunpack.c.h.b16 %v714
        %v791 = vunpack.c.l.b16 %v715
        %v792 = vunpack.c.h.b16 %v715
        %v793 = vunpack.c.l.b16 %v716
        %v794 = vunpack.c.h.b16 %v716
        %v795 = vunpack.c.l.b16 %v717
        %v796 = vunpack.c.h.b16 %v717
        %v797 = vunpack.c.l.b16 %v718
        %v798 = vunpack.c.h.b16 %v718
        %v799 = vunpack.c.l.b16 %v719
        %v800 = vunpack.c.h.b16 %v719
        %v801 = vunpack.c.l.b16 %v720
        %v802 = vunpack.c.h.b16 %v720
        %v803 = vpack.c.b16 %v787, %v771
        %v804 = vpack.c.b16 %v788, %v772
        %v805 = vpack.c.b16 %v789, %v773
        %v806 = vpack.c.b16 %v790, %v774
        %v807 = vpack.c.b16 %v791, %v775
        %v808 = vpack.c.b16 %v792, %v776
        %v809 = vpack.c.b16 %v793, %v777
        %v810 = vpack.c.b16 %v794, %v778
        %v811 = vpack.c.b16 %v795, %v779
        %v812 = vpack.c.b16 %v796, %v780
        %v813 = vpack.c.b16 %v797, %v781
        %v814 = vpack.c.b16 %v798, %v782
        %v815 = vpack.c.b16 %v799, %v783
        %v816 = vpack.c.b16 %v800, %v784
        %v817 = vpack.c.b16 %v801, %v785
        %v818 = vpack.c.b16 %v802, %v786
        %vm835 = vcmask 130048
        %v837 = vsel %vm835, %v753, 0
        %v840 = vsel %vm835, %v754, 0
        %842 = vmatprep.subr.bf16.mxu0 %v804
        %843 = vmatpush1.bf16.msra.mxu0 %v803
        %844 = vmatprep.subr.bf16.mxu0 0
        %845 = vmatpush1.bf16.msra.mxu0 0
        %846 = vmatprep.subr.bf16.mxu0 0
        %847 = vmatpush1.bf16.msra.mxu0 0
        %848 = vmatprep.subr.bf16.mxu0 0
        %849 = vmatpush1.bf16.msra.mxu0 0
        %850 = vmatprep.subr.bf16.mxu0 0
        %851 = vmatpush1.bf16.msra.mxu0 0
        %852 = vmatprep.subr.bf16.mxu0 0
        %853 = vmatpush1.bf16.msra.mxu0 0
        %854 = vmatprep.subr.bf16.mxu0 0
        %855 = vmatpush1.bf16.msra.mxu0 0
        %856 = vmatprep.subr.bf16.mxu0 0
        %857 = vmatpush1.bf16.msra.mxu0 0
        %858 = vmatprep.subr.bf16.mxu0 0
        %859 = vmatpush1.bf16.msra.mxu0 0
        %860 = vmatprep.subr.bf16.mxu0 0
        %861 = vmatpush1.bf16.msra.mxu0 0
        %862 = vmatprep.subr.bf16.mxu0 0
        %863 = vmatpush1.bf16.msra.mxu0 0
        %864 = vmatprep.subr.bf16.mxu0 0
        %865 = vmatpush1.bf16.msra.mxu0 0
        %866 = vmatprep.subr.bf16.mxu0 0
        %867 = vmatpush1.bf16.msra.mxu0 0
        %868 = vmatprep.subr.bf16.mxu0 0
        %869 = vmatpush1.bf16.msra.mxu0 0
        %870 = vmatprep.subr.bf16.mxu0 0
        %871 = vmatpush1.bf16.msra.mxu0 0
        %872 = vmatprep.subr.bf16.mxu0 0
        %873 = vmatpush1.bf16.msra.mxu0 0
        %874 = vmatprep.mubr.bf16.mxu0 0
        %875 = vmatmul.mubr.bf16.gmra.mrb[0].mxu0 %v837
        %v876 = vpop.f32.mrb[0].mxu0
        %v877 = vadd.f32 %v728, %v876
        %v878 = vpop.f32.mrb[0].mxu0
        %v879 = vadd.f32 %v728, %v878
        %v880 = vpop.f32.mrb[0].mxu0
        %v881 = vadd.f32 %v733, %v880
        %v882 = vpop.f32.mrb[0].mxu0
        %v883 = vadd.f32 %v733, %v882
        %884 = vmatprep.mubr.bf16.mxu0 0
        %885 = vmatmul.mubr.bf16.gmra.mrb[0].mxu0 %v840
        %v886 = vpop.f32.mrb[0].mxu0
        %v887 = vadd.f32 %v738, %v886
        %v888 = vpop.f32.mrb[0].mxu0
        %v889 = vadd.f32 %v738, %v888
        %v890 = vpop.f32.mrb[0].mxu0
        %v891 = vadd.f32 %v743, %v890
        %v892 = vpop.f32.mrb[0].mxu0
        %v893 = vadd.f32 %v743, %v892
        %894 = vdwg.mxu0
        %895 = vmatprep.subr.bf16.mxu0 %v806
        %896 = vmatpush1.bf16.msra.mxu0 %v805
        %897 = vmatprep.subr.bf16.mxu0 0
        %898 = vmatpush1.bf16.msra.mxu0 0
        %899 = vmatprep.subr.bf16.mxu0 0
        %900 = vmatpush1.bf16.msra.mxu0 0
        %901 = vmatprep.subr.bf16.mxu0 0
        %902 = vmatpush1.bf16.msra.mxu0 0
        %903 = vmatprep.subr.bf16.mxu0 0
        %904 = vmatpush1.bf16.msra.mxu0 0
        %905 = vmatprep.subr.bf16.mxu0 0
        %906 = vmatpush1.bf16.msra.mxu0 0
        %907 = vmatprep.subr.bf16.mxu0 0
        %908 = vmatpush1.bf16.msra.mxu0 0
        %909 = vmatprep.subr.bf16.mxu0 0
        %910 = vmatpush1.bf16.msra.mxu0 0
        %911 = vmatprep.subr.bf16.mxu0 0
        %912 = vmatpush1.bf16.msra.mxu0 0
        %913 = vmatprep.subr.bf16.mxu0 0
        %914 = vmatpush1.bf16.msra.mxu0 0
        %915 = vmatprep.subr.bf16.mxu0 0
        %916 = vmatpush1.bf16.msra.mxu0 0
        %917 = vmatprep.subr.bf16.mxu0 0
        %918 = vmatpush1.bf16.msra.mxu0 0
        %919 = vmatprep.subr.bf16.mxu0 0
        %920 = vmatpush1.bf16.msra.mxu0 0
        %921 = vmatprep.subr.bf16.mxu0 0
        %922 = vmatpush1.bf16.msra.mxu0 0
        %923 = vmatprep.subr.bf16.mxu0 0
        %924 = vmatpush1.bf16.msra.mxu0 0
        %925 = vmatprep.subr.bf16.mxu0 0
        %926 = vmatpush1.bf16.msra.mxu0 0
        %927 = vmatprep.mubr.bf16.mxu0 0
        %928 = vmatmul.mubr.bf16.gmra.mrb[0].mxu0 %v837
        %v929 = vpop.f32.mrb[0].mxu0
        %v930 = vadd.f32 %v728, %v929
        %v931 = vpop.f32.mrb[0].mxu0
        %v932 = vadd.f32 %v728, %v931
        %v933 = vpop.f32.mrb[0].mxu0
        %v934 = vadd.f32 %v733, %v933
        %v935 = vpop.f32.mrb[0].mxu0
        %v936 = vadd.f32 %v733, %v935
        %937 = vmatprep.mubr.bf16.mxu0 0
        %938 = vmatmul.mubr.bf16.gmra.mrb[0].mxu0 %v840
        %v939 = vpop.f32.mrb[0].mxu0
        %v940 = vadd.f32 %v738, %v939
        %v941 = vpop.f32.mrb[0].mxu0
        %v942 = vadd.f32 %v738, %v941
        %v943 = vpop.f32.mrb[0].mxu0
        %v944 = vadd.f32 %v743, %v943
        %v945 = vpop.f32.mrb[0].mxu0
        %v946 = vadd.f32 %v743, %v945
        %947 = vdwg.mxu0
        %948 = vmatprep.subr.bf16.mxu0 %v808
        %949 = vmatpush1.bf16.msra.mxu0 %v807
        %950 = vmatprep.subr.bf16.mxu0 0
        %951 = vmatpush1.bf16.msra.mxu0 0
        %952 = vmatprep.subr.bf16.mxu0 0
        %953 = vmatpush1.bf16.msra.mxu0 0
        %954 = vmatprep.subr.bf16.mxu0 0
        %955 = vmatpush1.bf16.msra.mxu0 0
        %956 = vmatprep.subr.bf16.mxu0 0
        %957 = vmatpush1.bf16.msra.mxu0 0
        %958 = vmatprep.subr.bf16.mxu0 0
        %959 = vmatpush1.bf16.msra.mxu0 0
        %960 = vmatprep.subr.bf16.mxu0 0
        %961 = vmatpush1.bf16.msra.mxu0 0
        %962 = vmatprep.subr.bf16.mxu0 0
        %963 = vmatpush1.bf16.msra.mxu0 0
        %964 = vmatprep.subr.bf16.mxu0 0
        %965 = vmatpush1.bf16.msra.mxu0 0
        %966 = vmatprep.subr.bf16.mxu0 0
        %967 = vmatpush1.bf16.msra.mxu0 0
        %968 = vmatprep.subr.bf16.mxu0 0
        %969 = vmatpush1.bf16.msra.mxu0 0
        %970 = vmatprep.subr.bf16.mxu0 0
        %971 = vmatpush1.bf16.msra.mxu0 0
        %972 = vmatprep.subr.bf16.mxu0 0
        %973 = vmatpush1.bf16.msra.mxu0 0
        %974 = vmatprep.subr.bf16.mxu0 0
        %975 = vmatpush1.bf16.msra.mxu0 0
        %976 = vmatprep.subr.bf16.mxu0 0
        %977 = vmatpush1.bf16.msra.mxu0 0
        %978 = vmatprep.subr.bf16.mxu0 0
        %979 = vmatpush1.bf16.msra.mxu0 0
        %980 = vmatprep.mubr.bf16.mxu0 0
        %981 = vmatmul.mubr.bf16.gmra.mrb[0].mxu0 %v837
        %v982 = vpop.f32.mrb[0].mxu0
        %v983 = vadd.f32 %v728, %v982
        %v984 = vpop.f32.mrb[0].mxu0
        %v985 = vadd.f32 %v728, %v984
        %v986 = vpop.f32.mrb[0].mxu0
        %v987 = vadd.f32 %v733, %v986
        %v988 = vpop.f32.mrb[0].mxu0
        %v989 = vadd.f32 %v733, %v988
        %990 = vmatprep.mubr.bf16.mxu0 0
        %991 = vmatmul.mubr.bf16.gmra.mrb[0].mxu0 %v840
        %v992 = vpop.f32.mrb[0].mxu0
        %v993 = vadd.f32 %v738, %v992
        %v994 = vpop.f32.mrb[0].mxu0
        %v995 = vadd.f32 %v738, %v994
        %v996 = vpop.f32.mrb[0].mxu0
        %v997 = vadd.f32 %v743, %v996
        %v998 = vpop.f32.mrb[0].mxu0
        %v999 = vadd.f32 %v743, %v998
        %1000 = vdwg.mxu0
        %1001 = vmatprep.subr.bf16.mxu0 %v810
        %1002 = vmatpush1.bf16.msra.mxu0 %v809
        %1003 = vmatprep.subr.bf16.mxu0 0
        %1004 = vmatpush1.bf16.msra.mxu0 0
        %1005 = vmatprep.subr.bf16.mxu0 0
        %1006 = vmatpush1.bf16.msra.mxu0 0
        %1007 = vmatprep.subr.bf16.mxu0 0
        %1008 = vmatpush1.bf16.msra.mxu0 0
        %1009 = vmatprep.subr.bf16.mxu0 0
        %1010 = vmatpush1.bf16.msra.mxu0 0
        %1011 = vmatprep.subr.bf16.mxu0 0
        %1012 = vmatpush1.bf16.msra.mxu0 0
        %1013 = vmatprep.subr.bf16.mxu0 0
        %1014 = vmatpush1.bf16.msra.mxu0 0
        %1015 = vmatprep.subr.bf16.mxu0 0
        %1016 = vmatpush1.bf16.msra.mxu0 0
        %1017 = vmatprep.subr.bf16.mxu0 0
        %1018 = vmatpush1.bf16.msra.mxu0 0
        %1019 = vmatprep.subr.bf16.mxu0 0
        %1020 = vmatpush1.bf16.msra.mxu0 0
        %1021 = vmatprep.subr.bf16.mxu0 0
        %1022 = vmatpush1.bf16.msra.mxu0 0
        %1023 = vmatprep.subr.bf16.mxu0 0
        %1024 = vmatpush1.bf16.msra.mxu0 0
        %1025 = vmatprep.subr.bf16.mxu0 0
        %1026 = vmatpush1.bf16.msra.mxu0 0
        %1027 = vmatprep.subr.bf16.mxu0 0
        %1028 = vmatpush1.bf16.msra.mxu0 0
        %1029 = vmatprep.subr.bf16.mxu0 0
        %1030 = vmatpush1.bf16.msra.mxu0 0
        %1031 = vmatprep.subr.bf16.mxu0 0
        %1032 = vmatpush1.bf16.msra.mxu0 0
        %1033 = vmatprep.mubr.bf16.mxu0 0
        %1034 = vmatmul.mubr.bf16.gmra.mrb[0].mxu0 %v837
        %v1035 = vpop.f32.mrb[0].mxu0
        %v1036 = vadd.f32 %v728, %v1035
        %v1037 = vpop.f32.mrb[0].mxu0
        %v1038 = vadd.f32 %v728, %v1037
        %v1039 = vpop.f32.mrb[0].mxu0
        %v1040 = vadd.f32 %v733, %v1039
        %v1041 = vpop.f32.mrb[0].mxu0
        %v1042 = vadd.f32 %v733, %v1041
        %1043 = vmatprep.mubr.bf16.mxu0 0
        %1044 = vmatmul.mubr.bf16.gmra.mrb[0].mxu0 %v840
        %v1045 = vpop.f32.mrb[0].mxu0
        %v1046 = vadd.f32 %v738, %v1045
        %v1047 = vpop.f32.mrb[0].mxu0
        %v1048 = vadd.f32 %v738, %v1047
        %v1049 = vpop.f32.mrb[0].mxu0
        %v1050 = vadd.f32 %v743, %v1049
        %v1051 = vpop.f32.mrb[0].mxu0
        %v1052 = vadd.f32 %v743, %v1051
        %1053 = vdwg.mxu0
        %1054 = vmatprep.subr.bf16.mxu0 %v812
        %1055 = vmatpush1.bf16.msra.mxu0 %v811
        %1056 = vmatprep.subr.bf16.mxu0 0
        %1057 = vmatpush1.bf16.msra.mxu0 0
        %1058 = vmatprep.subr.bf16.mxu0 0
        %1059 = vmatpush1.bf16.msra.mxu0 0
        %1060 = vmatprep.subr.bf16.mxu0 0
        %1061 = vmatpush1.bf16.msra.mxu0 0
        %1062 = vmatprep.subr.bf16.mxu0 0
        %1063 = vmatpush1.bf16.msra.mxu0 0
        %1064 = vmatprep.subr.bf16.mxu0 0
        %1065 = vmatpush1.bf16.msra.mxu0 0
        %1066 = vmatprep.subr.bf16.mxu0 0
        %1067 = vmatpush1.bf16.msra.mxu0 0
        %1068 = vmatprep.subr.bf16.mxu0 0
        %1069 = vmatpush1.bf16.msra.mxu0 0
        %1070 = vmatprep.subr.bf16.mxu0 0
        %1071 = vmatpush1.bf16.msra.mxu0 0
        %1072 = vmatprep.subr.bf16.mxu0 0
        %1073 = vmatpush1.bf16.msra.mxu0 0
        %1074 = vmatprep.subr.bf16.mxu0 0
        %1075 = vmatpush1.bf16.msra.mxu0 0
        %1076 = vmatprep.subr.bf16.mxu0 0
        %1077 = vmatpush1.bf16.msra.mxu0 0
        %1078 = vmatprep.subr.bf16.mxu0 0
        %1079 = vmatpush1.bf16.msra.mxu0 0
        %1080 = vmatprep.subr.bf16.mxu0 0
        %1081 = vmatpush1.bf16.msra.mxu0 0
        %1082 = vmatprep.subr.bf16.mxu0 0
        %1083 = vmatpush1.bf16.msra.mxu0 0
        %1084 = vmatprep.subr.bf16.mxu0 0
        %1085 = vmatpush1.bf16.msra.mxu0 0
        %1086 = vmatprep.mubr.bf16.mxu0 0
        %1087 = vmatmul.mubr.bf16.gmra.mrb[0].mxu0 %v837
        %v1088 = vpop.f32.mrb[0].mxu0
        %v1089 = vadd.f32 %v728, %v1088
        %v1090 = vpop.f32.mrb[0].mxu0
        %v1091 = vadd.f32 %v728, %v1090
        %v1092 = vpop.f32.mrb[0].mxu0
        %v1093 = vadd.f32 %v733, %v1092
        %v1094 = vpop.f32.mrb[0].mxu0
        %v1095 = vadd.f32 %v733, %v1094
        %1096 = vmatprep.mubr.bf16.mxu0 0
        %1097 = vmatmul.mubr.bf16.gmra.mrb[0].mxu0 %v840
        %v1098 = vpop.f32.mrb[0].mxu0
        %v1099 = vadd.f32 %v738, %v1098
        %v1100 = vpop.f32.mrb[0].mxu0
        %v1101 = vadd.f32 %v738, %v1100
        %v1102 = vpop.f32.mrb[0].mxu0
        %v1103 = vadd.f32 %v743, %v1102
        %v1104 = vpop.f32.mrb[0].mxu0
        %v1105 = vadd.f32 %v743, %v1104
        %1106 = vdwg.mxu0
        %1107 = vmatprep.subr.bf16.mxu0 %v814
        %1108 = vmatpush1.bf16.msra.mxu0 %v813
        %1109 = vmatprep.subr.bf16.mxu0 0
        %1110 = vmatpush1.bf16.msra.mxu0 0
        %1111 = vmatprep.subr.bf16.mxu0 0
        %1112 = vmatpush1.bf16.msra.mxu0 0
        %1113 = vmatprep.subr.bf16.mxu0 0
        %1114 = vmatpush1.bf16.msra.mxu0 0
        %1115 = vmatprep.subr.bf16.mxu0 0
        %1116 = vmatpush1.bf16.msra.mxu0 0
        %1117 = vmatprep.subr.bf16.mxu0 0
        %1118 = vmatpush1.bf16.msra.mxu0 0
        %1119 = vmatprep.subr.bf16.mxu0 0
        %1120 = vmatpush1.bf16.msra.mxu0 0
        %1121 = vmatprep.subr.bf16.mxu0 0
        %1122 = vmatpush1.bf16.msra.mxu0 0
        %1123 = vmatprep.subr.bf16.mxu0 0
        %1124 = vmatpush1.bf16.msra.mxu0 0
        %1125 = vmatprep.subr.bf16.mxu0 0
        %1126 = vmatpush1.bf16.msra.mxu0 0
        %1127 = vmatprep.subr.bf16.mxu0 0
        %1128 = vmatpush1.bf16.msra.mxu0 0
        %1129 = vmatprep.subr.bf16.mxu0 0
        %1130 = vmatpush1.bf16.msra.mxu0 0
        %1131 = vmatprep.subr.bf16.mxu0 0
        %1132 = vmatpush1.bf16.msra.mxu0 0
        %1133 = vmatprep.subr.bf16.mxu0 0
        %1134 = vmatpush1.bf16.msra.mxu0 0
        %1135 = vmatprep.subr.bf16.mxu0 0
        %1136 = vmatpush1.bf16.msra.mxu0 0
        %1137 = vmatprep.subr.bf16.mxu0 0
        %1138 = vmatpush1.bf16.msra.mxu0 0
        %1139 = vmatprep.mubr.bf16.mxu0 0
        %1140 = vmatmul.mubr.bf16.gmra.mrb[0].mxu0 %v837
        %v1141 = vpop.f32.mrb[0].mxu0
        %v1142 = vadd.f32 %v728, %v1141
        %v1143 = vpop.f32.mrb[0].mxu0
        %v1144 = vadd.f32 %v728, %v1143
        %v1145 = vpop.f32.mrb[0].mxu0
        %v1146 = vadd.f32 %v733, %v1145
        %v1147 = vpop.f32.mrb[0].mxu0
        %v1148 = vadd.f32 %v733, %v1147
        %1149 = vmatprep.mubr.bf16.mxu0 0
        %1150 = vmatmul.mubr.bf16.gmra.mrb[0].mxu0 %v840
        %v1151 = vpop.f32.mrb[0].mxu0
        %v1152 = vadd.f32 %v738, %v1151
        %v1153 = vpop.f32.mrb[0].mxu0
        %v1154 = vadd.f32 %v738, %v1153
        %v1155 = vpop.f32.mrb[0].mxu0
        %v1156 = vadd.f32 %v743, %v1155
        %v1157 = vpop.f32.mrb[0].mxu0
        %v1158 = vadd.f32 %v743, %v1157
        %1159 = vdwg.mxu0
        %1160 = vmatprep.subr.bf16.mxu0 %v816
        %1161 = vmatpush1.bf16.msra.mxu0 %v815
        %1162 = vmatprep.subr.bf16.mxu0 0
        %1163 = vmatpush1.bf16.msra.mxu0 0
        %1164 = vmatprep.subr.bf16.mxu0 0
        %1165 = vmatpush1.bf16.msra.mxu0 0
        %1166 = vmatprep.subr.bf16.mxu0 0
        %1167 = vmatpush1.bf16.msra.mxu0 0
        %1168 = vmatprep.subr.bf16.mxu0 0
        %1169 = vmatpush1.bf16.msra.mxu0 0
        %1170 = vmatprep.subr.bf16.mxu0 0
        %1171 = vmatpush1.bf16.msra.mxu0 0
        %1172 = vmatprep.subr.bf16.mxu0 0
        %1173 = vmatpush1.bf16.msra.mxu0 0
        %1174 = vmatprep.subr.bf16.mxu0 0
        %1175 = vmatpush1.bf16.msra.mxu0 0
        %1176 = vmatprep.subr.bf16.mxu0 0
        %1177 = vmatpush1.bf16.msra.mxu0 0
        %1178 = vmatprep.subr.bf16.mxu0 0
        %1179 = vmatpush1.bf16.msra.mxu0 0
        %1180 = vmatprep.subr.bf16.mxu0 0
        %1181 = vmatpush1.bf16.msra.mxu0 0
        %1182 = vmatprep.subr.bf16.mxu0 0
        %1183 = vmatpush1.bf16.msra.mxu0 0
        %1184 = vmatprep.subr.bf16.mxu0 0
        %1185 = vmatpush1.bf16.msra.mxu0 0
        %1186 = vmatprep.subr.bf16.mxu0 0
        %1187 = vmatpush1.bf16.msra.mxu0 0
        %1188 = vmatprep.subr.bf16.mxu0 0
        %1189 = vmatpush1.bf16.msra.mxu0 0
        %1190 = vmatprep.subr.bf16.mxu0 0
        %1191 = vmatpush1.bf16.msra.mxu0 0
        %1192 = vmatprep.mubr.bf16.mxu0 0
        %1193 = vmatmul.mubr.bf16.gmra.mrb[0].mxu0 %v837
        %v1194 = vpop.f32.mrb[0].mxu0
        %v1195 = vadd.f32 %v728, %v1194
        %v1196 = vpop.f32.mrb[0].mxu0
        %v1197 = vadd.f32 %v728, %v1196
        %v1198 = vpop.f32.mrb[0].mxu0
        %v1199 = vadd.f32 %v733, %v1198
        %v1200 = vpop.f32.mrb[0].mxu0
        %v1201 = vadd.f32 %v733, %v1200
        %1202 = vmatprep.mubr.bf16.mxu0 0
        %1203 = vmatmul.mubr.bf16.gmra.mrb[0].mxu0 %v840
        %v1204 = vpop.f32.mrb[0].mxu0
        %v1205 = vadd.f32 %v738, %v1204
        %v1206 = vpop.f32.mrb[0].mxu0
        %v1207 = vadd.f32 %v738, %v1206
        %v1208 = vpop.f32.mrb[0].mxu0
        %v1209 = vadd.f32 %v743, %v1208
        %v1210 = vpop.f32.mrb[0].mxu0
        %v1211 = vadd.f32 %v743, %v1210
        %1212 = vdwg.mxu0
        %1213 = vmatprep.subr.bf16.mxu0 %v818
        %1214 = vmatpush1.bf16.msra.mxu0 %v817
        %1215 = vmatprep.subr.bf16.mxu0 0
        %1216 = vmatpush1.bf16.msra.mxu0 0
        %1217 = vmatprep.subr.bf16.mxu0 0
        %1218 = vmatpush1.bf16.msra.mxu0 0
        %1219 = vmatprep.subr.bf16.mxu0 0
        %1220 = vmatpush1.bf16.msra.mxu0 0
        %1221 = vmatprep.subr.bf16.mxu0 0
        %1222 = vmatpush1.bf16.msra.mxu0 0
        %1223 = vmatprep.subr.bf16.mxu0 0
        %1224 = vmatpush1.bf16.msra.mxu0 0
        %1225 = vmatprep.subr.bf16.mxu0 0
        %1226 = vmatpush1.bf16.msra.mxu0 0
        %1227 = vmatprep.subr.bf16.mxu0 0
        %1228 = vmatpush1.bf16.msra.mxu0 0
        %1229 = vmatprep.subr.bf16.mxu0 0
        %1230 = vmatpush1.bf16.msra.mxu0 0
        %1231 = vmatprep.subr.bf16.mxu0 0
        %1232 = vmatpush1.bf16.msra.mxu0 0
        %1233 = vmatprep.subr.bf16.mxu0 0
        %1234 = vmatpush1.bf16.msra.mxu0 0
        %1235 = vmatprep.subr.bf16.mxu0 0
        %1236 = vmatpush1.bf16.msra.mxu0 0
        %1237 = vmatprep.subr.bf16.mxu0 0
        %1238 = vmatpush1.bf16.msra.mxu0 0
        %1239 = vmatprep.subr.bf16.mxu0 0
        %1240 = vmatpush1.bf16.msra.mxu0 0
        %1241 = vmatprep.subr.bf16.mxu0 0
        %1242 = vmatpush1.bf16.msra.mxu0 0
        %1243 = vmatprep.subr.bf16.mxu0 0
        %1244 = vmatpush1.bf16.msra.mxu0 0
        %1245 = vmatprep.mubr.bf16.mxu0 0
        %1246 = vmatmul.mubr.bf16.gmra.mrb[0].mxu0 %v837
        %v1247 = vpop.f32.mrb[0].mxu0
        %v1248 = vadd.f32 %v728, %v1247
        %v1249 = vpop.f32.mrb[0].mxu0
        %v1250 = vadd.f32 %v728, %v1249
        %v1251 = vpop.f32.mrb[0].mxu0
        %v1252 = vadd.f32 %v733, %v1251
        %v1253 = vpop.f32.mrb[0].mxu0
        %v1254 = vadd.f32 %v733, %v1253
        %1255 = vmatprep.mubr.bf16.mxu0 0
        %1256 = vmatmul.mubr.bf16.gmra.mrb[0].mxu0 %v840
        %v1257 = vpop.f32.mrb[0].mxu0
        %v1258 = vadd.f32 %v738, %v1257
        %v1259 = vpop.f32.mrb[0].mxu0
        %v1260 = vadd.f32 %v738, %v1259
        %v1261 = vpop.f32.mrb[0].mxu0
        %v1262 = vadd.f32 %v743, %v1261
        %v1263 = vpop.f32.mrb[0].mxu0
        %v1264 = vadd.f32 %v743, %v1263
        %1265 = vdwg.mxu0
        %v1266 = vmax.f32 %v877, 0.0
        %v1267 = vmax.f32 %v879, 0.0
        %v1268 = vmax.f32 %v930, 0.0
        %v1269 = vmax.f32 %v932, 0.0
        %v1270 = vmax.f32 %v983, 0.0
        %v1271 = vmax.f32 %v985, 0.0
        %v1272 = vmax.f32 %v1036, 0.0
        %v1273 = vmax.f32 %v1038, 0.0
        %v1274 = vmax.f32 %v1089, 0.0
        %v1275 = vmax.f32 %v1091, 0.0
        %v1276 = vmax.f32 %v1142, 0.0
        %v1277 = vmax.f32 %v1144, 0.0
        %v1278 = vmax.f32 %v1195, 0.0
        %v1279 = vmax.f32 %v1197, 0.0
        %v1280 = vmax.f32 %v1248, 0.0
        %v1281 = vmax.f32 %v1250, 0.0
        %v1282 = vmax.f32 %v881, 0.0
        %v1283 = vmax.f32 %v883, 0.0
        %v1284 = vmax.f32 %v934, 0.0
        %v1285 = vmax.f32 %v936, 0.0
        %v1286 = vmax.f32 %v987, 0.0
        %v1287 = vmax.f32 %v989, 0.0
        %v1288 = vmax.f32 %v1040, 0.0
        %v1289 = vmax.f32 %v1042, 0.0
        %v1290 = vmax.f32 %v1093, 0.0
        %v1291 = vmax.f32 %v1095, 0.0
        %v1292 = vmax.f32 %v1146, 0.0
        %v1293 = vmax.f32 %v1148, 0.0
        %v1294 = vmax.f32 %v1199, 0.0
        %v1295 = vmax.f32 %v1201, 0.0
        %v1296 = vmax.f32 %v1252, 0.0
        %v1297 = vmax.f32 %v1254, 0.0
        %v1298 = vmax.f32 %v887, 0.0
        %v1299 = vmax.f32 %v889, 0.0
        %v1300 = vmax.f32 %v940, 0.0
        %v1301 = vmax.f32 %v942, 0.0
        %v1302 = vmax.f32 %v993, 0.0
        %v1303 = vmax.f32 %v995, 0.0
        %v1304 = vmax.f32 %v1046, 0.0
        %v1305 = vmax.f32 %v1048, 0.0
        %v1306 = vmax.f32 %v1099, 0.0
        %v1307 = vmax.f32 %v1101, 0.0
        %v1308 = vmax.f32 %v1152, 0.0
        %v1309 = vmax.f32 %v1154, 0.0
        %v1310 = vmax.f32 %v1205, 0.0
        %v1311 = vmax.f32 %v1207, 0.0
        %v1312 = vmax.f32 %v1258, 0.0
        %v1313 = vmax.f32 %v1260, 0.0
        %v1314 = vmax.f32 %v891, 0.0
        %v1315 = vmax.f32 %v893, 0.0
        %v1316 = vmax.f32 %v944, 0.0
        %v1317 = vmax.f32 %v946, 0.0
        %v1318 = vmax.f32 %v997, 0.0
        %v1319 = vmax.f32 %v999, 0.0
        %v1320 = vmax.f32 %v1050, 0.0
        %v1321 = vmax.f32 %v1052, 0.0
        %v1322 = vmax.f32 %v1103, 0.0
        %v1323 = vmax.f32 %v1105, 0.0
        %v1324 = vmax.f32 %v1156, 0.0
        %v1325 = vmax.f32 %v1158, 0.0
        %v1326 = vmax.f32 %v1209, 0.0
        %v1327 = vmax.f32 %v1211, 0.0
        %v1328 = vmax.f32 %v1262, 0.0
        %v1329 = vmax.f32 %v1264, 0.0
        %v1330 = vpack.c.bf16 %v1282, %v1266
        %v1331 = vpack.c.bf16 %v1283, %v1267
        %v1332 = vpack.c.bf16 %v1284, %v1268
        %v1333 = vpack.c.bf16 %v1285, %v1269
        %v1334 = vpack.c.bf16 %v1286, %v1270
        %v1335 = vpack.c.bf16 %v1287, %v1271
        %v1336 = vpack.c.bf16 %v1288, %v1272
        %v1337 = vpack.c.bf16 %v1289, %v1273
        %v1338 = vpack.c.bf16 %v1290, %v1274
        %v1339 = vpack.c.bf16 %v1291, %v1275
        %v1340 = vpack.c.bf16 %v1292, %v1276
        %v1341 = vpack.c.bf16 %v1293, %v1277
        %v1342 = vpack.c.bf16 %v1294, %v1278
        %v1343 = vpack.c.bf16 %v1295, %v1279
        %v1344 = vpack.c.bf16 %v1296, %v1280
        %v1345 = vpack.c.bf16 %v1297, %v1281
        %v1346 = vpack.c.bf16 %v1314, %v1298
        %v1347 = vpack.c.bf16 %v1315, %v1299
        %v1348 = vpack.c.bf16 %v1316, %v1300
        %v1349 = vpack.c.bf16 %v1317, %v1301
        %v1350 = vpack.c.bf16 %v1318, %v1302
        %v1351 = vpack.c.bf16 %v1319, %v1303
        %v1352 = vpack.c.bf16 %v1320, %v1304
        %v1353 = vpack.c.bf16 %v1321, %v1305
        %v1354 = vpack.c.bf16 %v1322, %v1306
        %v1355 = vpack.c.bf16 %v1323, %v1307
        %v1356 = vpack.c.bf16 %v1324, %v1308
        %v1357 = vpack.c.bf16 %v1325, %v1309
        %v1358 = vpack.c.bf16 %v1326, %v1310
        %v1359 = vpack.c.bf16 %v1327, %v1311
        %v1360 = vpack.c.bf16 %v1328, %v1312
        %v1361 = vpack.c.bf16 %v1329, %v1313
        %v1362 = vld [vmem:[%s5] sm:$0xf]
        %v1363 = vld [vmem:[%s5 + $0x4] sm:$0xf]
        %v1364 = vld [vmem:[%s5 + $0x8] sm:$0xf]
        %v1365 = vld [vmem:[%s5 + $0xc] sm:$0xf]
        %v1366 = vld [vmem:[%s6] sm:$0xff]
        %v1367 = vld [vmem:[%s6 + $0x8] sm:$0xff]
        %v1368 = vld [vmem:[%s6 + $0x10] sm:$0xff]
        %v1369 = vld [vmem:[%s6 + $0x18] sm:$0xff]
        %1371 = vset.pattern.permute.xlu0 0
        %1372 = vperm.xlu0 %1371, %v1366
        %v1373 = vpop.permute.xlu0 %1372
        %1376 = vset.pattern.permute.xlu0 0
        %1377 = vperm.xlu0 %1376, %v1367
        %v1378 = vpop.permute.xlu0 %1377
        %1381 = vset.pattern.permute.xlu0 0
        %1382 = vperm.xlu0 %1381, %v1368
        %v1383 = vpop.permute.xlu0 %1382
        %1386 = vset.pattern.permute.xlu0 0
        %1387 = vperm.xlu0 %1386, %v1369
        %v1388 = vpop.permute.xlu0 %1387
        %v1394 = vunpack.c.l.b16 %v1362
        %v1395 = vunpack.c.l.b16 %v1363
        %v1396 = vunpack.c.l.b16 %v1364
        %v1397 = vunpack.c.l.b16 %v1365
        %v1398 = vpack.c.b16 %v1395, %v1394
        %v1399 = vpack.c.b16 %v1397, %v1396
        %vm1400 = vcmask 261120
        %v1402 = vsel %vm1400, %v1398, 0
        %v1405 = vsel %vm1400, %v1399, 0
        %1407 = vmatprep.subr.bf16.mxu0 %v1331
        %1408 = vmatpush1.bf16.msra.mxu0 %v1330
        %1409 = vmatprep.subr.bf16.mxu0 %v1347
        %1410 = vmatpush1.bf16.msra.mxu0 %v1346
        %1411 = vmatprep.subr.bf16.mxu0 0
        %1412 = vmatpush1.bf16.msra.mxu0 0
        %1413 = vmatprep.subr.bf16.mxu0 0
        %1414 = vmatpush1.bf16.msra.mxu0 0
        %1415 = vmatprep.subr.bf16.mxu0 0
        %1416 = vmatpush1.bf16.msra.mxu0 0
        %1417 = vmatprep.subr.bf16.mxu0 0
        %1418 = vmatpush1.bf16.msra.mxu0 0
        %1419 = vmatprep.subr.bf16.mxu0 0
        %1420 = vmatpush1.bf16.msra.mxu0 0
        %1421 = vmatprep.subr.bf16.mxu0 0
        %1422 = vmatpush1.bf16.msra.mxu0 0
        %1423 = vmatprep.subr.bf16.mxu0 0
        %1424 = vmatpush1.bf16.msra.mxu0 0
        %1425 = vmatprep.subr.bf16.mxu0 0
        %1426 = vmatpush1.bf16.msra.mxu0 0
        %1427 = vmatprep.subr.bf16.mxu0 0
        %1428 = vmatpush1.bf16.msra.mxu0 0
        %1429 = vmatprep.subr.bf16.mxu0 0
        %1430 = vmatpush1.bf16.msra.mxu0 0
        %1431 = vmatprep.subr.bf16.mxu0 0
        %1432 = vmatpush1.bf16.msra.mxu0 0
        %1433 = vmatprep.subr.bf16.mxu0 0
        %1434 = vmatpush1.bf16.msra.mxu0 0
        %1435 = vmatprep.subr.bf16.mxu0 0
        %1436 = vmatpush1.bf16.msra.mxu0 0
        %1437 = vmatprep.subr.bf16.mxu0 0
        %1438 = vmatpush1.bf16.msra.mxu0 0
        %1439 = vmatprep.mubr.bf16.mxu0 0
        %1440 = vmatmul.mubr.bf16.gmra.mrb[0].mxu0 %v1402
        %v1441 = vpop.f32.mrb[0].mxu0
        %v1442 = vadd.f32 %v1373, %v1441
        %v1443 = vpop.f32.mrb[0].mxu0
        %v1444 = vadd.f32 %v1373, %v1443
        %v1445 = vpop.f32.mrb[0].mxu0
        %v1446 = vadd.f32 %v1378, %v1445
        %v1447 = vpop.f32.mrb[0].mxu0
        %v1448 = vadd.f32 %v1378, %v1447
        %1449 = vmatprep.mubr.bf16.mxu0 0
        %1450 = vmatmul.mubr.bf16.gmra.mrb[0].mxu0 %v1405
        %v1451 = vpop.f32.mrb[0].mxu0
        %v1452 = vadd.f32 %v1383, %v1451
        %v1453 = vpop.f32.mrb[0].mxu0
        %v1454 = vadd.f32 %v1383, %v1453
        %v1455 = vpop.f32.mrb[0].mxu0
        %v1456 = vadd.f32 %v1388, %v1455
        %v1457 = vpop.f32.mrb[0].mxu0
        %v1458 = vadd.f32 %v1388, %v1457
        %1459 = vdwg.mxu0
        %1460 = vmatprep.subr.bf16.mxu0 %v1333
        %1461 = vmatpush1.bf16.msra.mxu0 %v1332
        %1462 = vmatprep.subr.bf16.mxu0 %v1349
        %1463 = vmatpush1.bf16.msra.mxu0 %v1348
        %1464 = vmatprep.subr.bf16.mxu0 0
        %1465 = vmatpush1.bf16.msra.mxu0 0
        %1466 = vmatprep.subr.bf16.mxu0 0
        %1467 = vmatpush1.bf16.msra.mxu0 0
        %1468 = vmatprep.subr.bf16.mxu0 0
        %1469 = vmatpush1.bf16.msra.mxu0 0
        %1470 = vmatprep.subr.bf16.mxu0 0
        %1471 = vmatpush1.bf16.msra.mxu0 0
        %1472 = vmatprep.subr.bf16.mxu0 0
        %1473 = vmatpush1.bf16.msra.mxu0 0
        %1474 = vmatprep.subr.bf16.mxu0 0
        %1475 = vmatpush1.bf16.msra.mxu0 0
        %1476 = vmatprep.subr.bf16.mxu0 0
        %1477 = vmatpush1.bf16.msra.mxu0 0
        %1478 = vmatprep.subr.bf16.mxu0 0
        %1479 = vmatpush1.bf16.msra.mxu0 0
        %1480 = vmatprep.subr.bf16.mxu0 0
        %1481 = vmatpush1.bf16.msra.mxu0 0
        %1482 = vmatprep.subr.bf16.mxu0 0
        %1483 = vmatpush1.bf16.msra.mxu0 0
        %1484 = vmatprep.subr.bf16.mxu0 0
        %1485 = vmatpush1.bf16.msra.mxu0 0
        %1486 = vmatprep.subr.bf16.mxu0 0
        %1487 = vmatpush1.bf16.msra.mxu0 0
        %1488 = vmatprep.subr.bf16.mxu0 0
        %1489 = vmatpush1.bf16.msra.mxu0 0
        %1490 = vmatprep.subr.bf16.mxu0 0
        %1491 = vmatpush1.bf16.msra.mxu0 0
        %1492 = vmatprep.mubr.bf16.mxu0 0
        %1493 = vmatmul.mubr.bf16.gmra.mrb[0].mxu0 %v1402
        %v1494 = vpop.f32.mrb[0].mxu0
        %v1495 = vadd.f32 %v1373, %v1494
        %v1496 = vpop.f32.mrb[0].mxu0
        %v1497 = vadd.f32 %v1373, %v1496
        %v1498 = vpop.f32.mrb[0].mxu0
        %v1499 = vadd.f32 %v1378, %v1498
        %v1500 = vpop.f32.mrb[0].mxu0
        %v1501 = vadd.f32 %v1378, %v1500
        %1502 = vmatprep.mubr.bf16.mxu0 0
        %1503 = vmatmul.mubr.bf16.gmra.mrb[0].mxu0 %v1405
        %v1504 = vpop.f32.mrb[0].mxu0
        %v1505 = vadd.f32 %v1383, %v1504
        %v1506 = vpop.f32.mrb[0].mxu0
        %v1507 = vadd.f32 %v1383, %v1506
        %v1508 = vpop.f32.mrb[0].mxu0
        %v1509 = vadd.f32 %v1388, %v1508
        %v1510 = vpop.f32.mrb[0].mxu0
        %v1511 = vadd.f32 %v1388, %v1510
        %1512 = vdwg.mxu0
        %1513 = vmatprep.subr.bf16.mxu0 %v1335
        %1514 = vmatpush1.bf16.msra.mxu0 %v1334
        %1515 = vmatprep.subr.bf16.mxu0 %v1351
        %1516 = vmatpush1.bf16.msra.mxu0 %v1350
        %1517 = vmatprep.subr.bf16.mxu0 0
        %1518 = vmatpush1.bf16.msra.mxu0 0
        %1519 = vmatprep.subr.bf16.mxu0 0
        %1520 = vmatpush1.bf16.msra.mxu0 0
        %1521 = vmatprep.subr.bf16.mxu0 0
        %1522 = vmatpush1.bf16.msra.mxu0 0
        %1523 = vmatprep.subr.bf16.mxu0 0
        %1524 = vmatpush1.bf16.msra.mxu0 0
        %1525 = vmatprep.subr.bf16.mxu0 0
        %1526 = vmatpush1.bf16.msra.mxu0 0
        %1527 = vmatprep.subr.bf16.mxu0 0
        %1528 = vmatpush1.bf16.msra.mxu0 0
        %1529 = vmatprep.subr.bf16.mxu0 0
        %1530 = vmatpush1.bf16.msra.mxu0 0
        %1531 = vmatprep.subr.bf16.mxu0 0
        %1532 = vmatpush1.bf16.msra.mxu0 0
        %1533 = vmatprep.subr.bf16.mxu0 0
        %1534 = vmatpush1.bf16.msra.mxu0 0
        %1535 = vmatprep.subr.bf16.mxu0 0
        %1536 = vmatpush1.bf16.msra.mxu0 0
        %1537 = vmatprep.subr.bf16.mxu0 0
        %1538 = vmatpush1.bf16.msra.mxu0 0
        %1539 = vmatprep.subr.bf16.mxu0 0
        %1540 = vmatpush1.bf16.msra.mxu0 0
        %1541 = vmatprep.subr.bf16.mxu0 0
        %1542 = vmatpush1.bf16.msra.mxu0 0
        %1543 = vmatprep.subr.bf16.mxu0 0
        %1544 = vmatpush1.bf16.msra.mxu0 0
        %1545 = vmatprep.mubr.bf16.mxu0 0
        %1546 = vmatmul.mubr.bf16.gmra.mrb[0].mxu0 %v1402
        %v1547 = vpop.f32.mrb[0].mxu0
        %v1548 = vadd.f32 %v1373, %v1547
        %v1549 = vpop.f32.mrb[0].mxu0
        %v1550 = vadd.f32 %v1373, %v1549
        %v1551 = vpop.f32.mrb[0].mxu0
        %v1552 = vadd.f32 %v1378, %v1551
        %v1553 = vpop.f32.mrb[0].mxu0
        %v1554 = vadd.f32 %v1378, %v1553
        %1555 = vmatprep.mubr.bf16.mxu0 0
        %1556 = vmatmul.mubr.bf16.gmra.mrb[0].mxu0 %v1405
        %v1557 = vpop.f32.mrb[0].mxu0
        %v1558 = vadd.f32 %v1383, %v1557
        %v1559 = vpop.f32.mrb[0].mxu0
        %v1560 = vadd.f32 %v1383, %v1559
        %v1561 = vpop.f32.mrb[0].mxu0
        %v1562 = vadd.f32 %v1388, %v1561
        %v1563 = vpop.f32.mrb[0].mxu0
        %v1564 = vadd.f32 %v1388, %v1563
        %1565 = vdwg.mxu0
        %1566 = vmatprep.subr.bf16.mxu0 %v1337
        %1567 = vmatpush1.bf16.msra.mxu0 %v1336
        %1568 = vmatprep.subr.bf16.mxu0 %v1353
        %1569 = vmatpush1.bf16.msra.mxu0 %v1352
        %1570 = vmatprep.subr.bf16.mxu0 0
        %1571 = vmatpush1.bf16.msra.mxu0 0
        %1572 = vmatprep.subr.bf16.mxu0 0
        %1573 = vmatpush1.bf16.msra.mxu0 0
        %1574 = vmatprep.subr.bf16.mxu0 0
        %1575 = vmatpush1.bf16.msra.mxu0 0
        %1576 = vmatprep.subr.bf16.mxu0 0
        %1577 = vmatpush1.bf16.msra.mxu0 0
        %1578 = vmatprep.subr.bf16.mxu0 0
        %1579 = vmatpush1.bf16.msra.mxu0 0
        %1580 = vmatprep.subr.bf16.mxu0 0
        %1581 = vmatpush1.bf16.msra.mxu0 0
        %1582 = vmatprep.subr.bf16.mxu0 0
        %1583 = vmatpush1.bf16.msra.mxu0 0
        %1584 = vmatprep.subr.bf16.mxu0 0
        %1585 = vmatpush1.bf16.msra.mxu0 0
        %1586 = vmatprep.subr.bf16.mxu0 0
        %1587 = vmatpush1.bf16.msra.mxu0 0
        %1588 = vmatprep.subr.bf16.mxu0 0
        %1589 = vmatpush1.bf16.msra.mxu0 0
        %1590 = vmatprep.subr.bf16.mxu0 0
        %1591 = vmatpush1.bf16.msra.mxu0 0
        %1592 = vmatprep.subr.bf16.mxu0 0
        %1593 = vmatpush1.bf16.msra.mxu0 0
        %1594 = vmatprep.subr.bf16.mxu0 0
        %1595 = vmatpush1.bf16.msra.mxu0 0
        %1596 = vmatprep.subr.bf16.mxu0 0
        %1597 = vmatpush1.bf16.msra.mxu0 0
        %1598 = vmatprep.mubr.bf16.mxu0 0
        %1599 = vmatmul.mubr.bf16.gmra.mrb[0].mxu0 %v1402
        %v1600 = vpop.f32.mrb[0].mxu0
        %v1601 = vadd.f32 %v1373, %v1600
        %v1602 = vpop.f32.mrb[0].mxu0
        %v1603 = vadd.f32 %v1373, %v1602
        %v1604 = vpop.f32.mrb[0].mxu0
        %v1605 = vadd.f32 %v1378, %v1604
        %v1606 = vpop.f32.mrb[0].mxu0
        %v1607 = vadd.f32 %v1378, %v1606
        %1608 = vmatprep.mubr.bf16.mxu0 0
        %1609 = vmatmul.mubr.bf16.gmra.mrb[0].mxu0 %v1405
        %v1610 = vpop.f32.mrb[0].mxu0
        %v1611 = vadd.f32 %v1383, %v1610
        %v1612 = vpop.f32.mrb[0].mxu0
        %v1613 = vadd.f32 %v1383, %v1612
        %v1614 = vpop.f32.mrb[0].mxu0
        %v1615 = vadd.f32 %v1388, %v1614
        %v1616 = vpop.f32.mrb[0].mxu0
        %v1617 = vadd.f32 %v1388, %v1616
        %1618 = vdwg.mxu0
        %1619 = vmatprep.subr.bf16.mxu0 %v1339
        %1620 = vmatpush1.bf16.msra.mxu0 %v1338
        %1621 = vmatprep.subr.bf16.mxu0 %v1355
        %1622 = vmatpush1.bf16.msra.mxu0 %v1354
        %1623 = vmatprep.subr.bf16.mxu0 0
        %1624 = vmatpush1.bf16.msra.mxu0 0
        %1625 = vmatprep.subr.bf16.mxu0 0
        %1626 = vmatpush1.bf16.msra.mxu0 0
        %1627 = vmatprep.subr.bf16.mxu0 0
        %1628 = vmatpush1.bf16.msra.mxu0 0
        %1629 = vmatprep.subr.bf16.mxu0 0
        %1630 = vmatpush1.bf16.msra.mxu0 0
        %1631 = vmatprep.subr.bf16.mxu0 0
        %1632 = vmatpush1.bf16.msra.mxu0 0
        %1633 = vmatprep.subr.bf16.mxu0 0
        %1634 = vmatpush1.bf16.msra.mxu0 0
        %1635 = vmatprep.subr.bf16.mxu0 0
        %1636 = vmatpush1.bf16.msra.mxu0 0
        %1637 = vmatprep.subr.bf16.mxu0 0
        %1638 = vmatpush1.bf16.msra.mxu0 0
        %1639 = vmatprep.subr.bf16.mxu0 0
        %1640 = vmatpush1.bf16.msra.mxu0 0
        %1641 = vmatprep.subr.bf16.mxu0 0
        %1642 = vmatpush1.bf16.msra.mxu0 0
        %1643 = vmatprep.subr.bf16.mxu0 0
        %1644 = vmatpush1.bf16.msra.mxu0 0
        %1645 = vmatprep.subr.bf16.mxu0 0
        %1646 = vmatpush1.bf16.msra.mxu0 0
        %1647 = vmatprep.subr.bf16.mxu0 0
        %1648 = vmatpush1.bf16.msra.mxu0 0
        %1649 = vmatprep.subr.bf16.mxu0 0
        %1650 = vmatpush1.bf16.msra.mxu0 0
        %1651 = vmatprep.mubr.bf16.mxu0 0
        %1652 = vmatmul.mubr.bf16.gmra.mrb[0].mxu0 %v1402
        %v1653 = vpop.f32.mrb[0].mxu0
        %v1654 = vadd.f32 %v1373, %v1653
        %v1655 = vpop.f32.mrb[0].mxu0
        %v1656 = vadd.f32 %v1373, %v1655
        %v1657 = vpop.f32.mrb[0].mxu0
        %v1658 = vadd.f32 %v1378, %v1657
        %v1659 = vpop.f32.mrb[0].mxu0
        %v1660 = vadd.f32 %v1378, %v1659
        %1661 = vmatprep.mubr.bf16.mxu0 0
        %1662 = vmatmul.mubr.bf16.gmra.mrb[0].mxu0 %v1405
        %v1663 = vpop.f32.mrb[0].mxu0
        %v1664 = vadd.f32 %v1383, %v1663
        %v1665 = vpop.f32.mrb[0].mxu0
        %v1666 = vadd.f32 %v1383, %v1665
        %v1667 = vpop.f32.mrb[0].mxu0
        %v1668 = vadd.f32 %v1388, %v1667
        %v1669 = vpop.f32.mrb[0].mxu0
        %v1670 = vadd.f32 %v1388, %v1669
        %1671 = vdwg.mxu0
        %1672 = vmatprep.subr.bf16.mxu0 %v1341
        %1673 = vmatpush1.bf16.msra.mxu0 %v1340
        %1674 = vmatprep.subr.bf16.mxu0 %v1357
        %1675 = vmatpush1.bf16.msra.mxu0 %v1356
        %1676 = vmatprep.subr.bf16.mxu0 0
        %1677 = vmatpush1.bf16.msra.mxu0 0
        %1678 = vmatprep.subr.bf16.mxu0 0
        %1679 = vmatpush1.bf16.msra.mxu0 0
        %1680 = vmatprep.subr.bf16.mxu0 0
        %1681 = vmatpush1.bf16.msra.mxu0 0
        %1682 = vmatprep.subr.bf16.mxu0 0
        %1683 = vmatpush1.bf16.msra.mxu0 0
        %1684 = vmatprep.subr.bf16.mxu0 0
        %1685 = vmatpush1.bf16.msra.mxu0 0
        %1686 = vmatprep.subr.bf16.mxu0 0
        %1687 = vmatpush1.bf16.msra.mxu0 0
        %1688 = vmatprep.subr.bf16.mxu0 0
        %1689 = vmatpush1.bf16.msra.mxu0 0
        %1690 = vmatprep.subr.bf16.mxu0 0
        %1691 = vmatpush1.bf16.msra.mxu0 0
        %1692 = vmatprep.subr.bf16.mxu0 0
        %1693 = vmatpush1.bf16.msra.mxu0 0
        %1694 = vmatprep.subr.bf16.mxu0 0
        %1695 = vmatpush1.bf16.msra.mxu0 0
        %1696 = vmatprep.subr.bf16.mxu0 0
        %1697 = vmatpush1.bf16.msra.mxu0 0
        %1698 = vmatprep.subr.bf16.mxu0 0
        %1699 = vmatpush1.bf16.msra.mxu0 0
        %1700 = vmatprep.subr.bf16.mxu0 0
        %1701 = vmatpush1.bf16.msra.mxu0 0
        %1702 = vmatprep.subr.bf16.mxu0 0
        %1703 = vmatpush1.bf16.msra.mxu0 0
        %1704 = vmatprep.mubr.bf16.mxu0 0
        %1705 = vmatmul.mubr.bf16.gmra.mrb[0].mxu0 %v1402
        %v1706 = vpop.f32.mrb[0].mxu0
        %v1707 = vadd.f32 %v1373, %v1706
        %v1708 = vpop.f32.mrb[0].mxu0
        %v1709 = vadd.f32 %v1373, %v1708
        %v1710 = vpop.f32.mrb[0].mxu0
        %v1711 = vadd.f32 %v1378, %v1710
        %v1712 = vpop.f32.mrb[0].mxu0
        %v1713 = vadd.f32 %v1378, %v1712
        %1714 = vmatprep.mubr.bf16.mxu0 0
        %1715 = vmatmul.mubr.bf16.gmra.mrb[0].mxu0 %v1405
        %v1716 = vpop.f32.mrb[0].mxu0
        %v1717 = vadd.f32 %v1383, %v1716
        %v1718 = vpop.f32.mrb[0].mxu0
        %v1719 = vadd.f32 %v1383, %v1718
        %v1720 = vpop.f32.mrb[0].mxu0
        %v1721 = vadd.f32 %v1388, %v1720
        %v1722 = vpop.f32.mrb[0].mxu0
        %v1723 = vadd.f32 %v1388, %v1722
        %1724 = vdwg.mxu0
        %1725 = vmatprep.subr.bf16.mxu0 %v1343
        %1726 = vmatpush1.bf16.msra.mxu0 %v1342
        %1727 = vmatprep.subr.bf16.mxu0 %v1359
        %1728 = vmatpush1.bf16.msra.mxu0 %v1358
        %1729 = vmatprep.subr.bf16.mxu0 0
        %1730 = vmatpush1.bf16.msra.mxu0 0
        %1731 = vmatprep.subr.bf16.mxu0 0
        %1732 = vmatpush1.bf16.msra.mxu0 0
        %1733 = vmatprep.subr.bf16.mxu0 0
        %1734 = vmatpush1.bf16.msra.mxu0 0
        %1735 = vmatprep.subr.bf16.mxu0 0
        %1736 = vmatpush1.bf16.msra.mxu0 0
        %1737 = vmatprep.subr.bf16.mxu0 0
        %1738 = vmatpush1.bf16.msra.mxu0 0
        %1739 = vmatprep.subr.bf16.mxu0 0
        %1740 = vmatpush1.bf16.msra.mxu0 0
        %1741 = vmatprep.subr.bf16.mxu0 0
        %1742 = vmatpush1.bf16.msra.mxu0 0
        %1743 = vmatprep.subr.bf16.mxu0 0
        %1744 = vmatpush1.bf16.msra.mxu0 0
        %1745 = vmatprep.subr.bf16.mxu0 0
        %1746 = vmatpush1.bf16.msra.mxu0 0
        %1747 = vmatprep.subr.bf16.mxu0 0
        %1748 = vmatpush1.bf16.msra.mxu0 0
        %1749 = vmatprep.subr.bf16.mxu0 0
        %1750 = vmatpush1.bf16.msra.mxu0 0
        %1751 = vmatprep.subr.bf16.mxu0 0
        %1752 = vmatpush1.bf16.msra.mxu0 0
        %1753 = vmatprep.subr.bf16.mxu0 0
        %1754 = vmatpush1.bf16.msra.mxu0 0
        %1755 = vmatprep.subr.bf16.mxu0 0
        %1756 = vmatpush1.bf16.msra.mxu0 0
        %1757 = vmatprep.mubr.bf16.mxu0 0
        %1758 = vmatmul.mubr.bf16.gmra.mrb[0].mxu0 %v1402
        %v1759 = vpop.f32.mrb[0].mxu0
        %v1760 = vadd.f32 %v1373, %v1759
        %v1761 = vpop.f32.mrb[0].mxu0
        %v1762 = vadd.f32 %v1373, %v1761
        %v1763 = vpop.f32.mrb[0].mxu0
        %v1764 = vadd.f32 %v1378, %v1763
        %v1765 = vpop.f32.mrb[0].mxu0
        %v1766 = vadd.f32 %v1378, %v1765
        %1767 = vmatprep.mubr.bf16.mxu0 0
        %1768 = vmatmul.mubr.bf16.gmra.mrb[0].mxu0 %v1405
        %v1769 = vpop.f32.mrb[0].mxu0
        %v1770 = vadd.f32 %v1383, %v1769
        %v1771 = vpop.f32.mrb[0].mxu0
        %v1772 = vadd.f32 %v1383, %v1771
        %v1773 = vpop.f32.mrb[0].mxu0
        %v1774 = vadd.f32 %v1388, %v1773
        %v1775 = vpop.f32.mrb[0].mxu0
        %v1776 = vadd.f32 %v1388, %v1775
        %1777 = vdwg.mxu0
        %1778 = vmatprep.subr.bf16.mxu0 %v1345
        %1779 = vmatpush1.bf16.msra.mxu0 %v1344
        %1780 = vmatprep.subr.bf16.mxu0 %v1361
        %1781 = vmatpush1.bf16.msra.mxu0 %v1360
        %1782 = vmatprep.subr.bf16.mxu0 0
        %1783 = vmatpush1.bf16.msra.mxu0 0
        %1784 = vmatprep.subr.bf16.mxu0 0
        %1785 = vmatpush1.bf16.msra.mxu0 0
        %1786 = vmatprep.subr.bf16.mxu0 0
        %1787 = vmatpush1.bf16.msra.mxu0 0
        %1788 = vmatprep.subr.bf16.mxu0 0
        %1789 = vmatpush1.bf16.msra.mxu0 0
        %1790 = vmatprep.subr.bf16.mxu0 0
        %1791 = vmatpush1.bf16.msra.mxu0 0
        %1792 = vmatprep.subr.bf16.mxu0 0
        %1793 = vmatpush1.bf16.msra.mxu0 0
        %1794 = vmatprep.subr.bf16.mxu0 0
        %1795 = vmatpush1.bf16.msra.mxu0 0
        %1796 = vmatprep.subr.bf16.mxu0 0
        %1797 = vmatpush1.bf16.msra.mxu0 0
        %1798 = vmatprep.subr.bf16.mxu0 0
        %1799 = vmatpush1.bf16.msra.mxu0 0
        %1800 = vmatprep.subr.bf16.mxu0 0
        %1801 = vmatpush1.bf16.msra.mxu0 0
        %1802 = vmatprep.subr.bf16.mxu0 0
        %1803 = vmatpush1.bf16.msra.mxu0 0
        %1804 = vmatprep.subr.bf16.mxu0 0
        %1805 = vmatpush1.bf16.msra.mxu0 0
        %1806 = vmatprep.subr.bf16.mxu0 0
        %1807 = vmatpush1.bf16.msra.mxu0 0
        %1808 = vmatprep.subr.bf16.mxu0 0
        %1809 = vmatpush1.bf16.msra.mxu0 0
        %1810 = vmatprep.mubr.bf16.mxu0 0
        %1811 = vmatmul.mubr.bf16.gmra.mrb[0].mxu0 %v1402
        %v1812 = vpop.f32.mrb[0].mxu0
        %v1813 = vadd.f32 %v1373, %v1812
        %v1814 = vpop.f32.mrb[0].mxu0
        %v1815 = vadd.f32 %v1373, %v1814
        %v1816 = vpop.f32.mrb[0].mxu0
        %v1817 = vadd.f32 %v1378, %v1816
        %v1818 = vpop.f32.mrb[0].mxu0
        %v1819 = vadd.f32 %v1378, %v1818
        %1820 = vmatprep.mubr.bf16.mxu0 0
        %1821 = vmatmul.mubr.bf16.gmra.mrb[0].mxu0 %v1405
        %v1822 = vpop.f32.mrb[0].mxu0
        %v1823 = vadd.f32 %v1383, %v1822
        %v1824 = vpop.f32.mrb[0].mxu0
        %v1825 = vadd.f32 %v1383, %v1824
        %v1826 = vpop.f32.mrb[0].mxu0
        %v1827 = vadd.f32 %v1388, %v1826
        %v1828 = vpop.f32.mrb[0].mxu0
        %v1829 = vadd.f32 %v1388, %v1828
        %1830 = vdwg.mxu0
        %v1831 = vmax.f32 %v1442, 0.0
        %v1832 = vmax.f32 %v1444, 0.0
        %v1833 = vmax.f32 %v1495, 0.0
        %v1834 = vmax.f32 %v1497, 0.0
        %v1835 = vmax.f32 %v1548, 0.0
        %v1836 = vmax.f32 %v1550, 0.0
        %v1837 = vmax.f32 %v1601, 0.0
        %v1838 = vmax.f32 %v1603, 0.0
        %v1839 = vmax.f32 %v1654, 0.0
        %v1840 = vmax.f32 %v1656, 0.0
        %v1841 = vmax.f32 %v1707, 0.0
        %v1842 = vmax.f32 %v1709, 0.0
        %v1843 = vmax.f32 %v1760, 0.0
        %v1844 = vmax.f32 %v1762, 0.0
        %v1845 = vmax.f32 %v1813, 0.0
        %v1846 = vmax.f32 %v1815, 0.0
        %v1847 = vmax.f32 %v1446, 0.0
        %v1848 = vmax.f32 %v1448, 0.0
        %v1849 = vmax.f32 %v1499, 0.0
        %v1850 = vmax.f32 %v1501, 0.0
        %v1851 = vmax.f32 %v1552, 0.0
        %v1852 = vmax.f32 %v1554, 0.0
        %v1853 = vmax.f32 %v1605, 0.0
        %v1854 = vmax.f32 %v1607, 0.0
        %v1855 = vmax.f32 %v1658, 0.0
        %v1856 = vmax.f32 %v1660, 0.0
        %v1857 = vmax.f32 %v1711, 0.0
        %v1858 = vmax.f32 %v1713, 0.0
        %v1859 = vmax.f32 %v1764, 0.0
        %v1860 = vmax.f32 %v1766, 0.0
        %v1861 = vmax.f32 %v1817, 0.0
        %v1862 = vmax.f32 %v1819, 0.0
        %v1863 = vmax.f32 %v1452, 0.0
        %v1864 = vmax.f32 %v1454, 0.0
        %v1865 = vmax.f32 %v1505, 0.0
        %v1866 = vmax.f32 %v1507, 0.0
        %v1867 = vmax.f32 %v1558, 0.0
        %v1868 = vmax.f32 %v1560, 0.0
        %v1869 = vmax.f32 %v1611, 0.0
        %v1870 = vmax.f32 %v1613, 0.0
        %v1871 = vmax.f32 %v1664, 0.0
        %v1872 = vmax.f32 %v1666, 0.0
        %v1873 = vmax.f32 %v1717, 0.0
        %v1874 = vmax.f32 %v1719, 0.0
        %v1875 = vmax.f32 %v1770, 0.0
        %v1876 = vmax.f32 %v1772, 0.0
        %v1877 = vmax.f32 %v1823, 0.0
        %v1878 = vmax.f32 %v1825, 0.0
        %v1879 = vmax.f32 %v1456, 0.0
        %v1880 = vmax.f32 %v1458, 0.0
        %v1881 = vmax.f32 %v1509, 0.0
        %v1882 = vmax.f32 %v1511, 0.0
        %v1883 = vmax.f32 %v1562, 0.0
        %v1884 = vmax.f32 %v1564, 0.0
        %v1885 = vmax.f32 %v1615, 0.0
        %v1886 = vmax.f32 %v1617, 0.0
        %v1887 = vmax.f32 %v1668, 0.0
        %v1888 = vmax.f32 %v1670, 0.0
        %v1889 = vmax.f32 %v1721, 0.0
        %v1890 = vmax.f32 %v1723, 0.0
        %v1891 = vmax.f32 %v1774, 0.0
        %v1892 = vmax.f32 %v1776, 0.0
        %v1893 = vmax.f32 %v1827, 0.0
        %v1894 = vmax.f32 %v1829, 0.0
        %v1895 = vpack.c.bf16 %v1847, %v1831
        %v1896 = vpack.c.bf16 %v1848, %v1832
        %v1897 = vpack.c.bf16 %v1849, %v1833
        %v1898 = vpack.c.bf16 %v1850, %v1834
        %v1899 = vpack.c.bf16 %v1851, %v1835
        %v1900 = vpack.c.bf16 %v1852, %v1836
        %v1901 = vpack.c.bf16 %v1853, %v1837
        %v1902 = vpack.c.bf16 %v1854, %v1838
        %v1903 = vpack.c.bf16 %v1855, %v1839
        %v1904 = vpack.c.bf16 %v1856, %v1840
        %v1905 = vpack.c.bf16 %v1857, %v1841
        %v1906 = vpack.c.bf16 %v1858, %v1842
        %v1907 = vpack.c.bf16 %v1859, %v1843
        %v1908 = vpack.c.bf16 %v1860, %v1844
        %v1909 = vpack.c.bf16 %v1861, %v1845
        %v1910 = vpack.c.bf16 %v1862, %v1846
        %v1911 = vpack.c.bf16 %v1879, %v1863
        %v1912 = vpack.c.bf16 %v1880, %v1864
        %v1913 = vpack.c.bf16 %v1881, %v1865
        %v1914 = vpack.c.bf16 %v1882, %v1866
        %v1915 = vpack.c.bf16 %v1883, %v1867
        %v1916 = vpack.c.bf16 %v1884, %v1868
        %v1917 = vpack.c.bf16 %v1885, %v1869
        %v1918 = vpack.c.bf16 %v1886, %v1870
        %v1919 = vpack.c.bf16 %v1887, %v1871
        %v1920 = vpack.c.bf16 %v1888, %v1872
        %v1921 = vpack.c.bf16 %v1889, %v1873
        %v1922 = vpack.c.bf16 %v1890, %v1874
        %v1923 = vpack.c.bf16 %v1891, %v1875
        %v1924 = vpack.c.bf16 %v1892, %v1876
        %v1925 = vpack.c.bf16 %v1893, %v1877
        %v1926 = vpack.c.bf16 %v1894, %v1878
        %v1927 = vld [vmem:[%s7] sm:$0xf]
        %v1928 = vld [vmem:[%s7 + $0x4] sm:$0xf]
        %v1929 = vld [vmem:[%s8] sm:$0xff]
        %v1930 = vld [vmem:[%s8 + $0x8] sm:$0xff]
        %1932 = vset.pattern.permute.xlu0 0
        %1933 = vperm.xlu0 %1932, %v1929
        %v1934 = vpop.permute.xlu0 %1933
        %1937 = vset.pattern.permute.xlu0 0
        %1938 = vperm.xlu0 %1937, %v1930
        %v1939 = vpop.permute.xlu0 %1938
        %v1943 = vunpack.c.l.b16 %v1927
        %v1944 = vunpack.c.l.b16 %v1928
        %v1945 = vpack.c.b16 %v1944, %v1943
        %v1947 = vsel %vm1400, %v1945, 0
        %1949 = vmatprep.subr.bf16.mxu0 %v1896
        %1950 = vmatpush1.bf16.msra.mxu0 %v1895
        %1951 = vmatprep.subr.bf16.mxu0 %v1912
        %1952 = vmatpush1.bf16.msra.mxu0 %v1911
        %1953 = vmatprep.subr.bf16.mxu0 0
        %1954 = vmatpush1.bf16.msra.mxu0 0
        %1955 = vmatprep.subr.bf16.mxu0 0
        %1956 = vmatpush1.bf16.msra.mxu0 0
        %1957 = vmatprep.subr.bf16.mxu0 0
        %1958 = vmatpush1.bf16.msra.mxu0 0
        %1959 = vmatprep.subr.bf16.mxu0 0
        %1960 = vmatpush1.bf16.msra.mxu0 0
        %1961 = vmatprep.subr.bf16.mxu0 0
        %1962 = vmatpush1.bf16.msra.mxu0 0
        %1963 = vmatprep.subr.bf16.mxu0 0
        %1964 = vmatpush1.bf16.msra.mxu0 0
        %1965 = vmatprep.subr.bf16.mxu0 0
        %1966 = vmatpush1.bf16.msra.mxu0 0
        %1967 = vmatprep.subr.bf16.mxu0 0
        %1968 = vmatpush1.bf16.msra.mxu0 0
        %1969 = vmatprep.subr.bf16.mxu0 0
        %1970 = vmatpush1.bf16.msra.mxu0 0
        %1971 = vmatprep.subr.bf16.mxu0 0
        %1972 = vmatpush1.bf16.msra.mxu0 0
        %1973 = vmatprep.subr.bf16.mxu0 0
        %1974 = vmatpush1.bf16.msra.mxu0 0
        %1975 = vmatprep.subr.bf16.mxu0 0
        %1976 = vmatpush1.bf16.msra.mxu0 0
        %1977 = vmatprep.subr.bf16.mxu0 0
        %1978 = vmatpush1.bf16.msra.mxu0 0
        %1979 = vmatprep.subr.bf16.mxu0 0
        %1980 = vmatpush1.bf16.msra.mxu0 0
        %1981 = vmatprep.mubr.bf16.mxu0 0
        %1982 = vmatmul.mubr.bf16.gmra.mrb[0].mxu0 %v1947
        %v1983 = vpop.f32.mrb[0].mxu0
        %v1984 = vadd.f32 %v1934, %v1983
        %v1985 = vpop.f32.mrb[0].mxu0
        %v1986 = vadd.f32 %v1934, %v1985
        %v1987 = vpop.f32.mrb[0].mxu0
        %v1988 = vadd.f32 %v1939, %v1987
        %v1989 = vpop.f32.mrb[0].mxu0
        %v1990 = vadd.f32 %v1939, %v1989
        %1991 = vdwg.mxu0
        %1992 = vmatprep.subr.bf16.mxu0 %v1898
        %1993 = vmatpush1.bf16.msra.mxu0 %v1897
        %1994 = vmatprep.subr.bf16.mxu0 %v1914
        %1995 = vmatpush1.bf16.msra.mxu0 %v1913
        %1996 = vmatprep.subr.bf16.mxu0 0
        %1997 = vmatpush1.bf16.msra.mxu0 0
        %1998 = vmatprep.subr.bf16.mxu0 0
        %1999 = vmatpush1.bf16.msra.mxu0 0
        %2000 = vmatprep.subr.bf16.mxu0 0
        %2001 = vmatpush1.bf16.msra.mxu0 0
        %2002 = vmatprep.subr.bf16.mxu0 0
        %2003 = vmatpush1.bf16.msra.mxu0 0
        %2004 = vmatprep.subr.bf16.mxu0 0
        %2005 = vmatpush1.bf16.msra.mxu0 0
        %2006 = vmatprep.subr.bf16.mxu0 0
        %2007 = vmatpush1.bf16.msra.mxu0 0
        %2008 = vmatprep.subr.bf16.mxu0 0
        %2009 = vmatpush1.bf16.msra.mxu0 0
        %2010 = vmatprep.subr.bf16.mxu0 0
        %2011 = vmatpush1.bf16.msra.mxu0 0
        %2012 = vmatprep.subr.bf16.mxu0 0
        %2013 = vmatpush1.bf16.msra.mxu0 0
        %2014 = vmatprep.subr.bf16.mxu0 0
        %2015 = vmatpush1.bf16.msra.mxu0 0
        %2016 = vmatprep.subr.bf16.mxu0 0
        %2017 = vmatpush1.bf16.msra.mxu0 0
        %2018 = vmatprep.subr.bf16.mxu0 0
        %2019 = vmatpush1.bf16.msra.mxu0 0
        %2020 = vmatprep.subr.bf16.mxu0 0
        %2021 = vmatpush1.bf16.msra.mxu0 0
        %2022 = vmatprep.subr.bf16.mxu0 0
        %2023 = vmatpush1.bf16.msra.mxu0 0
        %2024 = vmatprep.mubr.bf16.mxu0 0
        %2025 = vmatmul.mubr.bf16.gmra.mrb[0].mxu0 %v1947
        %v2026 = vpop.f32.mrb[0].mxu0
        %v2027 = vadd.f32 %v1934, %v2026
        %v2028 = vpop.f32.mrb[0].mxu0
        %v2029 = vadd.f32 %v1934, %v2028
        %v2030 = vpop.f32.mrb[0].mxu0
        %v2031 = vadd.f32 %v1939, %v2030
        %v2032 = vpop.f32.mrb[0].mxu0
        %v2033 = vadd.f32 %v1939, %v2032
        %2034 = vdwg.mxu0
        %2035 = vmatprep.subr.bf16.mxu0 %v1900
        %2036 = vmatpush1.bf16.msra.mxu0 %v1899
        %2037 = vmatprep.subr.bf16.mxu0 %v1916
        %2038 = vmatpush1.bf16.msra.mxu0 %v1915
        %2039 = vmatprep.subr.bf16.mxu0 0
        %2040 = vmatpush1.bf16.msra.mxu0 0
        %2041 = vmatprep.subr.bf16.mxu0 0
        %2042 = vmatpush1.bf16.msra.mxu0 0
        %2043 = vmatprep.subr.bf16.mxu0 0
        %2044 = vmatpush1.bf16.msra.mxu0 0
        %2045 = vmatprep.subr.bf16.mxu0 0
        %2046 = vmatpush1.bf16.msra.mxu0 0
        %2047 = vmatprep.subr.bf16.mxu0 0
        %2048 = vmatpush1.bf16.msra.mxu0 0
        %2049 = vmatprep.subr.bf16.mxu0 0
        %2050 = vmatpush1.bf16.msra.mxu0 0
        %2051 = vmatprep.subr.bf16.mxu0 0
        %2052 = vmatpush1.bf16.msra.mxu0 0
        %2053 = vmatprep.subr.bf16.mxu0 0
        %2054 = vmatpush1.bf16.msra.mxu0 0
        %2055 = vmatprep.subr.bf16.mxu0 0
        %2056 = vmatpush1.bf16.msra.mxu0 0
        %2057 = vmatprep.subr.bf16.mxu0 0
        %2058 = vmatpush1.bf16.msra.mxu0 0
        %2059 = vmatprep.subr.bf16.mxu0 0
        %2060 = vmatpush1.bf16.msra.mxu0 0
        %2061 = vmatprep.subr.bf16.mxu0 0
        %2062 = vmatpush1.bf16.msra.mxu0 0
        %2063 = vmatprep.subr.bf16.mxu0 0
        %2064 = vmatpush1.bf16.msra.mxu0 0
        %2065 = vmatprep.subr.bf16.mxu0 0
        %2066 = vmatpush1.bf16.msra.mxu0 0
        %2067 = vmatprep.mubr.bf16.mxu0 0
        %2068 = vmatmul.mubr.bf16.gmra.mrb[0].mxu0 %v1947
        %v2069 = vpop.f32.mrb[0].mxu0
        %v2070 = vadd.f32 %v1934, %v2069
        %v2071 = vpop.f32.mrb[0].mxu0
        %v2072 = vadd.f32 %v1934, %v2071
        %v2073 = vpop.f32.mrb[0].mxu0
        %v2074 = vadd.f32 %v1939, %v2073
        %v2075 = vpop.f32.mrb[0].mxu0
        %v2076 = vadd.f32 %v1939, %v2075
        %2077 = vdwg.mxu0
        %2078 = vmatprep.subr.bf16.mxu0 %v1902
        %2079 = vmatpush1.bf16.msra.mxu0 %v1901
        %2080 = vmatprep.subr.bf16.mxu0 %v1918
        %2081 = vmatpush1.bf16.msra.mxu0 %v1917
        %2082 = vmatprep.subr.bf16.mxu0 0
        %2083 = vmatpush1.bf16.msra.mxu0 0
        %2084 = vmatprep.subr.bf16.mxu0 0
        %2085 = vmatpush1.bf16.msra.mxu0 0
        %2086 = vmatprep.subr.bf16.mxu0 0
        %2087 = vmatpush1.bf16.msra.mxu0 0
        %2088 = vmatprep.subr.bf16.mxu0 0
        %2089 = vmatpush1.bf16.msra.mxu0 0
        %2090 = vmatprep.subr.bf16.mxu0 0
        %2091 = vmatpush1.bf16.msra.mxu0 0
        %2092 = vmatprep.subr.bf16.mxu0 0
        %2093 = vmatpush1.bf16.msra.mxu0 0
        %2094 = vmatprep.subr.bf16.mxu0 0
        %2095 = vmatpush1.bf16.msra.mxu0 0
        %2096 = vmatprep.subr.bf16.mxu0 0
        %2097 = vmatpush1.bf16.msra.mxu0 0
        %2098 = vmatprep.subr.bf16.mxu0 0
        %2099 = vmatpush1.bf16.msra.mxu0 0
        %2100 = vmatprep.subr.bf16.mxu0 0
        %2101 = vmatpush1.bf16.msra.mxu0 0
        %2102 = vmatprep.subr.bf16.mxu0 0
        %2103 = vmatpush1.bf16.msra.mxu0 0
        %2104 = vmatprep.subr.bf16.mxu0 0
        %2105 = vmatpush1.bf16.msra.mxu0 0
        %2106 = vmatprep.subr.bf16.mxu0 0
        %2107 = vmatpush1.bf16.msra.mxu0 0
        %2108 = vmatprep.subr.bf16.mxu0 0
        %2109 = vmatpush1.bf16.msra.mxu0 0
        %2110 = vmatprep.mubr.bf16.mxu0 0
        %2111 = vmatmul.mubr.bf16.gmra.mrb[0].mxu0 %v1947
        %v2112 = vpop.f32.mrb[0].mxu0
        %v2113 = vadd.f32 %v1934, %v2112
        %v2114 = vpop.f32.mrb[0].mxu0
        %v2115 = vadd.f32 %v1934, %v2114
        %v2116 = vpop.f32.mrb[0].mxu0
        %v2117 = vadd.f32 %v1939, %v2116
        %v2118 = vpop.f32.mrb[0].mxu0
        %v2119 = vadd.f32 %v1939, %v2118
        %2120 = vdwg.mxu0
        %2121 = vmatprep.subr.bf16.mxu0 %v1904
        %2122 = vmatpush1.bf16.msra.mxu0 %v1903
        %2123 = vmatprep.subr.bf16.mxu0 %v1920
        %2124 = vmatpush1.bf16.msra.mxu0 %v1919
        %2125 = vmatprep.subr.bf16.mxu0 0
        %2126 = vmatpush1.bf16.msra.mxu0 0
        %2127 = vmatprep.subr.bf16.mxu0 0
        %2128 = vmatpush1.bf16.msra.mxu0 0
        %2129 = vmatprep.subr.bf16.mxu0 0
        %2130 = vmatpush1.bf16.msra.mxu0 0
        %2131 = vmatprep.subr.bf16.mxu0 0
        %2132 = vmatpush1.bf16.msra.mxu0 0
        %2133 = vmatprep.subr.bf16.mxu0 0
        %2134 = vmatpush1.bf16.msra.mxu0 0
        %2135 = vmatprep.subr.bf16.mxu0 0
        %2136 = vmatpush1.bf16.msra.mxu0 0
        %2137 = vmatprep.subr.bf16.mxu0 0
        %2138 = vmatpush1.bf16.msra.mxu0 0
        %2139 = vmatprep.subr.bf16.mxu0 0
        %2140 = vmatpush1.bf16.msra.mxu0 0
        %2141 = vmatprep.subr.bf16.mxu0 0
        %2142 = vmatpush1.bf16.msra.mxu0 0
        %2143 = vmatprep.subr.bf16.mxu0 0
        %2144 = vmatpush1.bf16.msra.mxu0 0
        %2145 = vmatprep.subr.bf16.mxu0 0
        %2146 = vmatpush1.bf16.msra.mxu0 0
        %2147 = vmatprep.subr.bf16.mxu0 0
        %2148 = vmatpush1.bf16.msra.mxu0 0
        %2149 = vmatprep.subr.bf16.mxu0 0
        %2150 = vmatpush1.bf16.msra.mxu0 0
        %2151 = vmatprep.subr.bf16.mxu0 0
        %2152 = vmatpush1.bf16.msra.mxu0 0
        %2153 = vmatprep.mubr.bf16.mxu0 0
        %2154 = vmatmul.mubr.bf16.gmra.mrb[0].mxu0 %v1947
        %v2155 = vpop.f32.mrb[0].mxu0
        %v2156 = vadd.f32 %v1934, %v2155
        %v2157 = vpop.f32.mrb[0].mxu0
        %v2158 = vadd.f32 %v1934, %v2157
        %v2159 = vpop.f32.mrb[0].mxu0
        %v2160 = vadd.f32 %v1939, %v2159
        %v2161 = vpop.f32.mrb[0].mxu0
        %v2162 = vadd.f32 %v1939, %v2161
        %2163 = vdwg.mxu0
        %2164 = vmatprep.subr.bf16.mxu0 %v1906
        %2165 = vmatpush1.bf16.msra.mxu0 %v1905
        %2166 = vmatprep.subr.bf16.mxu0 %v1922
        %2167 = vmatpush1.bf16.msra.mxu0 %v1921
        %2168 = vmatprep.subr.bf16.mxu0 0
        %2169 = vmatpush1.bf16.msra.mxu0 0
        %2170 = vmatprep.subr.bf16.mxu0 0
        %2171 = vmatpush1.bf16.msra.mxu0 0
        %2172 = vmatprep.subr.bf16.mxu0 0
        %2173 = vmatpush1.bf16.msra.mxu0 0
        %2174 = vmatprep.subr.bf16.mxu0 0
        %2175 = vmatpush1.bf16.msra.mxu0 0
        %2176 = vmatprep.subr.bf16.mxu0 0
        %2177 = vmatpush1.bf16.msra.mxu0 0
        %2178 = vmatprep.subr.bf16.mxu0 0
        %2179 = vmatpush1.bf16.msra.mxu0 0
        %2180 = vmatprep.subr.bf16.mxu0 0
        %2181 = vmatpush1.bf16.msra.mxu0 0
        %2182 = vmatprep.subr.bf16.mxu0 0
        %2183 = vmatpush1.bf16.msra.mxu0 0
        %2184 = vmatprep.subr.bf16.mxu0 0
        %2185 = vmatpush1.bf16.msra.mxu0 0
        %2186 = vmatprep.subr.bf16.mxu0 0
        %2187 = vmatpush1.bf16.msra.mxu0 0
        %2188 = vmatprep.subr.bf16.mxu0 0
        %2189 = vmatpush1.bf16.msra.mxu0 0
        %2190 = vmatprep.subr.bf16.mxu0 0
        %2191 = vmatpush1.bf16.msra.mxu0 0
        %2192 = vmatprep.subr.bf16.mxu0 0
        %2193 = vmatpush1.bf16.msra.mxu0 0
        %2194 = vmatprep.subr.bf16.mxu0 0
        %2195 = vmatpush1.bf16.msra.mxu0 0
        %2196 = vmatprep.mubr.bf16.mxu0 0
        %2197 = vmatmul.mubr.bf16.gmra.mrb[0].mxu0 %v1947
        %v2198 = vpop.f32.mrb[0].mxu0
        %v2199 = vadd.f32 %v1934, %v2198
        %v2200 = vpop.f32.mrb[0].mxu0
        %v2201 = vadd.f32 %v1934, %v2200
        %v2202 = vpop.f32.mrb[0].mxu0
        %v2203 = vadd.f32 %v1939, %v2202
        %v2204 = vpop.f32.mrb[0].mxu0
        %v2205 = vadd.f32 %v1939, %v2204
        %2206 = vdwg.mxu0
        %2207 = vmatprep.subr.bf16.mxu0 %v1908
        %2208 = vmatpush1.bf16.msra.mxu0 %v1907
        %2209 = vmatprep.subr.bf16.mxu0 %v1924
        %2210 = vmatpush1.bf16.msra.mxu0 %v1923
        %2211 = vmatprep.subr.bf16.mxu0 0
        %2212 = vmatpush1.bf16.msra.mxu0 0
        %2213 = vmatprep.subr.bf16.mxu0 0
        %2214 = vmatpush1.bf16.msra.mxu0 0
        %2215 = vmatprep.subr.bf16.mxu0 0
        %2216 = vmatpush1.bf16.msra.mxu0 0
        %2217 = vmatprep.subr.bf16.mxu0 0
        %2218 = vmatpush1.bf16.msra.mxu0 0
        %2219 = vmatprep.subr.bf16.mxu0 0
        %2220 = vmatpush1.bf16.msra.mxu0 0
        %2221 = vmatprep.subr.bf16.mxu0 0
        %2222 = vmatpush1.bf16.msra.mxu0 0
        %2223 = vmatprep.subr.bf16.mxu0 0
        %2224 = vmatpush1.bf16.msra.mxu0 0
        %2225 = vmatprep.subr.bf16.mxu0 0
        %2226 = vmatpush1.bf16.msra.mxu0 0
        %2227 = vmatprep.subr.bf16.mxu0 0
        %2228 = vmatpush1.bf16.msra.mxu0 0
        %2229 = vmatprep.subr.bf16.mxu0 0
        %2230 = vmatpush1.bf16.msra.mxu0 0
        %2231 = vmatprep.subr.bf16.mxu0 0
        %2232 = vmatpush1.bf16.msra.mxu0 0
        %2233 = vmatprep.subr.bf16.mxu0 0
        %2234 = vmatpush1.bf16.msra.mxu0 0
        %2235 = vmatprep.subr.bf16.mxu0 0
        %2236 = vmatpush1.bf16.msra.mxu0 0
        %2237 = vmatprep.subr.bf16.mxu0 0
        %2238 = vmatpush1.bf16.msra.mxu0 0
        %2239 = vmatprep.mubr.bf16.mxu0 0
        %2240 = vmatmul.mubr.bf16.gmra.mrb[0].mxu0 %v1947
        %v2241 = vpop.f32.mrb[0].mxu0
        %v2242 = vadd.f32 %v1934, %v2241
        %v2243 = vpop.f32.mrb[0].mxu0
        %v2244 = vadd.f32 %v1934, %v2243
        %v2245 = vpop.f32.mrb[0].mxu0
        %v2246 = vadd.f32 %v1939, %v2245
        %v2247 = vpop.f32.mrb[0].mxu0
        %v2248 = vadd.f32 %v1939, %v2247
        %2249 = vdwg.mxu0
        %2250 = vmatprep.subr.bf16.mxu0 %v1910
        %2251 = vmatpush1.bf16.msra.mxu0 %v1909
        %2252 = vmatprep.subr.bf16.mxu0 %v1926
        %2253 = vmatpush1.bf16.msra.mxu0 %v1925
        %2254 = vmatprep.subr.bf16.mxu0 0
        %2255 = vmatpush1.bf16.msra.mxu0 0
        %2256 = vmatprep.subr.bf16.mxu0 0
        %2257 = vmatpush1.bf16.msra.mxu0 0
        %2258 = vmatprep.subr.bf16.mxu0 0
        %2259 = vmatpush1.bf16.msra.mxu0 0
        %2260 = vmatprep.subr.bf16.mxu0 0
        %2261 = vmatpush1.bf16.msra.mxu0 0
        %2262 = vmatprep.subr.bf16.mxu0 0
        %2263 = vmatpush1.bf16.msra.mxu0 0
        %2264 = vmatprep.subr.bf16.mxu0 0
        %2265 = vmatpush1.bf16.msra.mxu0 0
        %2266 = vmatprep.subr.bf16.mxu0 0
        %2267 = vmatpush1.bf16.msra.mxu0 0
        %2268 = vmatprep.subr.bf16.mxu0 0
        %2269 = vmatpush1.bf16.msra.mxu0 0
        %2270 = vmatprep.subr.bf16.mxu0 0
        %2271 = vmatpush1.bf16.msra.mxu0 0
        %2272 = vmatprep.subr.bf16.mxu0 0
        %2273 = vmatpush1.bf16.msra.mxu0 0
        %2274 = vmatprep.subr.bf16.mxu0 0
        %2275 = vmatpush1.bf16.msra.mxu0 0
        %2276 = vmatprep.subr.bf16.mxu0 0
        %2277 = vmatpush1.bf16.msra.mxu0 0
        %2278 = vmatprep.subr.bf16.mxu0 0
        %2279 = vmatpush1.bf16.msra.mxu0 0
        %2280 = vmatprep.subr.bf16.mxu0 0
        %2281 = vmatpush1.bf16.msra.mxu0 0
        %2282 = vmatprep.mubr.bf16.mxu0 0
        %2283 = vmatmul.mubr.bf16.gmra.mrb[0].mxu0 %v1947
        %v2284 = vpop.f32.mrb[0].mxu0
        %v2285 = vadd.f32 %v1934, %v2284
        %v2286 = vpop.f32.mrb[0].mxu0
        %v2287 = vadd.f32 %v1934, %v2286
        %v2288 = vpop.f32.mrb[0].mxu0
        %v2289 = vadd.f32 %v1939, %v2288
        %v2290 = vpop.f32.mrb[0].mxu0
        %v2291 = vadd.f32 %v1939, %v2290
        %2292 = vdwg.mxu0
        %v2293 = vmax.f32 %v1984, 0.0
        %v2294 = vmax.f32 %v1986, 0.0
        %v2295 = vmax.f32 %v2027, 0.0
        %v2296 = vmax.f32 %v2029, 0.0
        %v2297 = vmax.f32 %v2070, 0.0
        %v2298 = vmax.f32 %v2072, 0.0
        %v2299 = vmax.f32 %v2113, 0.0
        %v2300 = vmax.f32 %v2115, 0.0
        %v2301 = vmax.f32 %v2156, 0.0
        %v2302 = vmax.f32 %v2158, 0.0
        %v2303 = vmax.f32 %v2199, 0.0
        %v2304 = vmax.f32 %v2201, 0.0
        %v2305 = vmax.f32 %v2242, 0.0
        %v2306 = vmax.f32 %v2244, 0.0
        %v2307 = vmax.f32 %v2285, 0.0
        %v2308 = vmax.f32 %v2287, 0.0
        %v2309 = vld [vmem:[%s9] sm:$0xf]
        %v2310 = vld [vmem:[%s9 + $0x4] sm:$0xf]
        %v2311 = vld [vmem:[%s9 + $0x8] sm:$0xf]
        %v2312 = vld [vmem:[%s9 + $0xc] sm:$0xf]
        %v2313 = vpack.c.bf16 %v1988, %v1984
        %v2314 = vpack.c.bf16 %v1990, %v1986
        %v2315 = vpack.c.bf16 %v2031, %v2027
        %v2316 = vpack.c.bf16 %v2033, %v2029
        %v2317 = vpack.c.bf16 %v2074, %v2070
        %v2318 = vpack.c.bf16 %v2076, %v2072
        %v2319 = vpack.c.bf16 %v2117, %v2113
        %v2320 = vpack.c.bf16 %v2119, %v2115
        %v2321 = vpack.c.bf16 %v2160, %v2156
        %v2322 = vpack.c.bf16 %v2162, %v2158
        %v2323 = vpack.c.bf16 %v2203, %v2199
        %v2324 = vpack.c.bf16 %v2205, %v2201
        %v2325 = vpack.c.bf16 %v2246, %v2242
        %v2326 = vpack.c.bf16 %v2248, %v2244
        %v2327 = vpack.c.bf16 %v2289, %v2285
        %v2328 = vpack.c.bf16 %v2291, %v2287
        %v2329 = vld [vmem:[%s10] sm:$0xf]
        %v2330 = vld [vmem:[%s10 + $0x4] sm:$0xf]
        %v2331 = vld [vmem:[%s10 + $0x8] sm:$0xf]
        %v2332 = vld [vmem:[%s10 + $0xc] sm:$0xf]
        %v2333 = vld [vmem:[%s627] sm:$0xff]
        %v2334 = vld [vmem:[%s627 + $0x8] sm:$0xff]
        %v2335 = vld [vmem:[%s627 + $0x10] sm:$0xff]
        %v2336 = vld [vmem:[%s627 + $0x18] sm:$0xff]
        %v2337 = vld [vmem:[%s627 + $0x20] sm:$0xff]
        %v2338 = vld [vmem:[%s627 + $0x28] sm:$0xff]
        %v2339 = vld [vmem:[%s627 + $0x30] sm:$0xff]
        %v2340 = vld [vmem:[%s627 + $0x38] sm:$0xff]
        %v2341 = vld [vmem:[%s627 + $0x40] sm:$0xff]
        %v2342 = vld [vmem:[%s627 + $0x48] sm:$0xff]
        %v2343 = vld [vmem:[%s627 + $0x50] sm:$0xff]
        %v2344 = vld [vmem:[%s627 + $0x58] sm:$0xff]
        %v2345 = vld [vmem:[%s627 + $0x60] sm:$0xff]
        %v2346 = vld [vmem:[%s627 + $0x68] sm:$0xff]
        %v2347 = vld [vmem:[%s627 + $0x70] sm:$0xff]
        %v2348 = vld [vmem:[%s627 + $0x78] sm:$0xff]
        %v2353 = vunpack.c.l.b16 %v2329
        %v2354 = vunpack.c.l.b16 %v2330
        %v2355 = vunpack.c.l.b16 %v2331
        %v2356 = vunpack.c.l.b16 %v2332
        %v2357 = vpack.c.b16 %v2354, %v2353
        %v2358 = vpack.c.b16 %v2356, %v2355
        %v2375 = vunpack.c.l.b16 %v2333
        %v2376 = vunpack.c.h.b16 %v2333
        %v2377 = vunpack.c.l.b16 %v2334
        %v2378 = vunpack.c.h.b16 %v2334
        %v2379 = vunpack.c.l.b16 %v2335
        %v2380 = vunpack.c.h.b16 %v2335
        %v2381 = vunpack.c.l.b16 %v2336
        %v2382 = vunpack.c.h.b16 %v2336
        %v2383 = vunpack.c.l.b16 %v2337
        %v2384 = vunpack.c.h.b16 %v2337
        %v2385 = vunpack.c.l.b16 %v2338
        %v2386 = vunpack.c.h.b16 %v2338
        %v2387 = vunpack.c.l.b16 %v2339
        %v2388 = vunpack.c.h.b16 %v2339
        %v2389 = vunpack.c.l.b16 %v2340
        %v2390 = vunpack.c.h.b16 %v2340
        %v2391 = vunpack.c.l.b16 %v2341
        %v2392 = vunpack.c.h.b16 %v2341
        %v2393 = vunpack.c.l.b16 %v2342
        %v2394 = vunpack.c.h.b16 %v2342
        %v2395 = vunpack.c.l.b16 %v2343
        %v2396 = vunpack.c.h.b16 %v2343
        %v2397 = vunpack.c.l.b16 %v2344
        %v2398 = vunpack.c.h.b16 %v2344
        %v2399 = vunpack.c.l.b16 %v2345
        %v2400 = vunpack.c.h.b16 %v2345
        %v2401 = vunpack.c.l.b16 %v2346
        %v2402 = vunpack.c.h.b16 %v2346
        %v2403 = vunpack.c.l.b16 %v2347
        %v2404 = vunpack.c.h.b16 %v2347
        %v2405 = vunpack.c.l.b16 %v2348
        %v2406 = vunpack.c.h.b16 %v2348
        %v2407 = vpack.c.b16 %v2391, %v2375
        %v2408 = vpack.c.b16 %v2392, %v2376
        %v2409 = vpack.c.b16 %v2393, %v2377
        %v2410 = vpack.c.b16 %v2394, %v2378
        %v2411 = vpack.c.b16 %v2395, %v2379
        %v2412 = vpack.c.b16 %v2396, %v2380
        %v2413 = vpack.c.b16 %v2397, %v2381
        %v2414 = vpack.c.b16 %v2398, %v2382
        %v2415 = vpack.c.b16 %v2399, %v2383
        %v2416 = vpack.c.b16 %v2400, %v2384
        %v2417 = vpack.c.b16 %v2401, %v2385
        %v2418 = vpack.c.b16 %v2402, %v2386
        %v2419 = vpack.c.b16 %v2403, %v2387
        %v2420 = vpack.c.b16 %v2404, %v2388
        %v2421 = vpack.c.b16 %v2405, %v2389
        %v2422 = vpack.c.b16 %v2406, %v2390
        %v2440 = vsel %vm835, %v2357, 0
        %v2443 = vsel %vm835, %v2358, 0
        %2445 = vmatprep.subr.bf16.mxu0 %v2408
        %2446 = vmatpush1.bf16.msra.mxu0 %v2407
        %2447 = vmatprep.subr.bf16.mxu0 0
        %2448 = vmatpush1.bf16.msra.mxu0 0
        %2449 = vmatprep.subr.bf16.mxu0 0
        %2450 = vmatpush1.bf16.msra.mxu0 0
        %2451 = vmatprep.subr.bf16.mxu0 0
        %2452 = vmatpush1.bf16.msra.mxu0 0
        %2453 = vmatprep.subr.bf16.mxu0 0
        %2454 = vmatpush1.bf16.msra.mxu0 0
        %2455 = vmatprep.subr.bf16.mxu0 0
        %2456 = vmatpush1.bf16.msra.mxu0 0
        %2457 = vmatprep.subr.bf16.mxu0 0
        %2458 = vmatpush1.bf16.msra.mxu0 0
        %2459 = vmatprep.subr.bf16.mxu0 0
        %2460 = vmatpush1.bf16.msra.mxu0 0
        %2461 = vmatprep.subr.bf16.mxu0 0
        %2462 = vmatpush1.bf16.msra.mxu0 0
        %2463 = vmatprep.subr.bf16.mxu0 0
        %2464 = vmatpush1.bf16.msra.mxu0 0
        %2465 = vmatprep.subr.bf16.mxu0 0
        %2466 = vmatpush1.bf16.msra.mxu0 0
        %2467 = vmatprep.subr.bf16.mxu0 0
        %2468 = vmatpush1.bf16.msra.mxu0 0
        %2469 = vmatprep.subr.bf16.mxu0 0
        %2470 = vmatpush1.bf16.msra.mxu0 0
        %2471 = vmatprep.subr.bf16.mxu0 0
        %2472 = vmatpush1.bf16.msra.mxu0 0
        %2473 = vmatprep.subr.bf16.mxu0 0
        %2474 = vmatpush1.bf16.msra.mxu0 0
        %2475 = vmatprep.subr.bf16.mxu0 0
        %2476 = vmatpush1.bf16.msra.mxu0 0
        %2477 = vmatprep.mubr.bf16.mxu0 0
        %2478 = vmatmul.mubr.bf16.gmra.mrb[0].mxu0 %v2440
        %v2479 = vpop.f32.mrb[0].mxu0
        %v2480 = vadd.f32 0.0, %v2479
        %v2481 = vpop.f32.mrb[0].mxu0
        %v2482 = vadd.f32 0.0, %v2481
        %v2483 = vpop.f32.mrb[0].mxu0
        %v2484 = vadd.f32 0.0, %v2483
        %v2485 = vpop.f32.mrb[0].mxu0
        %v2486 = vadd.f32 0.0, %v2485
        %2487 = vmatprep.mubr.bf16.mxu0 0
        %2488 = vmatmul.mubr.bf16.gmra.mrb[0].mxu0 %v2443
        %v2489 = vpop.f32.mrb[0].mxu0
        %v2490 = vadd.f32 0.0, %v2489
        %v2491 = vpop.f32.mrb[0].mxu0
        %v2492 = vadd.f32 0.0, %v2491
        %v2493 = vpop.f32.mrb[0].mxu0
        %v2494 = vadd.f32 0.0, %v2493
        %v2495 = vpop.f32.mrb[0].mxu0
        %v2496 = vadd.f32 0.0, %v2495
        %2497 = vdwg.mxu0
        %2498 = vmatprep.subr.bf16.mxu0 %v2410
        %2499 = vmatpush1.bf16.msra.mxu0 %v2409
        %2500 = vmatprep.subr.bf16.mxu0 0
        %2501 = vmatpush1.bf16.msra.mxu0 0
        %2502 = vmatprep.subr.bf16.mxu0 0
        %2503 = vmatpush1.bf16.msra.mxu0 0
        %2504 = vmatprep.subr.bf16.mxu0 0
        %2505 = vmatpush1.bf16.msra.mxu0 0
        %2506 = vmatprep.subr.bf16.mxu0 0
        %2507 = vmatpush1.bf16.msra.mxu0 0
        %2508 = vmatprep.subr.bf16.mxu0 0
        %2509 = vmatpush1.bf16.msra.mxu0 0
        %2510 = vmatprep.subr.bf16.mxu0 0
        %2511 = vmatpush1.bf16.msra.mxu0 0
        %2512 = vmatprep.subr.bf16.mxu0 0
        %2513 = vmatpush1.bf16.msra.mxu0 0
        %2514 = vmatprep.subr.bf16.mxu0 0
        %2515 = vmatpush1.bf16.msra.mxu0 0
        %2516 = vmatprep.subr.bf16.mxu0 0
        %2517 = vmatpush1.bf16.msra.mxu0 0
        %2518 = vmatprep.subr.bf16.mxu0 0
        %2519 = vmatpush1.bf16.msra.mxu0 0
        %2520 = vmatprep.subr.bf16.mxu0 0
        %2521 = vmatpush1.bf16.msra.mxu0 0
        %2522 = vmatprep.subr.bf16.mxu0 0
        %2523 = vmatpush1.bf16.msra.mxu0 0
        %2524 = vmatprep.subr.bf16.mxu0 0
        %2525 = vmatpush1.bf16.msra.mxu0 0
        %2526 = vmatprep.subr.bf16.mxu0 0
        %2527 = vmatpush1.bf16.msra.mxu0 0
        %2528 = vmatprep.subr.bf16.mxu0 0
        %2529 = vmatpush1.bf16.msra.mxu0 0
        %2530 = vmatprep.mubr.bf16.mxu0 0
        %2531 = vmatmul.mubr.bf16.gmra.mrb[0].mxu0 %v2440
        %v2532 = vpop.f32.mrb[0].mxu0
        %v2533 = vadd.f32 0.0, %v2532
        %v2534 = vpop.f32.mrb[0].mxu0
        %v2535 = vadd.f32 0.0, %v2534
        %v2536 = vpop.f32.mrb[0].mxu0
        %v2537 = vadd.f32 0.0, %v2536
        %v2538 = vpop.f32.mrb[0].mxu0
        %v2539 = vadd.f32 0.0, %v2538
        %2540 = vmatprep.mubr.bf16.mxu0 0
        %2541 = vmatmul.mubr.bf16.gmra.mrb[0].mxu0 %v2443
        %v2542 = vpop.f32.mrb[0].mxu0
        %v2543 = vadd.f32 0.0, %v2542
        %v2544 = vpop.f32.mrb[0].mxu0
        %v2545 = vadd.f32 0.0, %v2544
        %v2546 = vpop.f32.mrb[0].mxu0
        %v2547 = vadd.f32 0.0, %v2546
        %v2548 = vpop.f32.mrb[0].mxu0
        %v2549 = vadd.f32 0.0, %v2548
        %2550 = vdwg.mxu0
        %2551 = vmatprep.subr.bf16.mxu0 %v2412
        %2552 = vmatpush1.bf16.msra.mxu0 %v2411
        %2553 = vmatprep.subr.bf16.mxu0 0
        %2554 = vmatpush1.bf16.msra.mxu0 0
        %2555 = vmatprep.subr.bf16.mxu0 0
        %2556 = vmatpush1.bf16.msra.mxu0 0
        %2557 = vmatprep.subr.bf16.mxu0 0
        %2558 = vmatpush1.bf16.msra.mxu0 0
        %2559 = vmatprep.subr.bf16.mxu0 0
        %2560 = vmatpush1.bf16.msra.mxu0 0
        %2561 = vmatprep.subr.bf16.mxu0 0
        %2562 = vmatpush1.bf16.msra.mxu0 0
        %2563 = vmatprep.subr.bf16.mxu0 0
        %2564 = vmatpush1.bf16.msra.mxu0 0
        %2565 = vmatprep.subr.bf16.mxu0 0
        %2566 = vmatpush1.bf16.msra.mxu0 0
        %2567 = vmatprep.subr.bf16.mxu0 0
        %2568 = vmatpush1.bf16.msra.mxu0 0
        %2569 = vmatprep.subr.bf16.mxu0 0
        %2570 = vmatpush1.bf16.msra.mxu0 0
        %2571 = vmatprep.subr.bf16.mxu0 0
        %2572 = vmatpush1.bf16.msra.mxu0 0
        %2573 = vmatprep.subr.bf16.mxu0 0
        %2574 = vmatpush1.bf16.msra.mxu0 0
        %2575 = vmatprep.subr.bf16.mxu0 0
        %2576 = vmatpush1.bf16.msra.mxu0 0
        %2577 = vmatprep.subr.bf16.mxu0 0
        %2578 = vmatpush1.bf16.msra.mxu0 0
        %2579 = vmatprep.subr.bf16.mxu0 0
        %2580 = vmatpush1.bf16.msra.mxu0 0
        %2581 = vmatprep.subr.bf16.mxu0 0
        %2582 = vmatpush1.bf16.msra.mxu0 0
        %2583 = vmatprep.mubr.bf16.mxu0 0
        %2584 = vmatmul.mubr.bf16.gmra.mrb[0].mxu0 %v2440
        %v2585 = vpop.f32.mrb[0].mxu0
        %v2586 = vadd.f32 0.0, %v2585
        %v2587 = vpop.f32.mrb[0].mxu0
        %v2588 = vadd.f32 0.0, %v2587
        %v2589 = vpop.f32.mrb[0].mxu0
        %v2590 = vadd.f32 0.0, %v2589
        %v2591 = vpop.f32.mrb[0].mxu0
        %v2592 = vadd.f32 0.0, %v2591
        %2593 = vmatprep.mubr.bf16.mxu0 0
        %2594 = vmatmul.mubr.bf16.gmra.mrb[0].mxu0 %v2443
        %v2595 = vpop.f32.mrb[0].mxu0
        %v2596 = vadd.f32 0.0, %v2595
        %v2597 = vpop.f32.mrb[0].mxu0
        %v2598 = vadd.f32 0.0, %v2597
        %v2599 = vpop.f32.mrb[0].mxu0
        %v2600 = vadd.f32 0.0, %v2599
        %v2601 = vpop.f32.mrb[0].mxu0
        %v2602 = vadd.f32 0.0, %v2601
        %2603 = vdwg.mxu0
        %2604 = vmatprep.subr.bf16.mxu0 %v2414
        %2605 = vmatpush1.bf16.msra.mxu0 %v2413
        %2606 = vmatprep.subr.bf16.mxu0 0
        %2607 = vmatpush1.bf16.msra.mxu0 0
        %2608 = vmatprep.subr.bf16.mxu0 0
        %2609 = vmatpush1.bf16.msra.mxu0 0
        %2610 = vmatprep.subr.bf16.mxu0 0
        %2611 = vmatpush1.bf16.msra.mxu0 0
        %2612 = vmatprep.subr.bf16.mxu0 0
        %2613 = vmatpush1.bf16.msra.mxu0 0
        %2614 = vmatprep.subr.bf16.mxu0 0
        %2615 = vmatpush1.bf16.msra.mxu0 0
        %2616 = vmatprep.subr.bf16.mxu0 0
        %2617 = vmatpush1.bf16.msra.mxu0 0
        %2618 = vmatprep.subr.bf16.mxu0 0
        %2619 = vmatpush1.bf16.msra.mxu0 0
        %2620 = vmatprep.subr.bf16.mxu0 0
        %2621 = vmatpush1.bf16.msra.mxu0 0
        %2622 = vmatprep.subr.bf16.mxu0 0
        %2623 = vmatpush1.bf16.msra.mxu0 0
        %2624 = vmatprep.subr.bf16.mxu0 0
        %2625 = vmatpush1.bf16.msra.mxu0 0
        %2626 = vmatprep.subr.bf16.mxu0 0
        %2627 = vmatpush1.bf16.msra.mxu0 0
        %2628 = vmatprep.subr.bf16.mxu0 0
        %2629 = vmatpush1.bf16.msra.mxu0 0
        %2630 = vmatprep.subr.bf16.mxu0 0
        %2631 = vmatpush1.bf16.msra.mxu0 0
        %2632 = vmatprep.subr.bf16.mxu0 0
        %2633 = vmatpush1.bf16.msra.mxu0 0
        %2634 = vmatprep.subr.bf16.mxu0 0
        %2635 = vmatpush1.bf16.msra.mxu0 0
        %2636 = vmatprep.mubr.bf16.mxu0 0
        %2637 = vmatmul.mubr.bf16.gmra.mrb[0].mxu0 %v2440
        %v2638 = vpop.f32.mrb[0].mxu0
        %v2639 = vadd.f32 0.0, %v2638
        %v2640 = vpop.f32.mrb[0].mxu0
        %v2641 = vadd.f32 0.0, %v2640
        %v2642 = vpop.f32.mrb[0].mxu0
        %v2643 = vadd.f32 0.0, %v2642
        %v2644 = vpop.f32.mrb[0].mxu0
        %v2645 = vadd.f32 0.0, %v2644
        %2646 = vmatprep.mubr.bf16.mxu0 0
        %2647 = vmatmul.mubr.bf16.gmra.mrb[0].mxu0 %v2443
        %v2648 = vpop.f32.mrb[0].mxu0
        %v2649 = vadd.f32 0.0, %v2648
        %v2650 = vpop.f32.mrb[0].mxu0
        %v2651 = vadd.f32 0.0, %v2650
        %v2652 = vpop.f32.mrb[0].mxu0
        %v2653 = vadd.f32 0.0, %v2652
        %v2654 = vpop.f32.mrb[0].mxu0
        %v2655 = vadd.f32 0.0, %v2654
        %2656 = vdwg.mxu0
        %2657 = vmatprep.subr.bf16.mxu0 %v2416
        %2658 = vmatpush1.bf16.msra.mxu0 %v2415
        %2659 = vmatprep.subr.bf16.mxu0 0
        %2660 = vmatpush1.bf16.msra.mxu0 0
        %2661 = vmatprep.subr.bf16.mxu0 0
        %2662 = vmatpush1.bf16.msra.mxu0 0
        %2663 = vmatprep.subr.bf16.mxu0 0
        %2664 = vmatpush1.bf16.msra.mxu0 0
        %2665 = vmatprep.subr.bf16.mxu0 0
        %2666 = vmatpush1.bf16.msra.mxu0 0
        %2667 = vmatprep.subr.bf16.mxu0 0
        %2668 = vmatpush1.bf16.msra.mxu0 0
        %2669 = vmatprep.subr.bf16.mxu0 0
        %2670 = vmatpush1.bf16.msra.mxu0 0
        %2671 = vmatprep.subr.bf16.mxu0 0
        %2672 = vmatpush1.bf16.msra.mxu0 0
        %2673 = vmatprep.subr.bf16.mxu0 0
        %2674 = vmatpush1.bf16.msra.mxu0 0
        %2675 = vmatprep.subr.bf16.mxu0 0
        %2676 = vmatpush1.bf16.msra.mxu0 0
        %2677 = vmatprep.subr.bf16.mxu0 0
        %2678 = vmatpush1.bf16.msra.mxu0 0
        %2679 = vmatprep.subr.bf16.mxu0 0
        %2680 = vmatpush1.bf16.msra.mxu0 0
        %2681 = vmatprep.subr.bf16.mxu0 0
        %2682 = vmatpush1.bf16.msra.mxu0 0
        %2683 = vmatprep.subr.bf16.mxu0 0
        %2684 = vmatpush1.bf16.msra.mxu0 0
        %2685 = vmatprep.subr.bf16.mxu0 0
        %2686 = vmatpush1.bf16.msra.mxu0 0
        %2687 = vmatprep.subr.bf16.mxu0 0
        %2688 = vmatpush1.bf16.msra.mxu0 0
        %2689 = vmatprep.mubr.bf16.mxu0 0
        %2690 = vmatmul.mubr.bf16.gmra.mrb[0].mxu0 %v2440
        %v2691 = vpop.f32.mrb[0].mxu0
        %v2692 = vadd.f32 0.0, %v2691
        %v2693 = vpop.f32.mrb[0].mxu0
        %v2694 = vadd.f32 0.0, %v2693
        %v2695 = vpop.f32.mrb[0].mxu0
        %v2696 = vadd.f32 0.0, %v2695
        %v2697 = vpop.f32.mrb[0].mxu0
        %v2698 = vadd.f32 0.0, %v2697
        %2699 = vmatprep.mubr.bf16.mxu0 0
        %2700 = vmatmul.mubr.bf16.gmra.mrb[0].mxu0 %v2443
        %v2701 = vpop.f32.mrb[0].mxu0
        %v2702 = vadd.f32 0.0, %v2701
        %v2703 = vpop.f32.mrb[0].mxu0
        %v2704 = vadd.f32 0.0, %v2703
        %v2705 = vpop.f32.mrb[0].mxu0
        %v2706 = vadd.f32 0.0, %v2705
        %v2707 = vpop.f32.mrb[0].mxu0
        %v2708 = vadd.f32 0.0, %v2707
        %2709 = vdwg.mxu0
        %2710 = vmatprep.subr.bf16.mxu0 %v2418
        %2711 = vmatpush1.bf16.msra.mxu0 %v2417
        %2712 = vmatprep.subr.bf16.mxu0 0
        %2713 = vmatpush1.bf16.msra.mxu0 0
        %2714 = vmatprep.subr.bf16.mxu0 0
        %2715 = vmatpush1.bf16.msra.mxu0 0
        %2716 = vmatprep.subr.bf16.mxu0 0
        %2717 = vmatpush1.bf16.msra.mxu0 0
        %2718 = vmatprep.subr.bf16.mxu0 0
        %2719 = vmatpush1.bf16.msra.mxu0 0
        %2720 = vmatprep.subr.bf16.mxu0 0
        %2721 = vmatpush1.bf16.msra.mxu0 0
        %2722 = vmatprep.subr.bf16.mxu0 0
        %2723 = vmatpush1.bf16.msra.mxu0 0
        %2724 = vmatprep.subr.bf16.mxu0 0
        %2725 = vmatpush1.bf16.msra.mxu0 0
        %2726 = vmatprep.subr.bf16.mxu0 0
        %2727 = vmatpush1.bf16.msra.mxu0 0
        %2728 = vmatprep.subr.bf16.mxu0 0
        %2729 = vmatpush1.bf16.msra.mxu0 0
        %2730 = vmatprep.subr.bf16.mxu0 0
        %2731 = vmatpush1.bf16.msra.mxu0 0
        %2732 = vmatprep.subr.bf16.mxu0 0
        %2733 = vmatpush1.bf16.msra.mxu0 0
        %2734 = vmatprep.subr.bf16.mxu0 0
        %2735 = vmatpush1.bf16.msra.mxu0 0
        %2736 = vmatprep.subr.bf16.mxu0 0
        %2737 = vmatpush1.bf16.msra.mxu0 0
        %2738 = vmatprep.subr.bf16.mxu0 0
        %2739 = vmatpush1.bf16.msra.mxu0 0
        %2740 = vmatprep.subr.bf16.mxu0 0
        %2741 = vmatpush1.bf16.msra.mxu0 0
        %2742 = vmatprep.mubr.bf16.mxu0 0
        %2743 = vmatmul.mubr.bf16.gmra.mrb[0].mxu0 %v2440
        %v2744 = vpop.f32.mrb[0].mxu0
        %v2745 = vadd.f32 0.0, %v2744
        %v2746 = vpop.f32.mrb[0].mxu0
        %v2747 = vadd.f32 0.0, %v2746
        %v2748 = vpop.f32.mrb[0].mxu0
        %v2749 = vadd.f32 0.0, %v2748
        %v2750 = vpop.f32.mrb[0].mxu0
        %v2751 = vadd.f32 0.0, %v2750
        %2752 = vmatprep.mubr.bf16.mxu0 0
        %2753 = vmatmul.mubr.bf16.gmra.mrb[0].mxu0 %v2443
        %v2754 = vpop.f32.mrb[0].mxu0
        %v2755 = vadd.f32 0.0, %v2754
        %v2756 = vpop.f32.mrb[0].mxu0
        %v2757 = vadd.f32 0.0, %v2756
        %v2758 = vpop.f32.mrb[0].mxu0
        %v2759 = vadd.f32 0.0, %v2758
        %v2760 = vpop.f32.mrb[0].mxu0
        %v2761 = vadd.f32 0.0, %v2760
        %2762 = vdwg.mxu0
        %2763 = vmatprep.subr.bf16.mxu0 %v2420
        %2764 = vmatpush1.bf16.msra.mxu0 %v2419
        %2765 = vmatprep.subr.bf16.mxu0 0
        %2766 = vmatpush1.bf16.msra.mxu0 0
        %2767 = vmatprep.subr.bf16.mxu0 0
        %2768 = vmatpush1.bf16.msra.mxu0 0
        %2769 = vmatprep.subr.bf16.mxu0 0
        %2770 = vmatpush1.bf16.msra.mxu0 0
        %2771 = vmatprep.subr.bf16.mxu0 0
        %2772 = vmatpush1.bf16.msra.mxu0 0
        %2773 = vmatprep.subr.bf16.mxu0 0
        %2774 = vmatpush1.bf16.msra.mxu0 0
        %2775 = vmatprep.subr.bf16.mxu0 0
        %2776 = vmatpush1.bf16.msra.mxu0 0
        %2777 = vmatprep.subr.bf16.mxu0 0
        %2778 = vmatpush1.bf16.msra.mxu0 0
        %2779 = vmatprep.subr.bf16.mxu0 0
        %2780 = vmatpush1.bf16.msra.mxu0 0
        %2781 = vmatprep.subr.bf16.mxu0 0
        %2782 = vmatpush1.bf16.msra.mxu0 0
        %2783 = vmatprep.subr.bf16.mxu0 0
        %2784 = vmatpush1.bf16.msra.mxu0 0
        %2785 = vmatprep.subr.bf16.mxu0 0
        %2786 = vmatpush1.bf16.msra.mxu0 0
        %2787 = vmatprep.subr.bf16.mxu0 0
        %2788 = vmatpush1.bf16.msra.mxu0 0
        %2789 = vmatprep.subr.bf16.mxu0 0
        %2790 = vmatpush1.bf16.msra.mxu0 0
        %2791 = vmatprep.subr.bf16.mxu0 0
        %2792 = vmatpush1.bf16.msra.mxu0 0
        %2793 = vmatprep.subr.bf16.mxu0 0
        %2794 = vmatpush1.bf16.msra.mxu0 0
        %2795 = vmatprep.mubr.bf16.mxu0 0
        %2796 = vmatmul.mubr.bf16.gmra.mrb[0].mxu0 %v2440
        %v2797 = vpop.f32.mrb[0].mxu0
        %v2798 = vadd.f32 0.0, %v2797
        %v2799 = vpop.f32.mrb[0].mxu0
        %v2800 = vadd.f32 0.0, %v2799
        %v2801 = vpop.f32.mrb[0].mxu0
        %v2802 = vadd.f32 0.0, %v2801
        %v2803 = vpop.f32.mrb[0].mxu0
        %v2804 = vadd.f32 0.0, %v2803
        %2805 = vmatprep.mubr.bf16.mxu0 0
        %2806 = vmatmul.mubr.bf16.gmra.mrb[0].mxu0 %v2443
        %v2807 = vpop.f32.mrb[0].mxu0
        %v2808 = vadd.f32 0.0, %v2807
        %v2809 = vpop.f32.mrb[0].mxu0
        %v2810 = vadd.f32 0.0, %v2809
        %v2811 = vpop.f32.mrb[0].mxu0
        %v2812 = vadd.f32 0.0, %v2811
        %v2813 = vpop.f32.mrb[0].mxu0
        %v2814 = vadd.f32 0.0, %v2813
        %2815 = vdwg.mxu0
        %2816 = vmatprep.subr.bf16.mxu0 %v2422
        %2817 = vmatpush1.bf16.msra.mxu0 %v2421
        %2818 = vmatprep.subr.bf16.mxu0 0
        %2819 = vmatpush1.bf16.msra.mxu0 0
        %2820 = vmatprep.subr.bf16.mxu0 0
        %2821 = vmatpush1.bf16.msra.mxu0 0
        %2822 = vmatprep.subr.bf16.mxu0 0
        %2823 = vmatpush1.bf16.msra.mxu0 0
        %2824 = vmatprep.subr.bf16.mxu0 0
        %2825 = vmatpush1.bf16.msra.mxu0 0
        %2826 = vmatprep.subr.bf16.mxu0 0
        %2827 = vmatpush1.bf16.msra.mxu0 0
        %2828 = vmatprep.subr.bf16.mxu0 0
        %2829 = vmatpush1.bf16.msra.mxu0 0
        %2830 = vmatprep.subr.bf16.mxu0 0
        %2831 = vmatpush1.bf16.msra.mxu0 0
        %2832 = vmatprep.subr.bf16.mxu0 0
        %2833 = vmatpush1.bf16.msra.mxu0 0
        %2834 = vmatprep.subr.bf16.mxu0 0
        %2835 = vmatpush1.bf16.msra.mxu0 0
        %2836 = vmatprep.subr.bf16.mxu0 0
        %2837 = vmatpush1.bf16.msra.mxu0 0
        %2838 = vmatprep.subr.bf16.mxu0 0
        %2839 = vmatpush1.bf16.msra.mxu0 0
        %2840 = vmatprep.subr.bf16.mxu0 0
        %2841 = vmatpush1.bf16.msra.mxu0 0
        %2842 = vmatprep.subr.bf16.mxu0 0
        %2843 = vmatpush1.bf16.msra.mxu0 0
        %2844 = vmatprep.subr.bf16.mxu0 0
        %2845 = vmatpush1.bf16.msra.mxu0 0
        %2846 = vmatprep.subr.bf16.mxu0 0
        %2847 = vmatpush1.bf16.msra.mxu0 0
        %2848 = vmatprep.mubr.bf16.mxu0 0
        %2849 = vmatmul.mubr.bf16.gmra.mrb[0].mxu0 %v2440
        %v2850 = vpop.f32.mrb[0].mxu0
        %v2851 = vadd.f32 0.0, %v2850
        %v2852 = vpop.f32.mrb[0].mxu0
        %v2853 = vadd.f32 0.0, %v2852
        %v2854 = vpop.f32.mrb[0].mxu0
        %v2855 = vadd.f32 0.0, %v2854
        %v2856 = vpop.f32.mrb[0].mxu0
        %v2857 = vadd.f32 0.0, %v2856
        %2858 = vmatprep.mubr.bf16.mxu0 0
        %2859 = vmatmul.mubr.bf16.gmra.mrb[0].mxu0 %v2443
        %v2860 = vpop.f32.mrb[0].mxu0
        %v2861 = vadd.f32 0.0, %v2860
        %v2862 = vpop.f32.mrb[0].mxu0
        %v2863 = vadd.f32 0.0, %v2862
        %v2864 = vpop.f32.mrb[0].mxu0
        %v2865 = vadd.f32 0.0, %v2864
        %v2866 = vpop.f32.mrb[0].mxu0
        %v2867 = vadd.f32 0.0, %v2866
        %2868 = vdwg.mxu0
        %v2873 = vunpack.c.l.b16 %v2309
        %v2874 = vunpack.c.l.b16 %v2310
        %v2875 = vunpack.c.l.b16 %v2311
        %v2876 = vunpack.c.l.b16 %v2312
        %v2877 = vpack.c.b16 %v2874, %v2873
        %v2878 = vpack.c.b16 %v2876, %v2875
        %v2880 = vsel %vm835, %v2877, 0
        %v2883 = vsel %vm835, %v2878, 0
        %2885 = vmatprep.subr.bf16.mxu0 %v2314
        %2886 = vmatpush1.bf16.msra.mxu0 %v2313
        %2887 = vmatprep.subr.bf16.mxu0 0
        %2888 = vmatpush1.bf16.msra.mxu0 0
        %2889 = vmatprep.subr.bf16.mxu0 0
        %2890 = vmatpush1.bf16.msra.mxu0 0
        %2891 = vmatprep.subr.bf16.mxu0 0
        %2892 = vmatpush1.bf16.msra.mxu0 0
        %2893 = vmatprep.subr.bf16.mxu0 0
        %2894 = vmatpush1.bf16.msra.mxu0 0
        %2895 = vmatprep.subr.bf16.mxu0 0
        %2896 = vmatpush1.bf16.msra.mxu0 0
        %2897 = vmatprep.subr.bf16.mxu0 0
        %2898 = vmatpush1.bf16.msra.mxu0 0
        %2899 = vmatprep.subr.bf16.mxu0 0
        %2900 = vmatpush1.bf16.msra.mxu0 0
        %2901 = vmatprep.subr.bf16.mxu0 0
        %2902 = vmatpush1.bf16.msra.mxu0 0
        %2903 = vmatprep.subr.bf16.mxu0 0
        %2904 = vmatpush1.bf16.msra.mxu0 0
        %2905 = vmatprep.subr.bf16.mxu0 0
        %2906 = vmatpush1.bf16.msra.mxu0 0
        %2907 = vmatprep.subr.bf16.mxu0 0
        %2908 = vmatpush1.bf16.msra.mxu0 0
        %2909 = vmatprep.subr.bf16.mxu0 0
        %2910 = vmatpush1.bf16.msra.mxu0 0
        %2911 = vmatprep.subr.bf16.mxu0 0
        %2912 = vmatpush1.bf16.msra.mxu0 0
        %2913 = vmatprep.subr.bf16.mxu0 0
        %2914 = vmatpush1.bf16.msra.mxu0 0
        %2915 = vmatprep.subr.bf16.mxu0 0
        %2916 = vmatpush1.bf16.msra.mxu0 0
        %2917 = vmatprep.mubr.bf16.mxu0 0
        %2918 = vmatmul.mubr.bf16.gmra.mrb[0].mxu0 %v2880
        %v2919 = vpop.f32.mrb[0].mxu0
        %v2920 = vadd.f32 %v2480, %v2919
        %v2921 = vpop.f32.mrb[0].mxu0
        %v2922 = vadd.f32 %v2482, %v2921
        %v2923 = vpop.f32.mrb[0].mxu0
        %v2924 = vadd.f32 %v2484, %v2923
        %v2925 = vpop.f32.mrb[0].mxu0
        %v2926 = vadd.f32 %v2486, %v2925
        %2927 = vmatprep.mubr.bf16.mxu0 0
        %2928 = vmatmul.mubr.bf16.gmra.mrb[0].mxu0 %v2883
        %v2929 = vpop.f32.mrb[0].mxu0
        %v2930 = vadd.f32 %v2490, %v2929
        %v2931 = vpop.f32.mrb[0].mxu0
        %v2932 = vadd.f32 %v2492, %v2931
        %v2933 = vpop.f32.mrb[0].mxu0
        %v2934 = vadd.f32 %v2494, %v2933
        %v2935 = vpop.f32.mrb[0].mxu0
        %v2936 = vadd.f32 %v2496, %v2935
        %2937 = vdwg.mxu0
        %2938 = vmatprep.subr.bf16.mxu0 %v2316
        %2939 = vmatpush1.bf16.msra.mxu0 %v2315
        %2940 = vmatprep.subr.bf16.mxu0 0
        %2941 = vmatpush1.bf16.msra.mxu0 0
        %2942 = vmatprep.subr.bf16.mxu0 0
        %2943 = vmatpush1.bf16.msra.mxu0 0
        %2944 = vmatprep.subr.bf16.mxu0 0
        %2945 = vmatpush1.bf16.msra.mxu0 0
        %2946 = vmatprep.subr.bf16.mxu0 0
        %2947 = vmatpush1.bf16.msra.mxu0 0
        %2948 = vmatprep.subr.bf16.mxu0 0
        %2949 = vmatpush1.bf16.msra.mxu0 0
        %2950 = vmatprep.subr.bf16.mxu0 0
        %2951 = vmatpush1.bf16.msra.mxu0 0
        %2952 = vmatprep.subr.bf16.mxu0 0
        %2953 = vmatpush1.bf16.msra.mxu0 0
        %2954 = vmatprep.subr.bf16.mxu0 0
        %2955 = vmatpush1.bf16.msra.mxu0 0
        %2956 = vmatprep.subr.bf16.mxu0 0
        %2957 = vmatpush1.bf16.msra.mxu0 0
        %2958 = vmatprep.subr.bf16.mxu0 0
        %2959 = vmatpush1.bf16.msra.mxu0 0
        %2960 = vmatprep.subr.bf16.mxu0 0
        %2961 = vmatpush1.bf16.msra.mxu0 0
        %2962 = vmatprep.subr.bf16.mxu0 0
        %2963 = vmatpush1.bf16.msra.mxu0 0
        %2964 = vmatprep.subr.bf16.mxu0 0
        %2965 = vmatpush1.bf16.msra.mxu0 0
        %2966 = vmatprep.subr.bf16.mxu0 0
        %2967 = vmatpush1.bf16.msra.mxu0 0
        %2968 = vmatprep.subr.bf16.mxu0 0
        %2969 = vmatpush1.bf16.msra.mxu0 0
        %2970 = vmatprep.mubr.bf16.mxu0 0
        %2971 = vmatmul.mubr.bf16.gmra.mrb[0].mxu0 %v2880
        %v2972 = vpop.f32.mrb[0].mxu0
        %v2973 = vadd.f32 %v2533, %v2972
        %v2974 = vpop.f32.mrb[0].mxu0
        %v2975 = vadd.f32 %v2535, %v2974
        %v2976 = vpop.f32.mrb[0].mxu0
        %v2977 = vadd.f32 %v2537, %v2976
        %v2978 = vpop.f32.mrb[0].mxu0
        %v2979 = vadd.f32 %v2539, %v2978
        %2980 = vmatprep.mubr.bf16.mxu0 0
        %2981 = vmatmul.mubr.bf16.gmra.mrb[0].mxu0 %v2883
        %v2982 = vpop.f32.mrb[0].mxu0
        %v2983 = vadd.f32 %v2543, %v2982
        %v2984 = vpop.f32.mrb[0].mxu0
        %v2985 = vadd.f32 %v2545, %v2984
        %v2986 = vpop.f32.mrb[0].mxu0
        %v2987 = vadd.f32 %v2547, %v2986
        %v2988 = vpop.f32.mrb[0].mxu0
        %v2989 = vadd.f32 %v2549, %v2988
        %2990 = vdwg.mxu0
        %2991 = vmatprep.subr.bf16.mxu0 %v2318
        %2992 = vmatpush1.bf16.msra.mxu0 %v2317
        %2993 = vmatprep.subr.bf16.mxu0 0
        %2994 = vmatpush1.bf16.msra.mxu0 0
        %2995 = vmatprep.subr.bf16.mxu0 0
        %2996 = vmatpush1.bf16.msra.mxu0 0
        %2997 = vmatprep.subr.bf16.mxu0 0
        %2998 = vmatpush1.bf16.msra.mxu0 0
        %2999 = vmatprep.subr.bf16.mxu0 0
        %3000 = vmatpush1.bf16.msra.mxu0 0
        %3001 = vmatprep.subr.bf16.mxu0 0
        %3002 = vmatpush1.bf16.msra.mxu0 0
        %3003 = vmatprep.subr.bf16.mxu0 0
        %3004 = vmatpush1.bf16.msra.mxu0 0
        %3005 = vmatprep.subr.bf16.mxu0 0
        %3006 = vmatpush1.bf16.msra.mxu0 0
        %3007 = vmatprep.subr.bf16.mxu0 0
        %3008 = vmatpush1.bf16.msra.mxu0 0
        %3009 = vmatprep.subr.bf16.mxu0 0
        %3010 = vmatpush1.bf16.msra.mxu0 0
        %3011 = vmatprep.subr.bf16.mxu0 0
        %3012 = vmatpush1.bf16.msra.mxu0 0
        %3013 = vmatprep.subr.bf16.mxu0 0
        %3014 = vmatpush1.bf16.msra.mxu0 0
        %3015 = vmatprep.subr.bf16.mxu0 0
        %3016 = vmatpush1.bf16.msra.mxu0 0
        %3017 = vmatprep.subr.bf16.mxu0 0
        %3018 = vmatpush1.bf16.msra.mxu0 0
        %3019 = vmatprep.subr.bf16.mxu0 0
        %3020 = vmatpush1.bf16.msra.mxu0 0
        %3021 = vmatprep.subr.bf16.mxu0 0
        %3022 = vmatpush1.bf16.msra.mxu0 0
        %3023 = vmatprep.mubr.bf16.mxu0 0
        %3024 = vmatmul.mubr.bf16.gmra.mrb[0].mxu0 %v2880
        %v3025 = vpop.f32.mrb[0].mxu0
        %v3026 = vadd.f32 %v2586, %v3025
        %v3027 = vpop.f32.mrb[0].mxu0
        %v3028 = vadd.f32 %v2588, %v3027
        %v3029 = vpop.f32.mrb[0].mxu0
        %v3030 = vadd.f32 %v2590, %v3029
        %v3031 = vpop.f32.mrb[0].mxu0
        %v3032 = vadd.f32 %v2592, %v3031
        %3033 = vmatprep.mubr.bf16.mxu0 0
        %3034 = vmatmul.mubr.bf16.gmra.mrb[0].mxu0 %v2883
        %v3035 = vpop.f32.mrb[0].mxu0
        %v3036 = vadd.f32 %v2596, %v3035
        %v3037 = vpop.f32.mrb[0].mxu0
        %v3038 = vadd.f32 %v2598, %v3037
        %v3039 = vpop.f32.mrb[0].mxu0
        %v3040 = vadd.f32 %v2600, %v3039
        %v3041 = vpop.f32.mrb[0].mxu0
        %v3042 = vadd.f32 %v2602, %v3041
        %3043 = vdwg.mxu0
        %3044 = vmatprep.subr.bf16.mxu0 %v2320
        %3045 = vmatpush1.bf16.msra.mxu0 %v2319
        %3046 = vmatprep.subr.bf16.mxu0 0
        %3047 = vmatpush1.bf16.msra.mxu0 0
        %3048 = vmatprep.subr.bf16.mxu0 0
        %3049 = vmatpush1.bf16.msra.mxu0 0
        %3050 = vmatprep.subr.bf16.mxu0 0
        %3051 = vmatpush1.bf16.msra.mxu0 0
        %3052 = vmatprep.subr.bf16.mxu0 0
        %3053 = vmatpush1.bf16.msra.mxu0 0
        %3054 = vmatprep.subr.bf16.mxu0 0
        %3055 = vmatpush1.bf16.msra.mxu0 0
        %3056 = vmatprep.subr.bf16.mxu0 0
        %3057 = vmatpush1.bf16.msra.mxu0 0
        %3058 = vmatprep.subr.bf16.mxu0 0
        %3059 = vmatpush1.bf16.msra.mxu0 0
        %3060 = vmatprep.subr.bf16.mxu0 0
        %3061 = vmatpush1.bf16.msra.mxu0 0
        %3062 = vmatprep.subr.bf16.mxu0 0
        %3063 = vmatpush1.bf16.msra.mxu0 0
        %3064 = vmatprep.subr.bf16.mxu0 0
        %3065 = vmatpush1.bf16.msra.mxu0 0
        %3066 = vmatprep.subr.bf16.mxu0 0
        %3067 = vmatpush1.bf16.msra.mxu0 0
        %3068 = vmatprep.subr.bf16.mxu0 0
        %3069 = vmatpush1.bf16.msra.mxu0 0
        %3070 = vmatprep.subr.bf16.mxu0 0
        %3071 = vmatpush1.bf16.msra.mxu0 0
        %3072 = vmatprep.subr.bf16.mxu0 0
        %3073 = vmatpush1.bf16.msra.mxu0 0
        %3074 = vmatprep.subr.bf16.mxu0 0
        %3075 = vmatpush1.bf16.msra.mxu0 0
        %3076 = vmatprep.mubr.bf16.mxu0 0
        %3077 = vmatmul.mubr.bf16.gmra.mrb[0].mxu0 %v2880
        %v3078 = vpop.f32.mrb[0].mxu0
        %v3079 = vadd.f32 %v2639, %v3078
        %v3080 = vpop.f32.mrb[0].mxu0
        %v3081 = vadd.f32 %v2641, %v3080
        %v3082 = vpop.f32.mrb[0].mxu0
        %v3083 = vadd.f32 %v2643, %v3082
        %v3084 = vpop.f32.mrb[0].mxu0
        %v3085 = vadd.f32 %v2645, %v3084
        %3086 = vmatprep.mubr.bf16.mxu0 0
        %3087 = vmatmul.mubr.bf16.gmra.mrb[0].mxu0 %v2883
        %v3088 = vpop.f32.mrb[0].mxu0
        %v3089 = vadd.f32 %v2649, %v3088
        %v3090 = vpop.f32.mrb[0].mxu0
        %v3091 = vadd.f32 %v2651, %v3090
        %v3092 = vpop.f32.mrb[0].mxu0
        %v3093 = vadd.f32 %v2653, %v3092
        %v3094 = vpop.f32.mrb[0].mxu0
        %v3095 = vadd.f32 %v2655, %v3094
        %3096 = vdwg.mxu0
        %3097 = vmatprep.subr.bf16.mxu0 %v2322
        %3098 = vmatpush1.bf16.msra.mxu0 %v2321
        %3099 = vmatprep.subr.bf16.mxu0 0
        %3100 = vmatpush1.bf16.msra.mxu0 0
        %3101 = vmatprep.subr.bf16.mxu0 0
        %3102 = vmatpush1.bf16.msra.mxu0 0
        %3103 = vmatprep.subr.bf16.mxu0 0
        %3104 = vmatpush1.bf16.msra.mxu0 0
        %3105 = vmatprep.subr.bf16.mxu0 0
        %3106 = vmatpush1.bf16.msra.mxu0 0
        %3107 = vmatprep.subr.bf16.mxu0 0
        %3108 = vmatpush1.bf16.msra.mxu0 0
        %3109 = vmatprep.subr.bf16.mxu0 0
        %3110 = vmatpush1.bf16.msra.mxu0 0
        %3111 = vmatprep.subr.bf16.mxu0 0
        %3112 = vmatpush1.bf16.msra.mxu0 0
        %3113 = vmatprep.subr.bf16.mxu0 0
        %3114 = vmatpush1.bf16.msra.mxu0 0
        %3115 = vmatprep.subr.bf16.mxu0 0
        %3116 = vmatpush1.bf16.msra.mxu0 0
        %3117 = vmatprep.subr.bf16.mxu0 0
        %3118 = vmatpush1.bf16.msra.mxu0 0
        %3119 = vmatprep.subr.bf16.mxu0 0
        %3120 = vmatpush1.bf16.msra.mxu0 0
        %3121 = vmatprep.subr.bf16.mxu0 0
        %3122 = vmatpush1.bf16.msra.mxu0 0
        %3123 = vmatprep.subr.bf16.mxu0 0
        %3124 = vmatpush1.bf16.msra.mxu0 0
        %3125 = vmatprep.subr.bf16.mxu0 0
        %3126 = vmatpush1.bf16.msra.mxu0 0
        %3127 = vmatprep.subr.bf16.mxu0 0
        %3128 = vmatpush1.bf16.msra.mxu0 0
        %3129 = vmatprep.mubr.bf16.mxu0 0
        %3130 = vmatmul.mubr.bf16.gmra.mrb[0].mxu0 %v2880
        %v3131 = vpop.f32.mrb[0].mxu0
        %v3132 = vadd.f32 %v2692, %v3131
        %v3133 = vpop.f32.mrb[0].mxu0
        %v3134 = vadd.f32 %v2694, %v3133
        %v3135 = vpop.f32.mrb[0].mxu0
        %v3136 = vadd.f32 %v2696, %v3135
        %v3137 = vpop.f32.mrb[0].mxu0
        %v3138 = vadd.f32 %v2698, %v3137
        %3139 = vmatprep.mubr.bf16.mxu0 0
        %3140 = vmatmul.mubr.bf16.gmra.mrb[0].mxu0 %v2883
        %v3141 = vpop.f32.mrb[0].mxu0
        %v3142 = vadd.f32 %v2702, %v3141
        %v3143 = vpop.f32.mrb[0].mxu0
        %v3144 = vadd.f32 %v2704, %v3143
        %v3145 = vpop.f32.mrb[0].mxu0
        %v3146 = vadd.f32 %v2706, %v3145
        %v3147 = vpop.f32.mrb[0].mxu0
        %v3148 = vadd.f32 %v2708, %v3147
        %3149 = vdwg.mxu0
        %3150 = vmatprep.subr.bf16.mxu0 %v2324
        %3151 = vmatpush1.bf16.msra.mxu0 %v2323
        %3152 = vmatprep.subr.bf16.mxu0 0
        %3153 = vmatpush1.bf16.msra.mxu0 0
        %3154 = vmatprep.subr.bf16.mxu0 0
        %3155 = vmatpush1.bf16.msra.mxu0 0
        %3156 = vmatprep.subr.bf16.mxu0 0
        %3157 = vmatpush1.bf16.msra.mxu0 0
        %3158 = vmatprep.subr.bf16.mxu0 0
        %3159 = vmatpush1.bf16.msra.mxu0 0
        %3160 = vmatprep.subr.bf16.mxu0 0
        %3161 = vmatpush1.bf16.msra.mxu0 0
        %3162 = vmatprep.subr.bf16.mxu0 0
        %3163 = vmatpush1.bf16.msra.mxu0 0
        %3164 = vmatprep.subr.bf16.mxu0 0
        %3165 = vmatpush1.bf16.msra.mxu0 0
        %3166 = vmatprep.subr.bf16.mxu0 0
        %3167 = vmatpush1.bf16.msra.mxu0 0
        %3168 = vmatprep.subr.bf16.mxu0 0
        %3169 = vmatpush1.bf16.msra.mxu0 0
        %3170 = vmatprep.subr.bf16.mxu0 0
        %3171 = vmatpush1.bf16.msra.mxu0 0
        %3172 = vmatprep.subr.bf16.mxu0 0
        %3173 = vmatpush1.bf16.msra.mxu0 0
        %3174 = vmatprep.subr.bf16.mxu0 0
        %3175 = vmatpush1.bf16.msra.mxu0 0
        %3176 = vmatprep.subr.bf16.mxu0 0
        %3177 = vmatpush1.bf16.msra.mxu0 0
        %3178 = vmatprep.subr.bf16.mxu0 0
        %3179 = vmatpush1.bf16.msra.mxu0 0
        %3180 = vmatprep.subr.bf16.mxu0 0
        %3181 = vmatpush1.bf16.msra.mxu0 0
        %3182 = vmatprep.mubr.bf16.mxu0 0
        %3183 = vmatmul.mubr.bf16.gmra.mrb[0].mxu0 %v2880
        %v3184 = vpop.f32.mrb[0].mxu0
        %v3185 = vadd.f32 %v2745, %v3184
        %v3186 = vpop.f32.mrb[0].mxu0
        %v3187 = vadd.f32 %v2747, %v3186
        %v3188 = vpop.f32.mrb[0].mxu0
        %v3189 = vadd.f32 %v2749, %v3188
        %v3190 = vpop.f32.mrb[0].mxu0
        %v3191 = vadd.f32 %v2751, %v3190
        %3192 = vmatprep.mubr.bf16.mxu0 0
        %3193 = vmatmul.mubr.bf16.gmra.mrb[0].mxu0 %v2883
        %v3194 = vpop.f32.mrb[0].mxu0
        %v3195 = vadd.f32 %v2755, %v3194
        %v3196 = vpop.f32.mrb[0].mxu0
        %v3197 = vadd.f32 %v2757, %v3196
        %v3198 = vpop.f32.mrb[0].mxu0
        %v3199 = vadd.f32 %v2759, %v3198
        %v3200 = vpop.f32.mrb[0].mxu0
        %v3201 = vadd.f32 %v2761, %v3200
        %3202 = vdwg.mxu0
        %3203 = vmatprep.subr.bf16.mxu0 %v2326
        %3204 = vmatpush1.bf16.msra.mxu0 %v2325
        %3205 = vmatprep.subr.bf16.mxu0 0
        %3206 = vmatpush1.bf16.msra.mxu0 0
        %3207 = vmatprep.subr.bf16.mxu0 0
        %3208 = vmatpush1.bf16.msra.mxu0 0
        %3209 = vmatprep.subr.bf16.mxu0 0
        %3210 = vmatpush1.bf16.msra.mxu0 0
        %3211 = vmatprep.subr.bf16.mxu0 0
        %3212 = vmatpush1.bf16.msra.mxu0 0
        %3213 = vmatprep.subr.bf16.mxu0 0
        %3214 = vmatpush1.bf16.msra.mxu0 0
        %3215 = vmatprep.subr.bf16.mxu0 0
        %3216 = vmatpush1.bf16.msra.mxu0 0
        %3217 = vmatprep.subr.bf16.mxu0 0
        %3218 = vmatpush1.bf16.msra.mxu0 0
        %3219 = vmatprep.subr.bf16.mxu0 0
        %3220 = vmatpush1.bf16.msra.mxu0 0
        %3221 = vmatprep.subr.bf16.mxu0 0
        %3222 = vmatpush1.bf16.msra.mxu0 0
        %3223 = vmatprep.subr.bf16.mxu0 0
        %3224 = vmatpush1.bf16.msra.mxu0 0
        %3225 = vmatprep.subr.bf16.mxu0 0
        %3226 = vmatpush1.bf16.msra.mxu0 0
        %3227 = vmatprep.subr.bf16.mxu0 0
        %3228 = vmatpush1.bf16.msra.mxu0 0
        %3229 = vmatprep.subr.bf16.mxu0 0
        %3230 = vmatpush1.bf16.msra.mxu0 0
        %3231 = vmatprep.subr.bf16.mxu0 0
        %3232 = vmatpush1.bf16.msra.mxu0 0
        %3233 = vmatprep.subr.bf16.mxu0 0
        %3234 = vmatpush1.bf16.msra.mxu0 0
        %3235 = vmatprep.mubr.bf16.mxu0 0
        %3236 = vmatmul.mubr.bf16.gmra.mrb[0].mxu0 %v2880
        %v3237 = vpop.f32.mrb[0].mxu0
        %v3238 = vadd.f32 %v2798, %v3237
        %v3239 = vpop.f32.mrb[0].mxu0
        %v3240 = vadd.f32 %v2800, %v3239
        %v3241 = vpop.f32.mrb[0].mxu0
        %v3242 = vadd.f32 %v2802, %v3241
        %v3243 = vpop.f32.mrb[0].mxu0
        %v3244 = vadd.f32 %v2804, %v3243
        %3245 = vmatprep.mubr.bf16.mxu0 0
        %3246 = vmatmul.mubr.bf16.gmra.mrb[0].mxu0 %v2883
        %v3247 = vpop.f32.mrb[0].mxu0
        %v3248 = vadd.f32 %v2808, %v3247
        %v3249 = vpop.f32.mrb[0].mxu0
        %v3250 = vadd.f32 %v2810, %v3249
        %v3251 = vpop.f32.mrb[0].mxu0
        %v3252 = vadd.f32 %v2812, %v3251
        %v3253 = vpop.f32.mrb[0].mxu0
        %v3254 = vadd.f32 %v2814, %v3253
        %3255 = vdwg.mxu0
        %3256 = vmatprep.subr.bf16.mxu0 %v2328
        %3257 = vmatpush1.bf16.msra.mxu0 %v2327
        %3258 = vmatprep.subr.bf16.mxu0 0
        %3259 = vmatpush1.bf16.msra.mxu0 0
        %3260 = vmatprep.subr.bf16.mxu0 0
        %3261 = vmatpush1.bf16.msra.mxu0 0
        %3262 = vmatprep.subr.bf16.mxu0 0
        %3263 = vmatpush1.bf16.msra.mxu0 0
        %3264 = vmatprep.subr.bf16.mxu0 0
        %3265 = vmatpush1.bf16.msra.mxu0 0
        %3266 = vmatprep.subr.bf16.mxu0 0
        %3267 = vmatpush1.bf16.msra.mxu0 0
        %3268 = vmatprep.subr.bf16.mxu0 0
        %3269 = vmatpush1.bf16.msra.mxu0 0
        %3270 = vmatprep.subr.bf16.mxu0 0
        %3271 = vmatpush1.bf16.msra.mxu0 0
        %3272 = vmatprep.subr.bf16.mxu0 0
        %3273 = vmatpush1.bf16.msra.mxu0 0
        %3274 = vmatprep.subr.bf16.mxu0 0
        %3275 = vmatpush1.bf16.msra.mxu0 0
        %3276 = vmatprep.subr.bf16.mxu0 0
        %3277 = vmatpush1.bf16.msra.mxu0 0
        %3278 = vmatprep.subr.bf16.mxu0 0
        %3279 = vmatpush1.bf16.msra.mxu0 0
        %3280 = vmatprep.subr.bf16.mxu0 0
        %3281 = vmatpush1.bf16.msra.mxu0 0
        %3282 = vmatprep.subr.bf16.mxu0 0
        %3283 = vmatpush1.bf16.msra.mxu0 0
        %3284 = vmatprep.subr.bf16.mxu0 0
        %3285 = vmatpush1.bf16.msra.mxu0 0
        %3286 = vmatprep.subr.bf16.mxu0 0
        %3287 = vmatpush1.bf16.msra.mxu0 0
        %3288 = vmatprep.mubr.bf16.mxu0 0
        %3289 = vmatmul.mubr.bf16.gmra.mrb[0].mxu0 %v2880
        %v3290 = vpop.f32.mrb[0].mxu0
        %v3291 = vadd.f32 %v2851, %v3290
        %v3292 = vpop.f32.mrb[0].mxu0
        %v3293 = vadd.f32 %v2853, %v3292
        %v3294 = vpop.f32.mrb[0].mxu0
        %v3295 = vadd.f32 %v2855, %v3294
        %v3296 = vpop.f32.mrb[0].mxu0
        %v3297 = vadd.f32 %v2857, %v3296
        %3298 = vmatprep.mubr.bf16.mxu0 0
        %3299 = vmatmul.mubr.bf16.gmra.mrb[0].mxu0 %v2883
        %v3300 = vpop.f32.mrb[0].mxu0
        %v3301 = vadd.f32 %v2861, %v3300
        %v3302 = vpop.f32.mrb[0].mxu0
        %v3303 = vadd.f32 %v2863, %v3302
        %v3304 = vpop.f32.mrb[0].mxu0
        %v3305 = vadd.f32 %v2865, %v3304
        %v3306 = vpop.f32.mrb[0].mxu0
        %v3307 = vadd.f32 %v2867, %v3306
        %3308 = vdwg.mxu0
        %v3309 = vld [vmem:[%s11] sm:$0xff]
        %v3310 = vld [vmem:[%s11 + $0x8] sm:$0xff]
        %v3311 = vld [vmem:[%s11 + $0x10] sm:$0xff]
        %v3312 = vld [vmem:[%s11 + $0x18] sm:$0xff]
        %3314 = vset.pattern.permute.xlu0 0
        %3315 = vperm.xlu0 %3314, %v3309
        %v3316 = vpop.permute.xlu0 %3315
        %3319 = vset.pattern.permute.xlu0 0
        %3320 = vperm.xlu0 %3319, %v3310
        %v3321 = vpop.permute.xlu0 %3320
        %3324 = vset.pattern.permute.xlu0 0
        %3325 = vperm.xlu0 %3324, %v3311
        %v3326 = vpop.permute.xlu0 %3325
        %3329 = vset.pattern.permute.xlu0 0
        %3330 = vperm.xlu0 %3329, %v3312
        %v3331 = vpop.permute.xlu0 %3330
        %v3333 = vadd.f32 %v2920, %v3316
        %v3334 = vadd.f32 %v2922, %v3316
        %v3335 = vadd.f32 %v2973, %v3316
        %v3336 = vadd.f32 %v2975, %v3316
        %v3337 = vadd.f32 %v3026, %v3316
        %v3338 = vadd.f32 %v3028, %v3316
        %v3339 = vadd.f32 %v3079, %v3316
        %v3340 = vadd.f32 %v3081, %v3316
        %v3341 = vadd.f32 %v3132, %v3316
        %v3342 = vadd.f32 %v3134, %v3316
        %v3343 = vadd.f32 %v3185, %v3316
        %v3344 = vadd.f32 %v3187, %v3316
        %v3345 = vadd.f32 %v3238, %v3316
        %v3346 = vadd.f32 %v3240, %v3316
        %v3347 = vadd.f32 %v3291, %v3316
        %v3348 = vadd.f32 %v3293, %v3316
        %v3349 = vadd.f32 %v2924, %v3321
        %v3350 = vadd.f32 %v2926, %v3321
        %v3351 = vadd.f32 %v2977, %v3321
        %v3352 = vadd.f32 %v2979, %v3321
        %v3353 = vadd.f32 %v3030, %v3321
        %v3354 = vadd.f32 %v3032, %v3321
        %v3355 = vadd.f32 %v3083, %v3321
        %v3356 = vadd.f32 %v3085, %v3321
        %v3357 = vadd.f32 %v3136, %v3321
        %v3358 = vadd.f32 %v3138, %v3321
        %v3359 = vadd.f32 %v3189, %v3321
        %v3360 = vadd.f32 %v3191, %v3321
        %v3361 = vadd.f32 %v3242, %v3321
        %v3362 = vadd.f32 %v3244, %v3321
        %v3363 = vadd.f32 %v3295, %v3321
        %v3364 = vadd.f32 %v3297, %v3321
        %v3365 = vadd.f32 %v2930, %v3326
        %v3366 = vadd.f32 %v2932, %v3326
        %v3367 = vadd.f32 %v2983, %v3326
        %v3368 = vadd.f32 %v2985, %v3326
        %v3369 = vadd.f32 %v3036, %v3326
        %v3370 = vadd.f32 %v3038, %v3326
        %v3371 = vadd.f32 %v3089, %v3326
        %v3372 = vadd.f32 %v3091, %v3326
        %v3373 = vadd.f32 %v3142, %v3326
        %v3374 = vadd.f32 %v3144, %v3326
        %v3375 = vadd.f32 %v3195, %v3326
        %v3376 = vadd.f32 %v3197, %v3326
        %v3377 = vadd.f32 %v3248, %v3326
        %v3378 = vadd.f32 %v3250, %v3326
        %v3379 = vadd.f32 %v3301, %v3326
        %v3380 = vadd.f32 %v3303, %v3326
        %v3381 = vadd.f32 %v2934, %v3331
        %v3382 = vadd.f32 %v2936, %v3331
        %v3383 = vadd.f32 %v2987, %v3331
        %v3384 = vadd.f32 %v2989, %v3331
        %v3385 = vadd.f32 %v3040, %v3331
        %v3386 = vadd.f32 %v3042, %v3331
        %v3387 = vadd.f32 %v3093, %v3331
        %v3388 = vadd.f32 %v3095, %v3331
        %v3389 = vadd.f32 %v3146, %v3331
        %v3390 = vadd.f32 %v3148, %v3331
        %v3391 = vadd.f32 %v3199, %v3331
        %v3392 = vadd.f32 %v3201, %v3331
        %v3393 = vadd.f32 %v3252, %v3331
        %v3394 = vadd.f32 %v3254, %v3331
        %v3395 = vadd.f32 %v3305, %v3331
        %v3396 = vadd.f32 %v3307, %v3331
        %v3397 = vmax.f32 %v3333, 0.0
        %v3398 = vmax.f32 %v3334, 0.0
        %v3399 = vmax.f32 %v3335, 0.0
        %v3400 = vmax.f32 %v3336, 0.0
        %v3401 = vmax.f32 %v3337, 0.0
        %v3402 = vmax.f32 %v3338, 0.0
        %v3403 = vmax.f32 %v3339, 0.0
        %v3404 = vmax.f32 %v3340, 0.0
        %v3405 = vmax.f32 %v3341, 0.0
        %v3406 = vmax.f32 %v3342, 0.0
        %v3407 = vmax.f32 %v3343, 0.0
        %v3408 = vmax.f32 %v3344, 0.0
        %v3409 = vmax.f32 %v3345, 0.0
        %v3410 = vmax.f32 %v3346, 0.0
        %v3411 = vmax.f32 %v3347, 0.0
        %v3412 = vmax.f32 %v3348, 0.0
        %v3413 = vmax.f32 %v3349, 0.0
        %v3414 = vmax.f32 %v3350, 0.0
        %v3415 = vmax.f32 %v3351, 0.0
        %v3416 = vmax.f32 %v3352, 0.0
        %v3417 = vmax.f32 %v3353, 0.0
        %v3418 = vmax.f32 %v3354, 0.0
        %v3419 = vmax.f32 %v3355, 0.0
        %v3420 = vmax.f32 %v3356, 0.0
        %v3421 = vmax.f32 %v3357, 0.0
        %v3422 = vmax.f32 %v3358, 0.0
        %v3423 = vmax.f32 %v3359, 0.0
        %v3424 = vmax.f32 %v3360, 0.0
        %v3425 = vmax.f32 %v3361, 0.0
        %v3426 = vmax.f32 %v3362, 0.0
        %v3427 = vmax.f32 %v3363, 0.0
        %v3428 = vmax.f32 %v3364, 0.0
        %v3429 = vmax.f32 %v3365, 0.0
        %v3430 = vmax.f32 %v3366, 0.0
        %v3431 = vmax.f32 %v3367, 0.0
        %v3432 = vmax.f32 %v3368, 0.0
        %v3433 = vmax.f32 %v3369, 0.0
        %v3434 = vmax.f32 %v3370, 0.0
        %v3435 = vmax.f32 %v3371, 0.0
        %v3436 = vmax.f32 %v3372, 0.0
        %v3437 = vmax.f32 %v3373, 0.0
        %v3438 = vmax.f32 %v3374, 0.0
        %v3439 = vmax.f32 %v3375, 0.0
        %v3440 = vmax.f32 %v3376, 0.0
        %v3441 = vmax.f32 %v3377, 0.0
        %v3442 = vmax.f32 %v3378, 0.0
        %v3443 = vmax.f32 %v3379, 0.0
        %v3444 = vmax.f32 %v3380, 0.0
        %v3445 = vmax.f32 %v3381, 0.0
        %v3446 = vmax.f32 %v3382, 0.0
        %v3447 = vmax.f32 %v3383, 0.0
        %v3448 = vmax.f32 %v3384, 0.0
        %v3449 = vmax.f32 %v3385, 0.0
        %v3450 = vmax.f32 %v3386, 0.0
        %v3451 = vmax.f32 %v3387, 0.0
        %v3452 = vmax.f32 %v3388, 0.0
        %v3453 = vmax.f32 %v3389, 0.0
        %v3454 = vmax.f32 %v3390, 0.0
        %v3455 = vmax.f32 %v3391, 0.0
        %v3456 = vmax.f32 %v3392, 0.0
        %v3457 = vmax.f32 %v3393, 0.0
        %v3458 = vmax.f32 %v3394, 0.0
        %v3459 = vmax.f32 %v3395, 0.0
        %v3460 = vmax.f32 %v3396, 0.0
        %v3461 = vpack.c.bf16 %v3413, %v3397
        %v3462 = vpack.c.bf16 %v3414, %v3398
        %v3463 = vpack.c.bf16 %v3415, %v3399
        %v3464 = vpack.c.bf16 %v3416, %v3400
        %v3465 = vpack.c.bf16 %v3417, %v3401
        %v3466 = vpack.c.bf16 %v3418, %v3402
        %v3467 = vpack.c.bf16 %v3419, %v3403
        %v3468 = vpack.c.bf16 %v3420, %v3404
        %v3469 = vpack.c.bf16 %v3421, %v3405
        %v3470 = vpack.c.bf16 %v3422, %v3406
        %v3471 = vpack.c.bf16 %v3423, %v3407
        %v3472 = vpack.c.bf16 %v3424, %v3408
        %v3473 = vpack.c.bf16 %v3425, %v3409
        %v3474 = vpack.c.bf16 %v3426, %v3410
        %v3475 = vpack.c.bf16 %v3427, %v3411
        %v3476 = vpack.c.bf16 %v3428, %v3412
        %v3477 = vpack.c.bf16 %v3445, %v3429
        %v3478 = vpack.c.bf16 %v3446, %v3430
        %v3479 = vpack.c.bf16 %v3447, %v3431
        %v3480 = vpack.c.bf16 %v3448, %v3432
        %v3481 = vpack.c.bf16 %v3449, %v3433
        %v3482 = vpack.c.bf16 %v3450, %v3434
        %v3483 = vpack.c.bf16 %v3451, %v3435
        %v3484 = vpack.c.bf16 %v3452, %v3436
        %v3485 = vpack.c.bf16 %v3453, %v3437
        %v3486 = vpack.c.bf16 %v3454, %v3438
        %v3487 = vpack.c.bf16 %v3455, %v3439
        %v3488 = vpack.c.bf16 %v3456, %v3440
        %v3489 = vpack.c.bf16 %v3457, %v3441
        %v3490 = vpack.c.bf16 %v3458, %v3442
        %v3491 = vpack.c.bf16 %v3459, %v3443
        %v3492 = vpack.c.bf16 %v3460, %v3444
        %v3493 = vld [vmem:[%s12] sm:$0xf]
        %v3494 = vld [vmem:[%s12 + $0x4] sm:$0xf]
        %v3495 = vld [vmem:[%s12 + $0x8] sm:$0xf]
        %v3496 = vld [vmem:[%s12 + $0xc] sm:$0xf]
        %v3497 = vld [vmem:[%s13] sm:$0xff]
        %v3498 = vld [vmem:[%s13 + $0x8] sm:$0xff]
        %v3499 = vld [vmem:[%s13 + $0x10] sm:$0xff]
        %v3500 = vld [vmem:[%s13 + $0x18] sm:$0xff]
        %3502 = vset.pattern.permute.xlu0 0
        %3503 = vperm.xlu0 %3502, %v3497
        %v3504 = vpop.permute.xlu0 %3503
        %3507 = vset.pattern.permute.xlu0 0
        %3508 = vperm.xlu0 %3507, %v3498
        %v3509 = vpop.permute.xlu0 %3508
        %3512 = vset.pattern.permute.xlu0 0
        %3513 = vperm.xlu0 %3512, %v3499
        %v3514 = vpop.permute.xlu0 %3513
        %3517 = vset.pattern.permute.xlu0 0
        %3518 = vperm.xlu0 %3517, %v3500
        %v3519 = vpop.permute.xlu0 %3518
        %v3525 = vunpack.c.l.b16 %v3493
        %v3526 = vunpack.c.l.b16 %v3494
        %v3527 = vunpack.c.l.b16 %v3495
        %v3528 = vunpack.c.l.b16 %v3496
        %v3529 = vpack.c.b16 %v3526, %v3525
        %v3530 = vpack.c.b16 %v3528, %v3527
        %v3532 = vsel %vm1400, %v3529, 0
        %v3535 = vsel %vm1400, %v3530, 0
        %3537 = vmatprep.subr.bf16.mxu0 %v3462
        %3538 = vmatpush1.bf16.msra.mxu0 %v3461
        %3539 = vmatprep.subr.bf16.mxu0 %v3478
        %3540 = vmatpush1.bf16.msra.mxu0 %v3477
        %3541 = vmatprep.subr.bf16.mxu0 0
        %3542 = vmatpush1.bf16.msra.mxu0 0
        %3543 = vmatprep.subr.bf16.mxu0 0
        %3544 = vmatpush1.bf16.msra.mxu0 0
        %3545 = vmatprep.subr.bf16.mxu0 0
        %3546 = vmatpush1.bf16.msra.mxu0 0
        %3547 = vmatprep.subr.bf16.mxu0 0
        %3548 = vmatpush1.bf16.msra.mxu0 0
        %3549 = vmatprep.subr.bf16.mxu0 0
        %3550 = vmatpush1.bf16.msra.mxu0 0
        %3551 = vmatprep.subr.bf16.mxu0 0
        %3552 = vmatpush1.bf16.msra.mxu0 0
        %3553 = vmatprep.subr.bf16.mxu0 0
        %3554 = vmatpush1.bf16.msra.mxu0 0
        %3555 = vmatprep.subr.bf16.mxu0 0
        %3556 = vmatpush1.bf16.msra.mxu0 0
        %3557 = vmatprep.subr.bf16.mxu0 0
        %3558 = vmatpush1.bf16.msra.mxu0 0
        %3559 = vmatprep.subr.bf16.mxu0 0
        %3560 = vmatpush1.bf16.msra.mxu0 0
        %3561 = vmatprep.subr.bf16.mxu0 0
        %3562 = vmatpush1.bf16.msra.mxu0 0
        %3563 = vmatprep.subr.bf16.mxu0 0
        %3564 = vmatpush1.bf16.msra.mxu0 0
        %3565 = vmatprep.subr.bf16.mxu0 0
        %3566 = vmatpush1.bf16.msra.mxu0 0
        %3567 = vmatprep.subr.bf16.mxu0 0
        %3568 = vmatpush1.bf16.msra.mxu0 0
        %3569 = vmatprep.mubr.bf16.mxu0 0
        %3570 = vmatmul.mubr.bf16.gmra.mrb[0].mxu0 %v3532
        %v3571 = vpop.f32.mrb[0].mxu0
        %v3572 = vadd.f32 %v3504, %v3571
        %v3573 = vpop.f32.mrb[0].mxu0
        %v3574 = vadd.f32 %v3504, %v3573
        %v3575 = vpop.f32.mrb[0].mxu0
        %v3576 = vadd.f32 %v3509, %v3575
        %v3577 = vpop.f32.mrb[0].mxu0
        %v3578 = vadd.f32 %v3509, %v3577
        %3579 = vmatprep.mubr.bf16.mxu0 0
        %3580 = vmatmul.mubr.bf16.gmra.mrb[0].mxu0 %v3535
        %v3581 = vpop.f32.mrb[0].mxu0
        %v3582 = vadd.f32 %v3514, %v3581
        %v3583 = vpop.f32.mrb[0].mxu0
        %v3584 = vadd.f32 %v3514, %v3583
        %v3585 = vpop.f32.mrb[0].mxu0
        %v3586 = vadd.f32 %v3519, %v3585
        %v3587 = vpop.f32.mrb[0].mxu0
        %v3588 = vadd.f32 %v3519, %v3587
        %3589 = vdwg.mxu0
        %3590 = vmatprep.subr.bf16.mxu0 %v3464
        %3591 = vmatpush1.bf16.msra.mxu0 %v3463
        %3592 = vmatprep.subr.bf16.mxu0 %v3480
        %3593 = vmatpush1.bf16.msra.mxu0 %v3479
        %3594 = vmatprep.subr.bf16.mxu0 0
        %3595 = vmatpush1.bf16.msra.mxu0 0
        %3596 = vmatprep.subr.bf16.mxu0 0
        %3597 = vmatpush1.bf16.msra.mxu0 0
        %3598 = vmatprep.subr.bf16.mxu0 0
        %3599 = vmatpush1.bf16.msra.mxu0 0
        %3600 = vmatprep.subr.bf16.mxu0 0
        %3601 = vmatpush1.bf16.msra.mxu0 0
        %3602 = vmatprep.subr.bf16.mxu0 0
        %3603 = vmatpush1.bf16.msra.mxu0 0
        %3604 = vmatprep.subr.bf16.mxu0 0
        %3605 = vmatpush1.bf16.msra.mxu0 0
        %3606 = vmatprep.subr.bf16.mxu0 0
        %3607 = vmatpush1.bf16.msra.mxu0 0
        %3608 = vmatprep.subr.bf16.mxu0 0
        %3609 = vmatpush1.bf16.msra.mxu0 0
        %3610 = vmatprep.subr.bf16.mxu0 0
        %3611 = vmatpush1.bf16.msra.mxu0 0
        %3612 = vmatprep.subr.bf16.mxu0 0
        %3613 = vmatpush1.bf16.msra.mxu0 0
        %3614 = vmatprep.subr.bf16.mxu0 0
        %3615 = vmatpush1.bf16.msra.mxu0 0
        %3616 = vmatprep.subr.bf16.mxu0 0
        %3617 = vmatpush1.bf16.msra.mxu0 0
        %3618 = vmatprep.subr.bf16.mxu0 0
        %3619 = vmatpush1.bf16.msra.mxu0 0
        %3620 = vmatprep.subr.bf16.mxu0 0
        %3621 = vmatpush1.bf16.msra.mxu0 0
        %3622 = vmatprep.mubr.bf16.mxu0 0
        %3623 = vmatmul.mubr.bf16.gmra.mrb[0].mxu0 %v3532
        %v3624 = vpop.f32.mrb[0].mxu0
        %v3625 = vadd.f32 %v3504, %v3624
        %v3626 = vpop.f32.mrb[0].mxu0
        %v3627 = vadd.f32 %v3504, %v3626
        %v3628 = vpop.f32.mrb[0].mxu0
        %v3629 = vadd.f32 %v3509, %v3628
        %v3630 = vpop.f32.mrb[0].mxu0
        %v3631 = vadd.f32 %v3509, %v3630
        %3632 = vmatprep.mubr.bf16.mxu0 0
        %3633 = vmatmul.mubr.bf16.gmra.mrb[0].mxu0 %v3535
        %v3634 = vpop.f32.mrb[0].mxu0
        %v3635 = vadd.f32 %v3514, %v3634
        %v3636 = vpop.f32.mrb[0].mxu0
        %v3637 = vadd.f32 %v3514, %v3636
        %v3638 = vpop.f32.mrb[0].mxu0
        %v3639 = vadd.f32 %v3519, %v3638
        %v3640 = vpop.f32.mrb[0].mxu0
        %v3641 = vadd.f32 %v3519, %v3640
        %3642 = vdwg.mxu0
        %3643 = vmatprep.subr.bf16.mxu0 %v3466
        %3644 = vmatpush1.bf16.msra.mxu0 %v3465
        %3645 = vmatprep.subr.bf16.mxu0 %v3482
        %3646 = vmatpush1.bf16.msra.mxu0 %v3481
        %3647 = vmatprep.subr.bf16.mxu0 0
        %3648 = vmatpush1.bf16.msra.mxu0 0
        %3649 = vmatprep.subr.bf16.mxu0 0
        %3650 = vmatpush1.bf16.msra.mxu0 0
        %3651 = vmatprep.subr.bf16.mxu0 0
        %3652 = vmatpush1.bf16.msra.mxu0 0
        %3653 = vmatprep.subr.bf16.mxu0 0
        %3654 = vmatpush1.bf16.msra.mxu0 0
        %3655 = vmatprep.subr.bf16.mxu0 0
        %3656 = vmatpush1.bf16.msra.mxu0 0
        %3657 = vmatprep.subr.bf16.mxu0 0
        %3658 = vmatpush1.bf16.msra.mxu0 0
        %3659 = vmatprep.subr.bf16.mxu0 0
        %3660 = vmatpush1.bf16.msra.mxu0 0
        %3661 = vmatprep.subr.bf16.mxu0 0
        %3662 = vmatpush1.bf16.msra.mxu0 0
        %3663 = vmatprep.subr.bf16.mxu0 0
        %3664 = vmatpush1.bf16.msra.mxu0 0
        %3665 = vmatprep.subr.bf16.mxu0 0
        %3666 = vmatpush1.bf16.msra.mxu0 0
        %3667 = vmatprep.subr.bf16.mxu0 0
        %3668 = vmatpush1.bf16.msra.mxu0 0
        %3669 = vmatprep.subr.bf16.mxu0 0
        %3670 = vmatpush1.bf16.msra.mxu0 0
        %3671 = vmatprep.subr.bf16.mxu0 0
        %3672 = vmatpush1.bf16.msra.mxu0 0
        %3673 = vmatprep.subr.bf16.mxu0 0
        %3674 = vmatpush1.bf16.msra.mxu0 0
        %3675 = vmatprep.mubr.bf16.mxu0 0
        %3676 = vmatmul.mubr.bf16.gmra.mrb[0].mxu0 %v3532
        %v3677 = vpop.f32.mrb[0].mxu0
        %v3678 = vadd.f32 %v3504, %v3677
        %v3679 = vpop.f32.mrb[0].mxu0
        %v3680 = vadd.f32 %v3504, %v3679
        %v3681 = vpop.f32.mrb[0].mxu0
        %v3682 = vadd.f32 %v3509, %v3681
        %v3683 = vpop.f32.mrb[0].mxu0
        %v3684 = vadd.f32 %v3509, %v3683
        %3685 = vmatprep.mubr.bf16.mxu0 0
        %3686 = vmatmul.mubr.bf16.gmra.mrb[0].mxu0 %v3535
        %v3687 = vpop.f32.mrb[0].mxu0
        %v3688 = vadd.f32 %v3514, %v3687
        %v3689 = vpop.f32.mrb[0].mxu0
        %v3690 = vadd.f32 %v3514, %v3689
        %v3691 = vpop.f32.mrb[0].mxu0
        %v3692 = vadd.f32 %v3519, %v3691
        %v3693 = vpop.f32.mrb[0].mxu0
        %v3694 = vadd.f32 %v3519, %v3693
        %3695 = vdwg.mxu0
        %3696 = vmatprep.subr.bf16.mxu0 %v3468
        %3697 = vmatpush1.bf16.msra.mxu0 %v3467
        %3698 = vmatprep.subr.bf16.mxu0 %v3484
        %3699 = vmatpush1.bf16.msra.mxu0 %v3483
        %3700 = vmatprep.subr.bf16.mxu0 0
        %3701 = vmatpush1.bf16.msra.mxu0 0
        %3702 = vmatprep.subr.bf16.mxu0 0
        %3703 = vmatpush1.bf16.msra.mxu0 0
        %3704 = vmatprep.subr.bf16.mxu0 0
        %3705 = vmatpush1.bf16.msra.mxu0 0
        %3706 = vmatprep.subr.bf16.mxu0 0
        %3707 = vmatpush1.bf16.msra.mxu0 0
        %3708 = vmatprep.subr.bf16.mxu0 0
        %3709 = vmatpush1.bf16.msra.mxu0 0
        %3710 = vmatprep.subr.bf16.mxu0 0
        %3711 = vmatpush1.bf16.msra.mxu0 0
        %3712 = vmatprep.subr.bf16.mxu0 0
        %3713 = vmatpush1.bf16.msra.mxu0 0
        %3714 = vmatprep.subr.bf16.mxu0 0
        %3715 = vmatpush1.bf16.msra.mxu0 0
        %3716 = vmatprep.subr.bf16.mxu0 0
        %3717 = vmatpush1.bf16.msra.mxu0 0
        %3718 = vmatprep.subr.bf16.mxu0 0
        %3719 = vmatpush1.bf16.msra.mxu0 0
        %3720 = vmatprep.subr.bf16.mxu0 0
        %3721 = vmatpush1.bf16.msra.mxu0 0
        %3722 = vmatprep.subr.bf16.mxu0 0
        %3723 = vmatpush1.bf16.msra.mxu0 0
        %3724 = vmatprep.subr.bf16.mxu0 0
        %3725 = vmatpush1.bf16.msra.mxu0 0
        %3726 = vmatprep.subr.bf16.mxu0 0
        %3727 = vmatpush1.bf16.msra.mxu0 0
        %3728 = vmatprep.mubr.bf16.mxu0 0
        %3729 = vmatmul.mubr.bf16.gmra.mrb[0].mxu0 %v3532
        %v3730 = vpop.f32.mrb[0].mxu0
        %v3731 = vadd.f32 %v3504, %v3730
        %v3732 = vpop.f32.mrb[0].mxu0
        %v3733 = vadd.f32 %v3504, %v3732
        %v3734 = vpop.f32.mrb[0].mxu0
        %v3735 = vadd.f32 %v3509, %v3734
        %v3736 = vpop.f32.mrb[0].mxu0
        %v3737 = vadd.f32 %v3509, %v3736
        %3738 = vmatprep.mubr.bf16.mxu0 0
        %3739 = vmatmul.mubr.bf16.gmra.mrb[0].mxu0 %v3535
        %v3740 = vpop.f32.mrb[0].mxu0
        %v3741 = vadd.f32 %v3514, %v3740
        %v3742 = vpop.f32.mrb[0].mxu0
        %v3743 = vadd.f32 %v3514, %v3742
        %v3744 = vpop.f32.mrb[0].mxu0
        %v3745 = vadd.f32 %v3519, %v3744
        %v3746 = vpop.f32.mrb[0].mxu0
        %v3747 = vadd.f32 %v3519, %v3746
        %3748 = vdwg.mxu0
        %3749 = vmatprep.subr.bf16.mxu0 %v3470
        %3750 = vmatpush1.bf16.msra.mxu0 %v3469
        %3751 = vmatprep.subr.bf16.mxu0 %v3486
        %3752 = vmatpush1.bf16.msra.mxu0 %v3485
        %3753 = vmatprep.subr.bf16.mxu0 0
        %3754 = vmatpush1.bf16.msra.mxu0 0
        %3755 = vmatprep.subr.bf16.mxu0 0
        %3756 = vmatpush1.bf16.msra.mxu0 0
        %3757 = vmatprep.subr.bf16.mxu0 0
        %3758 = vmatpush1.bf16.msra.mxu0 0
        %3759 = vmatprep.subr.bf16.mxu0 0
        %3760 = vmatpush1.bf16.msra.mxu0 0
        %3761 = vmatprep.subr.bf16.mxu0 0
        %3762 = vmatpush1.bf16.msra.mxu0 0
        %3763 = vmatprep.subr.bf16.mxu0 0
        %3764 = vmatpush1.bf16.msra.mxu0 0
        %3765 = vmatprep.subr.bf16.mxu0 0
        %3766 = vmatpush1.bf16.msra.mxu0 0
        %3767 = vmatprep.subr.bf16.mxu0 0
        %3768 = vmatpush1.bf16.msra.mxu0 0
        %3769 = vmatprep.subr.bf16.mxu0 0
        %3770 = vmatpush1.bf16.msra.mxu0 0
        %3771 = vmatprep.subr.bf16.mxu0 0
        %3772 = vmatpush1.bf16.msra.mxu0 0
        %3773 = vmatprep.subr.bf16.mxu0 0
        %3774 = vmatpush1.bf16.msra.mxu0 0
        %3775 = vmatprep.subr.bf16.mxu0 0
        %3776 = vmatpush1.bf16.msra.mxu0 0
        %3777 = vmatprep.subr.bf16.mxu0 0
        %3778 = vmatpush1.bf16.msra.mxu0 0
        %3779 = vmatprep.subr.bf16.mxu0 0
        %3780 = vmatpush1.bf16.msra.mxu0 0
        %3781 = vmatprep.mubr.bf16.mxu0 0
        %3782 = vmatmul.mubr.bf16.gmra.mrb[0].mxu0 %v3532
        %v3783 = vpop.f32.mrb[0].mxu0
        %v3784 = vadd.f32 %v3504, %v3783
        %v3785 = vpop.f32.mrb[0].mxu0
        %v3786 = vadd.f32 %v3504, %v3785
        %v3787 = vpop.f32.mrb[0].mxu0
        %v3788 = vadd.f32 %v3509, %v3787
        %v3789 = vpop.f32.mrb[0].mxu0
        %v3790 = vadd.f32 %v3509, %v3789
        %3791 = vmatprep.mubr.bf16.mxu0 0
        %3792 = vmatmul.mubr.bf16.gmra.mrb[0].mxu0 %v3535
        %v3793 = vpop.f32.mrb[0].mxu0
        %v3794 = vadd.f32 %v3514, %v3793
        %v3795 = vpop.f32.mrb[0].mxu0
        %v3796 = vadd.f32 %v3514, %v3795
        %v3797 = vpop.f32.mrb[0].mxu0
        %v3798 = vadd.f32 %v3519, %v3797
        %v3799 = vpop.f32.mrb[0].mxu0
        %v3800 = vadd.f32 %v3519, %v3799
        %3801 = vdwg.mxu0
        %3802 = vmatprep.subr.bf16.mxu0 %v3472
        %3803 = vmatpush1.bf16.msra.mxu0 %v3471
        %3804 = vmatprep.subr.bf16.mxu0 %v3488
        %3805 = vmatpush1.bf16.msra.mxu0 %v3487
        %3806 = vmatprep.subr.bf16.mxu0 0
        %3807 = vmatpush1.bf16.msra.mxu0 0
        %3808 = vmatprep.subr.bf16.mxu0 0
        %3809 = vmatpush1.bf16.msra.mxu0 0
        %3810 = vmatprep.subr.bf16.mxu0 0
        %3811 = vmatpush1.bf16.msra.mxu0 0
        %3812 = vmatprep.subr.bf16.mxu0 0
        %3813 = vmatpush1.bf16.msra.mxu0 0
        %3814 = vmatprep.subr.bf16.mxu0 0
        %3815 = vmatpush1.bf16.msra.mxu0 0
        %3816 = vmatprep.subr.bf16.mxu0 0
        %3817 = vmatpush1.bf16.msra.mxu0 0
        %3818 = vmatprep.subr.bf16.mxu0 0
        %3819 = vmatpush1.bf16.msra.mxu0 0
        %3820 = vmatprep.subr.bf16.mxu0 0
        %3821 = vmatpush1.bf16.msra.mxu0 0
        %3822 = vmatprep.subr.bf16.mxu0 0
        %3823 = vmatpush1.bf16.msra.mxu0 0
        %3824 = vmatprep.subr.bf16.mxu0 0
        %3825 = vmatpush1.bf16.msra.mxu0 0
        %3826 = vmatprep.subr.bf16.mxu0 0
        %3827 = vmatpush1.bf16.msra.mxu0 0
        %3828 = vmatprep.subr.bf16.mxu0 0
        %3829 = vmatpush1.bf16.msra.mxu0 0
        %3830 = vmatprep.subr.bf16.mxu0 0
        %3831 = vmatpush1.bf16.msra.mxu0 0
        %3832 = vmatprep.subr.bf16.mxu0 0
        %3833 = vmatpush1.bf16.msra.mxu0 0
        %3834 = vmatprep.mubr.bf16.mxu0 0
        %3835 = vmatmul.mubr.bf16.gmra.mrb[0].mxu0 %v3532
        %v3836 = vpop.f32.mrb[0].mxu0
        %v3837 = vadd.f32 %v3504, %v3836
        %v3838 = vpop.f32.mrb[0].mxu0
        %v3839 = vadd.f32 %v3504, %v3838
        %v3840 = vpop.f32.mrb[0].mxu0
        %v3841 = vadd.f32 %v3509, %v3840
        %v3842 = vpop.f32.mrb[0].mxu0
        %v3843 = vadd.f32 %v3509, %v3842
        %3844 = vmatprep.mubr.bf16.mxu0 0
        %3845 = vmatmul.mubr.bf16.gmra.mrb[0].mxu0 %v3535
        %v3846 = vpop.f32.mrb[0].mxu0
        %v3847 = vadd.f32 %v3514, %v3846
        %v3848 = vpop.f32.mrb[0].mxu0
        %v3849 = vadd.f32 %v3514, %v3848
        %v3850 = vpop.f32.mrb[0].mxu0
        %v3851 = vadd.f32 %v3519, %v3850
        %v3852 = vpop.f32.mrb[0].mxu0
        %v3853 = vadd.f32 %v3519, %v3852
        %3854 = vdwg.mxu0
        %3855 = vmatprep.subr.bf16.mxu0 %v3474
        %3856 = vmatpush1.bf16.msra.mxu0 %v3473
        %3857 = vmatprep.subr.bf16.mxu0 %v3490
        %3858 = vmatpush1.bf16.msra.mxu0 %v3489
        %3859 = vmatprep.subr.bf16.mxu0 0
        %3860 = vmatpush1.bf16.msra.mxu0 0
        %3861 = vmatprep.subr.bf16.mxu0 0
        %3862 = vmatpush1.bf16.msra.mxu0 0
        %3863 = vmatprep.subr.bf16.mxu0 0
        %3864 = vmatpush1.bf16.msra.mxu0 0
        %3865 = vmatprep.subr.bf16.mxu0 0
        %3866 = vmatpush1.bf16.msra.mxu0 0
        %3867 = vmatprep.subr.bf16.mxu0 0
        %3868 = vmatpush1.bf16.msra.mxu0 0
        %3869 = vmatprep.subr.bf16.mxu0 0
        %3870 = vmatpush1.bf16.msra.mxu0 0
        %3871 = vmatprep.subr.bf16.mxu0 0
        %3872 = vmatpush1.bf16.msra.mxu0 0
        %3873 = vmatprep.subr.bf16.mxu0 0
        %3874 = vmatpush1.bf16.msra.mxu0 0
        %3875 = vmatprep.subr.bf16.mxu0 0
        %3876 = vmatpush1.bf16.msra.mxu0 0
        %3877 = vmatprep.subr.bf16.mxu0 0
        %3878 = vmatpush1.bf16.msra.mxu0 0
        %3879 = vmatprep.subr.bf16.mxu0 0
        %3880 = vmatpush1.bf16.msra.mxu0 0
        %3881 = vmatprep.subr.bf16.mxu0 0
        %3882 = vmatpush1.bf16.msra.mxu0 0
        %3883 = vmatprep.subr.bf16.mxu0 0
        %3884 = vmatpush1.bf16.msra.mxu0 0
        %3885 = vmatprep.subr.bf16.mxu0 0
        %3886 = vmatpush1.bf16.msra.mxu0 0
        %3887 = vmatprep.mubr.bf16.mxu0 0
        %3888 = vmatmul.mubr.bf16.gmra.mrb[0].mxu0 %v3532
        %v3889 = vpop.f32.mrb[0].mxu0
        %v3890 = vadd.f32 %v3504, %v3889
        %v3891 = vpop.f32.mrb[0].mxu0
        %v3892 = vadd.f32 %v3504, %v3891
        %v3893 = vpop.f32.mrb[0].mxu0
        %v3894 = vadd.f32 %v3509, %v3893
        %v3895 = vpop.f32.mrb[0].mxu0
        %v3896 = vadd.f32 %v3509, %v3895
        %3897 = vmatprep.mubr.bf16.mxu0 0
        %3898 = vmatmul.mubr.bf16.gmra.mrb[0].mxu0 %v3535
        %v3899 = vpop.f32.mrb[0].mxu0
        %v3900 = vadd.f32 %v3514, %v3899
        %v3901 = vpop.f32.mrb[0].mxu0
        %v3902 = vadd.f32 %v3514, %v3901
        %v3903 = vpop.f32.mrb[0].mxu0
        %v3904 = vadd.f32 %v3519, %v3903
        %v3905 = vpop.f32.mrb[0].mxu0
        %v3906 = vadd.f32 %v3519, %v3905
        %3907 = vdwg.mxu0
        %3908 = vmatprep.subr.bf16.mxu0 %v3476
        %3909 = vmatpush1.bf16.msra.mxu0 %v3475
        %3910 = vmatprep.subr.bf16.mxu0 %v3492
        %3911 = vmatpush1.bf16.msra.mxu0 %v3491
        %3912 = vmatprep.subr.bf16.mxu0 0
        %3913 = vmatpush1.bf16.msra.mxu0 0
        %3914 = vmatprep.subr.bf16.mxu0 0
        %3915 = vmatpush1.bf16.msra.mxu0 0
        %3916 = vmatprep.subr.bf16.mxu0 0
        %3917 = vmatpush1.bf16.msra.mxu0 0
        %3918 = vmatprep.subr.bf16.mxu0 0
        %3919 = vmatpush1.bf16.msra.mxu0 0
        %3920 = vmatprep.subr.bf16.mxu0 0
        %3921 = vmatpush1.bf16.msra.mxu0 0
        %3922 = vmatprep.subr.bf16.mxu0 0
        %3923 = vmatpush1.bf16.msra.mxu0 0
        %3924 = vmatprep.subr.bf16.mxu0 0
        %3925 = vmatpush1.bf16.msra.mxu0 0
        %3926 = vmatprep.subr.bf16.mxu0 0
        %3927 = vmatpush1.bf16.msra.mxu0 0
        %3928 = vmatprep.subr.bf16.mxu0 0
        %3929 = vmatpush1.bf16.msra.mxu0 0
        %3930 = vmatprep.subr.bf16.mxu0 0
        %3931 = vmatpush1.bf16.msra.mxu0 0
        %3932 = vmatprep.subr.bf16.mxu0 0
        %3933 = vmatpush1.bf16.msra.mxu0 0
        %3934 = vmatprep.subr.bf16.mxu0 0
        %3935 = vmatpush1.bf16.msra.mxu0 0
        %3936 = vmatprep.subr.bf16.mxu0 0
        %3937 = vmatpush1.bf16.msra.mxu0 0
        %3938 = vmatprep.subr.bf16.mxu0 0
        %3939 = vmatpush1.bf16.msra.mxu0 0
        %3940 = vmatprep.mubr.bf16.mxu0 0
        %3941 = vmatmul.mubr.bf16.gmra.mrb[0].mxu0 %v3532
        %v3942 = vpop.f32.mrb[0].mxu0
        %v3943 = vadd.f32 %v3504, %v3942
        %v3944 = vpop.f32.mrb[0].mxu0
        %v3945 = vadd.f32 %v3504, %v3944
        %v3946 = vpop.f32.mrb[0].mxu0
        %v3947 = vadd.f32 %v3509, %v3946
        %v3948 = vpop.f32.mrb[0].mxu0
        %v3949 = vadd.f32 %v3509, %v3948
        %3950 = vmatprep.mubr.bf16.mxu0 0
        %3951 = vmatmul.mubr.bf16.gmra.mrb[0].mxu0 %v3535
        %v3952 = vpop.f32.mrb[0].mxu0
        %v3953 = vadd.f32 %v3514, %v3952
        %v3954 = vpop.f32.mrb[0].mxu0
        %v3955 = vadd.f32 %v3514, %v3954
        %v3956 = vpop.f32.mrb[0].mxu0
        %v3957 = vadd.f32 %v3519, %v3956
        %v3958 = vpop.f32.mrb[0].mxu0
        %v3959 = vadd.f32 %v3519, %v3958
        %3960 = vdwg.mxu0
        %v3961 = vmax.f32 %v3572, 0.0
        %v3962 = vmax.f32 %v3574, 0.0
        %v3963 = vmax.f32 %v3625, 0.0
        %v3964 = vmax.f32 %v3627, 0.0
        %v3965 = vmax.f32 %v3678, 0.0
        %v3966 = vmax.f32 %v3680, 0.0
        %v3967 = vmax.f32 %v3731, 0.0
        %v3968 = vmax.f32 %v3733, 0.0
        %v3969 = vmax.f32 %v3784, 0.0
        %v3970 = vmax.f32 %v3786, 0.0
        %v3971 = vmax.f32 %v3837, 0.0
        %v3972 = vmax.f32 %v3839, 0.0
        %v3973 = vmax.f32 %v3890, 0.0
        %v3974 = vmax.f32 %v3892, 0.0
        %v3975 = vmax.f32 %v3943, 0.0
        %v3976 = vmax.f32 %v3945, 0.0
        %v3977 = vmax.f32 %v3576, 0.0
        %v3978 = vmax.f32 %v3578, 0.0
        %v3979 = vmax.f32 %v3629, 0.0
        %v3980 = vmax.f32 %v3631, 0.0
        %v3981 = vmax.f32 %v3682, 0.0
        %v3982 = vmax.f32 %v3684, 0.0
        %v3983 = vmax.f32 %v3735, 0.0
        %v3984 = vmax.f32 %v3737, 0.0
        %v3985 = vmax.f32 %v3788, 0.0
        %v3986 = vmax.f32 %v3790, 0.0
        %v3987 = vmax.f32 %v3841, 0.0
        %v3988 = vmax.f32 %v3843, 0.0
        %v3989 = vmax.f32 %v3894, 0.0
        %v3990 = vmax.f32 %v3896, 0.0
        %v3991 = vmax.f32 %v3947, 0.0
        %v3992 = vmax.f32 %v3949, 0.0
        %v3993 = vmax.f32 %v3582, 0.0
        %v3994 = vmax.f32 %v3584, 0.0
        %v3995 = vmax.f32 %v3635, 0.0
        %v3996 = vmax.f32 %v3637, 0.0
        %v3997 = vmax.f32 %v3688, 0.0
        %v3998 = vmax.f32 %v3690, 0.0
        %v3999 = vmax.f32 %v3741, 0.0
        %v4000 = vmax.f32 %v3743, 0.0
        %v4001 = vmax.f32 %v3794, 0.0
        %v4002 = vmax.f32 %v3796, 0.0
        %v4003 = vmax.f32 %v3847, 0.0
        %v4004 = vmax.f32 %v3849, 0.0
        %v4005 = vmax.f32 %v3900, 0.0
        %v4006 = vmax.f32 %v3902, 0.0
        %v4007 = vmax.f32 %v3953, 0.0
        %v4008 = vmax.f32 %v3955, 0.0
        %v4009 = vmax.f32 %v3586, 0.0
        %v4010 = vmax.f32 %v3588, 0.0
        %v4011 = vmax.f32 %v3639, 0.0
        %v4012 = vmax.f32 %v3641, 0.0
        %v4013 = vmax.f32 %v3692, 0.0
        %v4014 = vmax.f32 %v3694, 0.0
        %v4015 = vmax.f32 %v3745, 0.0
        %v4016 = vmax.f32 %v3747, 0.0
        %v4017 = vmax.f32 %v3798, 0.0
        %v4018 = vmax.f32 %v3800, 0.0
        %v4019 = vmax.f32 %v3851, 0.0
        %v4020 = vmax.f32 %v3853, 0.0
        %v4021 = vmax.f32 %v3904, 0.0
        %v4022 = vmax.f32 %v3906, 0.0
        %v4023 = vmax.f32 %v3957, 0.0
        %v4024 = vmax.f32 %v3959, 0.0
        %v4025 = vpack.c.bf16 %v3977, %v3961
        %v4026 = vpack.c.bf16 %v3978, %v3962
        %v4027 = vpack.c.bf16 %v3979, %v3963
        %v4028 = vpack.c.bf16 %v3980, %v3964
        %v4029 = vpack.c.bf16 %v3981, %v3965
        %v4030 = vpack.c.bf16 %v3982, %v3966
        %v4031 = vpack.c.bf16 %v3983, %v3967
        %v4032 = vpack.c.bf16 %v3984, %v3968
        %v4033 = vpack.c.bf16 %v3985, %v3969
        %v4034 = vpack.c.bf16 %v3986, %v3970
        %v4035 = vpack.c.bf16 %v3987, %v3971
        %v4036 = vpack.c.bf16 %v3988, %v3972
        %v4037 = vpack.c.bf16 %v3989, %v3973
        %v4038 = vpack.c.bf16 %v3990, %v3974
        %v4039 = vpack.c.bf16 %v3991, %v3975
        %v4040 = vpack.c.bf16 %v3992, %v3976
        %v4041 = vpack.c.bf16 %v4009, %v3993
        %v4042 = vpack.c.bf16 %v4010, %v3994
        %v4043 = vpack.c.bf16 %v4011, %v3995
        %v4044 = vpack.c.bf16 %v4012, %v3996
        %v4045 = vpack.c.bf16 %v4013, %v3997
        %v4046 = vpack.c.bf16 %v4014, %v3998
        %v4047 = vpack.c.bf16 %v4015, %v3999
        %v4048 = vpack.c.bf16 %v4016, %v4000
        %v4049 = vpack.c.bf16 %v4017, %v4001
        %v4050 = vpack.c.bf16 %v4018, %v4002
        %v4051 = vpack.c.bf16 %v4019, %v4003
        %v4052 = vpack.c.bf16 %v4020, %v4004
        %v4053 = vpack.c.bf16 %v4021, %v4005
        %v4054 = vpack.c.bf16 %v4022, %v4006
        %v4055 = vpack.c.bf16 %v4023, %v4007
        %v4056 = vpack.c.bf16 %v4024, %v4008
        %v4057 = vld [vmem:[%s14] sm:$0x3]
        %v4058 = vld [vmem:[%s15] sm:$0x7]
        %4060 = vset.pattern.permute.xlu0 0
        %4061 = vperm.xlu0 %4060, %v4058
        %v4062 = vpop.permute.xlu0 %4061
        %v4065 = vsel %vm1400, %v4057, 0
        %4067 = vmatprep.subr.bf16.mxu0 %v4026
        %4068 = vmatpush1.bf16.msra.mxu0 %v4025
        %4069 = vmatprep.subr.bf16.mxu0 %v4042
        %4070 = vmatpush1.bf16.msra.mxu0 %v4041
        %4071 = vmatprep.subr.bf16.mxu0 0
        %4072 = vmatpush1.bf16.msra.mxu0 0
        %4073 = vmatprep.subr.bf16.mxu0 0
        %4074 = vmatpush1.bf16.msra.mxu0 0
        %4075 = vmatprep.subr.bf16.mxu0 0
        %4076 = vmatpush1.bf16.msra.mxu0 0
        %4077 = vmatprep.subr.bf16.mxu0 0
        %4078 = vmatpush1.bf16.msra.mxu0 0
        %4079 = vmatprep.subr.bf16.mxu0 0
        %4080 = vmatpush1.bf16.msra.mxu0 0
        %4081 = vmatprep.subr.bf16.mxu0 0
        %4082 = vmatpush1.bf16.msra.mxu0 0
        %4083 = vmatprep.subr.bf16.mxu0 0
        %4084 = vmatpush1.bf16.msra.mxu0 0
        %4085 = vmatprep.subr.bf16.mxu0 0
        %4086 = vmatpush1.bf16.msra.mxu0 0
        %4087 = vmatprep.subr.bf16.mxu0 0
        %4088 = vmatpush1.bf16.msra.mxu0 0
        %4089 = vmatprep.subr.bf16.mxu0 0
        %4090 = vmatpush1.bf16.msra.mxu0 0
        %4091 = vmatprep.subr.bf16.mxu0 0
        %4092 = vmatpush1.bf16.msra.mxu0 0
        %4093 = vmatprep.subr.bf16.mxu0 0
        %4094 = vmatpush1.bf16.msra.mxu0 0
        %4095 = vmatprep.subr.bf16.mxu0 0
        %4096 = vmatpush1.bf16.msra.mxu0 0
        %4097 = vmatprep.subr.bf16.mxu0 0
        %4098 = vmatpush1.bf16.msra.mxu0 0
        %4099 = vmatprep.mubr.bf16.mxu0 0
        %4100 = vmatmul.mubr.bf16.gmra.mrb[0].mxu0 %v4065
        %v4101 = vpop.f32.mrb[0].mxu0
        %v4102 = vadd.f32 %v4062, %v4101
        %v4103 = vpop.f32.mrb[0].mxu0
        %v4104 = vadd.f32 %v4062, %v4103
        %v4105 = vpop.f32.mrb[0].mxu0
        %v4106 = vpop.f32.mrb[0].mxu0
        %4107 = vdwg.mxu0
        %4108 = vmatprep.subr.bf16.mxu0 %v4028
        %4109 = vmatpush1.bf16.msra.mxu0 %v4027
        %4110 = vmatprep.subr.bf16.mxu0 %v4044
        %4111 = vmatpush1.bf16.msra.mxu0 %v4043
        %4112 = vmatprep.subr.bf16.mxu0 0
        %4113 = vmatpush1.bf16.msra.mxu0 0
        %4114 = vmatprep.subr.bf16.mxu0 0
        %4115 = vmatpush1.bf16.msra.mxu0 0
        %4116 = vmatprep.subr.bf16.mxu0 0
        %4117 = vmatpush1.bf16.msra.mxu0 0
        %4118 = vmatprep.subr.bf16.mxu0 0
        %4119 = vmatpush1.bf16.msra.mxu0 0
        %4120 = vmatprep.subr.bf16.mxu0 0
        %4121 = vmatpush1.bf16.msra.mxu0 0
        %4122 = vmatprep.subr.bf16.mxu0 0
        %4123 = vmatpush1.bf16.msra.mxu0 0
        %4124 = vmatprep.subr.bf16.mxu0 0
        %4125 = vmatpush1.bf16.msra.mxu0 0
        %4126 = vmatprep.subr.bf16.mxu0 0
        %4127 = vmatpush1.bf16.msra.mxu0 0
        %4128 = vmatprep.subr.bf16.mxu0 0
        %4129 = vmatpush1.bf16.msra.mxu0 0
        %4130 = vmatprep.subr.bf16.mxu0 0
        %4131 = vmatpush1.bf16.msra.mxu0 0
        %4132 = vmatprep.subr.bf16.mxu0 0
        %4133 = vmatpush1.bf16.msra.mxu0 0
        %4134 = vmatprep.subr.bf16.mxu0 0
        %4135 = vmatpush1.bf16.msra.mxu0 0
        %4136 = vmatprep.subr.bf16.mxu0 0
        %4137 = vmatpush1.bf16.msra.mxu0 0
        %4138 = vmatprep.subr.bf16.mxu0 0
        %4139 = vmatpush1.bf16.msra.mxu0 0
        %4140 = vmatprep.mubr.bf16.mxu0 0
        %4141 = vmatmul.mubr.bf16.gmra.mrb[0].mxu0 %v4065
        %v4142 = vpop.f32.mrb[0].mxu0
        %v4143 = vadd.f32 %v4062, %v4142
        %v4144 = vpop.f32.mrb[0].mxu0
        %v4145 = vadd.f32 %v4062, %v4144
        %v4146 = vpop.f32.mrb[0].mxu0
        %v4147 = vpop.f32.mrb[0].mxu0
        %4148 = vdwg.mxu0
        %4149 = vmatprep.subr.bf16.mxu0 %v4030
        %4150 = vmatpush1.bf16.msra.mxu0 %v4029
        %4151 = vmatprep.subr.bf16.mxu0 %v4046
        %4152 = vmatpush1.bf16.msra.mxu0 %v4045
        %4153 = vmatprep.subr.bf16.mxu0 0
        %4154 = vmatpush1.bf16.msra.mxu0 0
        %4155 = vmatprep.subr.bf16.mxu0 0
        %4156 = vmatpush1.bf16.msra.mxu0 0
        %4157 = vmatprep.subr.bf16.mxu0 0
        %4158 = vmatpush1.bf16.msra.mxu0 0
        %4159 = vmatprep.subr.bf16.mxu0 0
        %4160 = vmatpush1.bf16.msra.mxu0 0
        %4161 = vmatprep.subr.bf16.mxu0 0
        %4162 = vmatpush1.bf16.msra.mxu0 0
        %4163 = vmatprep.subr.bf16.mxu0 0
        %4164 = vmatpush1.bf16.msra.mxu0 0
        %4165 = vmatprep.subr.bf16.mxu0 0
        %4166 = vmatpush1.bf16.msra.mxu0 0
        %4167 = vmatprep.subr.bf16.mxu0 0
        %4168 = vmatpush1.bf16.msra.mxu0 0
        %4169 = vmatprep.subr.bf16.mxu0 0
        %4170 = vmatpush1.bf16.msra.mxu0 0
        %4171 = vmatprep.subr.bf16.mxu0 0
        %4172 = vmatpush1.bf16.msra.mxu0 0
        %4173 = vmatprep.subr.bf16.mxu0 0
        %4174 = vmatpush1.bf16.msra.mxu0 0
        %4175 = vmatprep.subr.bf16.mxu0 0
        %4176 = vmatpush1.bf16.msra.mxu0 0
        %4177 = vmatprep.subr.bf16.mxu0 0
        %4178 = vmatpush1.bf16.msra.mxu0 0
        %4179 = vmatprep.subr.bf16.mxu0 0
        %4180 = vmatpush1.bf16.msra.mxu0 0
        %4181 = vmatprep.mubr.bf16.mxu0 0
        %4182 = vmatmul.mubr.bf16.gmra.mrb[0].mxu0 %v4065
        %v4183 = vpop.f32.mrb[0].mxu0
        %v4184 = vadd.f32 %v4062, %v4183
        %v4185 = vpop.f32.mrb[0].mxu0
        %v4186 = vadd.f32 %v4062, %v4185
        %v4187 = vpop.f32.mrb[0].mxu0
        %v4188 = vpop.f32.mrb[0].mxu0
        %4189 = vdwg.mxu0
        %4190 = vmatprep.subr.bf16.mxu0 %v4032
        %4191 = vmatpush1.bf16.msra.mxu0 %v4031
        %4192 = vmatprep.subr.bf16.mxu0 %v4048
        %4193 = vmatpush1.bf16.msra.mxu0 %v4047
        %4194 = vmatprep.subr.bf16.mxu0 0
        %4195 = vmatpush1.bf16.msra.mxu0 0
        %4196 = vmatprep.subr.bf16.mxu0 0
        %4197 = vmatpush1.bf16.msra.mxu0 0
        %4198 = vmatprep.subr.bf16.mxu0 0
        %4199 = vmatpush1.bf16.msra.mxu0 0
        %4200 = vmatprep.subr.bf16.mxu0 0
        %4201 = vmatpush1.bf16.msra.mxu0 0
        %4202 = vmatprep.subr.bf16.mxu0 0
        %4203 = vmatpush1.bf16.msra.mxu0 0
        %4204 = vmatprep.subr.bf16.mxu0 0
        %4205 = vmatpush1.bf16.msra.mxu0 0
        %4206 = vmatprep.subr.bf16.mxu0 0
        %4207 = vmatpush1.bf16.msra.mxu0 0
        %4208 = vmatprep.subr.bf16.mxu0 0
        %4209 = vmatpush1.bf16.msra.mxu0 0
        %4210 = vmatprep.subr.bf16.mxu0 0
        %4211 = vmatpush1.bf16.msra.mxu0 0
        %4212 = vmatprep.subr.bf16.mxu0 0
        %4213 = vmatpush1.bf16.msra.mxu0 0
        %4214 = vmatprep.subr.bf16.mxu0 0
        %4215 = vmatpush1.bf16.msra.mxu0 0
        %4216 = vmatprep.subr.bf16.mxu0 0
        %4217 = vmatpush1.bf16.msra.mxu0 0
        %4218 = vmatprep.subr.bf16.mxu0 0
        %4219 = vmatpush1.bf16.msra.mxu0 0
        %4220 = vmatprep.subr.bf16.mxu0 0
        %4221 = vmatpush1.bf16.msra.mxu0 0
        %4222 = vmatprep.mubr.bf16.mxu0 0
        %4223 = vmatmul.mubr.bf16.gmra.mrb[0].mxu0 %v4065
        %v4224 = vpop.f32.mrb[0].mxu0
        %v4225 = vadd.f32 %v4062, %v4224
        %v4226 = vpop.f32.mrb[0].mxu0
        %v4227 = vadd.f32 %v4062, %v4226
        %v4228 = vpop.f32.mrb[0].mxu0
        %v4229 = vpop.f32.mrb[0].mxu0
        %4230 = vdwg.mxu0
        %4231 = vmatprep.subr.bf16.mxu0 %v4034
        %4232 = vmatpush1.bf16.msra.mxu0 %v4033
        %4233 = vmatprep.subr.bf16.mxu0 %v4050
        %4234 = vmatpush1.bf16.msra.mxu0 %v4049
        %4235 = vmatprep.subr.bf16.mxu0 0
        %4236 = vmatpush1.bf16.msra.mxu0 0
        %4237 = vmatprep.subr.bf16.mxu0 0
        %4238 = vmatpush1.bf16.msra.mxu0 0
        %4239 = vmatprep.subr.bf16.mxu0 0
        %4240 = vmatpush1.bf16.msra.mxu0 0
        %4241 = vmatprep.subr.bf16.mxu0 0
        %4242 = vmatpush1.bf16.msra.mxu0 0
        %4243 = vmatprep.subr.bf16.mxu0 0
        %4244 = vmatpush1.bf16.msra.mxu0 0
        %4245 = vmatprep.subr.bf16.mxu0 0
        %4246 = vmatpush1.bf16.msra.mxu0 0
        %4247 = vmatprep.subr.bf16.mxu0 0
        %4248 = vmatpush1.bf16.msra.mxu0 0
        %4249 = vmatprep.subr.bf16.mxu0 0
        %4250 = vmatpush1.bf16.msra.mxu0 0
        %4251 = vmatprep.subr.bf16.mxu0 0
        %4252 = vmatpush1.bf16.msra.mxu0 0
        %4253 = vmatprep.subr.bf16.mxu0 0
        %4254 = vmatpush1.bf16.msra.mxu0 0
        %4255 = vmatprep.subr.bf16.mxu0 0
        %4256 = vmatpush1.bf16.msra.mxu0 0
        %4257 = vmatprep.subr.bf16.mxu0 0
        %4258 = vmatpush1.bf16.msra.mxu0 0
        %4259 = vmatprep.subr.bf16.mxu0 0
        %4260 = vmatpush1.bf16.msra.mxu0 0
        %4261 = vmatprep.subr.bf16.mxu0 0
        %4262 = vmatpush1.bf16.msra.mxu0 0
        %4263 = vmatprep.mubr.bf16.mxu0 0
        %4264 = vmatmul.mubr.bf16.gmra.mrb[0].mxu0 %v4065
        %v4265 = vpop.f32.mrb[0].mxu0
        %v4266 = vadd.f32 %v4062, %v4265
        %v4267 = vpop.f32.mrb[0].mxu0
        %v4268 = vadd.f32 %v4062, %v4267
        %v4269 = vpop.f32.mrb[0].mxu0
        %v4270 = vpop.f32.mrb[0].mxu0
        %4271 = vdwg.mxu0
        %4272 = vmatprep.subr.bf16.mxu0 %v4036
        %4273 = vmatpush1.bf16.msra.mxu0 %v4035
        %4274 = vmatprep.subr.bf16.mxu0 %v4052
        %4275 = vmatpush1.bf16.msra.mxu0 %v4051
        %4276 = vmatprep.subr.bf16.mxu0 0
        %4277 = vmatpush1.bf16.msra.mxu0 0
        %4278 = vmatprep.subr.bf16.mxu0 0
        %4279 = vmatpush1.bf16.msra.mxu0 0
        %4280 = vmatprep.subr.bf16.mxu0 0
        %4281 = vmatpush1.bf16.msra.mxu0 0
        %4282 = vmatprep.subr.bf16.mxu0 0
        %4283 = vmatpush1.bf16.msra.mxu0 0
        %4284 = vmatprep.subr.bf16.mxu0 0
        %4285 = vmatpush1.bf16.msra.mxu0 0
        %4286 = vmatprep.subr.bf16.mxu0 0
        %4287 = vmatpush1.bf16.msra.mxu0 0
        %4288 = vmatprep.subr.bf16.mxu0 0
        %4289 = vmatpush1.bf16.msra.mxu0 0
        %4290 = vmatprep.subr.bf16.mxu0 0
        %4291 = vmatpush1.bf16.msra.mxu0 0
        %4292 = vmatprep.subr.bf16.mxu0 0
        %4293 = vmatpush1.bf16.msra.mxu0 0
        %4294 = vmatprep.subr.bf16.mxu0 0
        %4295 = vmatpush1.bf16.msra.mxu0 0
        %4296 = vmatprep.subr.bf16.mxu0 0
        %4297 = vmatpush1.bf16.msra.mxu0 0
        %4298 = vmatprep.subr.bf16.mxu0 0
        %4299 = vmatpush1.bf16.msra.mxu0 0
        %4300 = vmatprep.subr.bf16.mxu0 0
        %4301 = vmatpush1.bf16.msra.mxu0 0
        %4302 = vmatprep.subr.bf16.mxu0 0
        %4303 = vmatpush1.bf16.msra.mxu0 0
        %4304 = vmatprep.mubr.bf16.mxu0 0
        %4305 = vmatmul.mubr.bf16.gmra.mrb[0].mxu0 %v4065
        %v4306 = vpop.f32.mrb[0].mxu0
        %v4307 = vadd.f32 %v4062, %v4306
        %v4308 = vpop.f32.mrb[0].mxu0
        %v4309 = vadd.f32 %v4062, %v4308
        %v4310 = vpop.f32.mrb[0].mxu0
        %v4311 = vpop.f32.mrb[0].mxu0
        %4312 = vdwg.mxu0
        %4313 = vmatprep.subr.bf16.mxu0 %v4038
        %4314 = vmatpush1.bf16.msra.mxu0 %v4037
        %4315 = vmatprep.subr.bf16.mxu0 %v4054
        %4316 = vmatpush1.bf16.msra.mxu0 %v4053
        %4317 = vmatprep.subr.bf16.mxu0 0
        %4318 = vmatpush1.bf16.msra.mxu0 0
        %4319 = vmatprep.subr.bf16.mxu0 0
        %4320 = vmatpush1.bf16.msra.mxu0 0
        %4321 = vmatprep.subr.bf16.mxu0 0
        %4322 = vmatpush1.bf16.msra.mxu0 0
        %4323 = vmatprep.subr.bf16.mxu0 0
        %4324 = vmatpush1.bf16.msra.mxu0 0
        %4325 = vmatprep.subr.bf16.mxu0 0
        %4326 = vmatpush1.bf16.msra.mxu0 0
        %4327 = vmatprep.subr.bf16.mxu0 0
        %4328 = vmatpush1.bf16.msra.mxu0 0
        %4329 = vmatprep.subr.bf16.mxu0 0
        %4330 = vmatpush1.bf16.msra.mxu0 0
        %4331 = vmatprep.subr.bf16.mxu0 0
        %4332 = vmatpush1.bf16.msra.mxu0 0
        %4333 = vmatprep.subr.bf16.mxu0 0
        %4334 = vmatpush1.bf16.msra.mxu0 0
        %4335 = vmatprep.subr.bf16.mxu0 0
        %4336 = vmatpush1.bf16.msra.mxu0 0
        %4337 = vmatprep.subr.bf16.mxu0 0
        %4338 = vmatpush1.bf16.msra.mxu0 0
        %4339 = vmatprep.subr.bf16.mxu0 0
        %4340 = vmatpush1.bf16.msra.mxu0 0
        %4341 = vmatprep.subr.bf16.mxu0 0
        %4342 = vmatpush1.bf16.msra.mxu0 0
        %4343 = vmatprep.subr.bf16.mxu0 0
        %4344 = vmatpush1.bf16.msra.mxu0 0
        %4345 = vmatprep.mubr.bf16.mxu0 0
        %4346 = vmatmul.mubr.bf16.gmra.mrb[0].mxu0 %v4065
        %v4347 = vpop.f32.mrb[0].mxu0
        %v4348 = vadd.f32 %v4062, %v4347
        %v4349 = vpop.f32.mrb[0].mxu0
        %v4350 = vadd.f32 %v4062, %v4349
        %v4351 = vpop.f32.mrb[0].mxu0
        %v4352 = vpop.f32.mrb[0].mxu0
        %4353 = vdwg.mxu0
        %4354 = vmatprep.subr.bf16.mxu0 %v4040
        %4355 = vmatpush1.bf16.msra.mxu0 %v4039
        %4356 = vmatprep.subr.bf16.mxu0 %v4056
        %4357 = vmatpush1.bf16.msra.mxu0 %v4055
        %4358 = vmatprep.subr.bf16.mxu0 0
        %4359 = vmatpush1.bf16.msra.mxu0 0
        %4360 = vmatprep.subr.bf16.mxu0 0
        %4361 = vmatpush1.bf16.msra.mxu0 0
        %4362 = vmatprep.subr.bf16.mxu0 0
        %4363 = vmatpush1.bf16.msra.mxu0 0
        %4364 = vmatprep.subr.bf16.mxu0 0
        %4365 = vmatpush1.bf16.msra.mxu0 0
        %4366 = vmatprep.subr.bf16.mxu0 0
        %4367 = vmatpush1.bf16.msra.mxu0 0
        %4368 = vmatprep.subr.bf16.mxu0 0
        %4369 = vmatpush1.bf16.msra.mxu0 0
        %4370 = vmatprep.subr.bf16.mxu0 0
        %4371 = vmatpush1.bf16.msra.mxu0 0
        %4372 = vmatprep.subr.bf16.mxu0 0
        %4373 = vmatpush1.bf16.msra.mxu0 0
        %4374 = vmatprep.subr.bf16.mxu0 0
        %4375 = vmatpush1.bf16.msra.mxu0 0
        %4376 = vmatprep.subr.bf16.mxu0 0
        %4377 = vmatpush1.bf16.msra.mxu0 0
        %4378 = vmatprep.subr.bf16.mxu0 0
        %4379 = vmatpush1.bf16.msra.mxu0 0
        %4380 = vmatprep.subr.bf16.mxu0 0
        %4381 = vmatpush1.bf16.msra.mxu0 0
        %4382 = vmatprep.subr.bf16.mxu0 0
        %4383 = vmatpush1.bf16.msra.mxu0 0
        %4384 = vmatprep.subr.bf16.mxu0 0
        %4385 = vmatpush1.bf16.msra.mxu0 0
        %4386 = vmatprep.mubr.bf16.mxu0 0
        %4387 = vmatmul.mubr.bf16.gmra.mrb[0].mxu0 %v4065
        %v4388 = vpop.f32.mrb[0].mxu0
        %v4389 = vadd.f32 %v4062, %v4388
        %v4390 = vpop.f32.mrb[0].mxu0
        %v4391 = vadd.f32 %v4062, %v4390
        %v4392 = vpop.f32.mrb[0].mxu0
        %v4393 = vpop.f32.mrb[0].mxu0
        %4394 = vdwg.mxu0
        %v4395 = vxor.u32 %v4102, 2147483648
        %v4396 = vxor.u32 %v4104, 2147483648
        %v4397 = vxor.u32 %v4143, 2147483648
        %v4398 = vxor.u32 %v4145, 2147483648
        %v4399 = vxor.u32 %v4184, 2147483648
        %v4400 = vxor.u32 %v4186, 2147483648
        %v4401 = vxor.u32 %v4225, 2147483648
        %v4402 = vxor.u32 %v4227, 2147483648
        %v4403 = vxor.u32 %v4266, 2147483648
        %v4404 = vxor.u32 %v4268, 2147483648
        %v4405 = vxor.u32 %v4307, 2147483648
        %v4406 = vxor.u32 %v4309, 2147483648
        %v4407 = vxor.u32 %v4348, 2147483648
        %v4408 = vxor.u32 %v4350, 2147483648
        %v4409 = vxor.u32 %v4389, 2147483648
        %v4410 = vxor.u32 %v4391, 2147483648
        %v4411 = vmul.f32 %v4395, 1.442695
        %v4412 = vpow.pop %v4411
        %v4413 = vmul.f32 %v4396, 1.442695
        %v4414 = vpow.pop %v4413
        %v4415 = vmul.f32 %v4397, 1.442695
        %v4416 = vpow.pop %v4415
        %v4417 = vmul.f32 %v4398, 1.442695
        %v4418 = vpow.pop %v4417
        %v4419 = vmul.f32 %v4399, 1.442695
        %v4420 = vpow.pop %v4419
        %v4421 = vmul.f32 %v4400, 1.442695
        %v4422 = vpow.pop %v4421
        %v4423 = vmul.f32 %v4401, 1.442695
        %v4424 = vpow.pop %v4423
        %v4425 = vmul.f32 %v4402, 1.442695
        %v4426 = vpow.pop %v4425
        %v4427 = vmul.f32 %v4403, 1.442695
        %v4428 = vpow.pop %v4427
        %v4429 = vmul.f32 %v4404, 1.442695
        %v4430 = vpow.pop %v4429
        %v4431 = vmul.f32 %v4405, 1.442695
        %v4432 = vpow.pop %v4431
        %v4433 = vmul.f32 %v4406, 1.442695
        %v4434 = vpow.pop %v4433
        %v4435 = vmul.f32 %v4407, 1.442695
        %v4436 = vpow.pop %v4435
        %v4437 = vmul.f32 %v4408, 1.442695
        %v4438 = vpow.pop %v4437
        %v4439 = vmul.f32 %v4409, 1.442695
        %v4440 = vpow.pop %v4439
        %v4441 = vmul.f32 %v4410, 1.442695
        %v4442 = vpow.pop %v4441
        %v4443 = vadd.f32 %v4412, 1.0
        %v4444 = vadd.f32 %v4414, 1.0
        %v4445 = vadd.f32 %v4416, 1.0
        %v4446 = vadd.f32 %v4418, 1.0
        %v4447 = vadd.f32 %v4420, 1.0
        %v4448 = vadd.f32 %v4422, 1.0
        %v4449 = vadd.f32 %v4424, 1.0
        %v4450 = vadd.f32 %v4426, 1.0
        %v4451 = vadd.f32 %v4428, 1.0
        %v4452 = vadd.f32 %v4430, 1.0
        %v4453 = vadd.f32 %v4432, 1.0
        %v4454 = vadd.f32 %v4434, 1.0
        %v4455 = vadd.f32 %v4436, 1.0
        %v4456 = vadd.f32 %v4438, 1.0
        %v4457 = vadd.f32 %v4440, 1.0
        %v4458 = vadd.f32 %v4442, 1.0
        %v4459 = vrcp.pop %v4443
        %v4460 = vmul.f32 1.0, %v4459
        %v4461 = vrcp.pop %v4444
        %v4462 = vmul.f32 1.0, %v4461
        %v4463 = vrcp.pop %v4445
        %v4464 = vmul.f32 1.0, %v4463
        %v4465 = vrcp.pop %v4446
        %v4466 = vmul.f32 1.0, %v4465
        %v4467 = vrcp.pop %v4447
        %v4468 = vmul.f32 1.0, %v4467
        %v4469 = vrcp.pop %v4448
        %v4470 = vmul.f32 1.0, %v4469
        %v4471 = vrcp.pop %v4449
        %v4472 = vmul.f32 1.0, %v4471
        %v4473 = vrcp.pop %v4450
        %v4474 = vmul.f32 1.0, %v4473
        %v4475 = vrcp.pop %v4451
        %v4476 = vmul.f32 1.0, %v4475
        %v4477 = vrcp.pop %v4452
        %v4478 = vmul.f32 1.0, %v4477
        %v4479 = vrcp.pop %v4453
        %v4480 = vmul.f32 1.0, %v4479
        %v4481 = vrcp.pop %v4454
        %v4482 = vmul.f32 1.0, %v4481
        %v4483 = vrcp.pop %v4455
        %v4484 = vmul.f32 1.0, %v4483
        %v4485 = vrcp.pop %v4456
        %v4486 = vmul.f32 1.0, %v4485
        %v4487 = vrcp.pop %v4457
        %v4488 = vmul.f32 1.0, %v4487
        %v4489 = vrcp.pop %v4458
        %v4490 = vmul.f32 1.0, %v4489
        %v4491 = vld [vmem:[%s693] sm:$0xff]
        %v4492 = vld [vmem:[%s693 + $0x8] sm:$0xff]
        %v4495 = vlaneseq
        %v4496 = vshrl.u32 %v4495, 7
        %v4497 = vsub.s32 0, %v4496
        %v4498 = vrot.slane %v4491, %v4497
        %v4499 = vlaneseq
        %v4500 = vshrl.u32 %v4499, 7
        %v4501 = vsub.s32 1, %v4500
        %v4502 = vrot.slane %v4491, %v4501
        %v4503 = vlaneseq
        %v4504 = vshrl.u32 %v4503, 7
        %v4505 = vsub.s32 2, %v4504
        %v4506 = vrot.slane %v4491, %v4505
        %v4507 = vlaneseq
        %v4508 = vshrl.u32 %v4507, 7
        %v4509 = vsub.s32 3, %v4508
        %v4510 = vrot.slane %v4491, %v4509
        %v4511 = vlaneseq
        %v4512 = vshrl.u32 %v4511, 7
        %v4513 = vsub.s32 4, %v4512
        %v4514 = vrot.slane %v4491, %v4513
        %v4515 = vlaneseq
        %v4516 = vshrl.u32 %v4515, 7
        %v4517 = vsub.s32 5, %v4516
        %v4518 = vrot.slane %v4491, %v4517
        %v4519 = vlaneseq
        %v4520 = vshrl.u32 %v4519, 7
        %v4521 = vsub.s32 6, %v4520
        %v4522 = vrot.slane %v4491, %v4521
        %v4523 = vlaneseq
        %v4524 = vshrl.u32 %v4523, 7
        %v4525 = vsub.s32 7, %v4524
        %v4526 = vrot.slane %v4491, %v4525
        %v4527 = vlaneseq
        %v4528 = vshrl.u32 %v4527, 7
        %v4529 = vsub.s32 0, %v4528
        %v4530 = vrot.slane %v4492, %v4529
        %v4531 = vlaneseq
        %v4532 = vshrl.u32 %v4531, 7
        %v4533 = vsub.s32 1, %v4532
        %v4534 = vrot.slane %v4492, %v4533
        %v4535 = vlaneseq
        %v4536 = vshrl.u32 %v4535, 7
        %v4537 = vsub.s32 2, %v4536
        %v4538 = vrot.slane %v4492, %v4537
        %v4539 = vlaneseq
        %v4540 = vshrl.u32 %v4539, 7
        %v4541 = vsub.s32 3, %v4540
        %v4542 = vrot.slane %v4492, %v4541
        %v4543 = vlaneseq
        %v4544 = vshrl.u32 %v4543, 7
        %v4545 = vsub.s32 4, %v4544
        %v4546 = vrot.slane %v4492, %v4545
        %v4547 = vlaneseq
        %v4548 = vshrl.u32 %v4547, 7
        %v4549 = vsub.s32 5, %v4548
        %v4550 = vrot.slane %v4492, %v4549
        %v4551 = vlaneseq
        %v4552 = vshrl.u32 %v4551, 7
        %v4553 = vsub.s32 6, %v4552
        %v4554 = vrot.slane %v4492, %v4553
        %v4555 = vlaneseq
        %v4556 = vshrl.u32 %v4555, 7
        %v4557 = vsub.s32 7, %v4556
        %v4558 = vrot.slane %v4492, %v4557
        %v4575 = vmul.f32 %v2293, %v4498
        %v4576 = vmul.f32 %v2294, %v4502
        %v4577 = vmul.f32 %v2295, %v4506
        %v4578 = vmul.f32 %v2296, %v4510
        %v4579 = vmul.f32 %v2297, %v4514
        %v4580 = vmul.f32 %v2298, %v4518
        %v4581 = vmul.f32 %v2299, %v4522
        %v4582 = vmul.f32 %v2300, %v4526
        %v4583 = vmul.f32 %v2301, %v4530
        %v4584 = vmul.f32 %v2302, %v4534
        %v4585 = vmul.f32 %v2303, %v4538
        %v4586 = vmul.f32 %v2304, %v4542
        %v4587 = vmul.f32 %v2305, %v4546
        %v4588 = vmul.f32 %v2306, %v4550
        %v4589 = vmul.f32 %v2307, %v4554
        %v4590 = vmul.f32 %v2308, %v4558
        %v4591 = vsub.f32 0.0, %v4575
        %v4592 = vsub.f32 0.0, %v4576
        %v4593 = vsub.f32 0.0, %v4577
        %v4594 = vsub.f32 0.0, %v4578
        %v4595 = vsub.f32 0.0, %v4579
        %v4596 = vsub.f32 0.0, %v4580
        %v4597 = vsub.f32 0.0, %v4581
        %v4598 = vsub.f32 0.0, %v4582
        %v4599 = vsub.f32 0.0, %v4583
        %v4600 = vsub.f32 0.0, %v4584
        %v4601 = vsub.f32 0.0, %v4585
        %v4602 = vsub.f32 0.0, %v4586
        %v4603 = vsub.f32 0.0, %v4587
        %v4604 = vsub.f32 0.0, %v4588
        %v4605 = vsub.f32 0.0, %v4589
        %v4606 = vsub.f32 0.0, %v4590
        %v4607 = vmul.f32 %v4591, 1.442695
        %v4608 = vpow.pop %v4607
        %v4609 = vmul.f32 %v4592, 1.442695
        %v4610 = vpow.pop %v4609
        %v4611 = vmul.f32 %v4593, 1.442695
        %v4612 = vpow.pop %v4611
        %v4613 = vmul.f32 %v4594, 1.442695
        %v4614 = vpow.pop %v4613
        %v4615 = vmul.f32 %v4595, 1.442695
        %v4616 = vpow.pop %v4615
        %v4617 = vmul.f32 %v4596, 1.442695
        %v4618 = vpow.pop %v4617
        %v4619 = vmul.f32 %v4597, 1.442695
        %v4620 = vpow.pop %v4619
        %v4621 = vmul.f32 %v4598, 1.442695
        %v4622 = vpow.pop %v4621
        %v4623 = vmul.f32 %v4599, 1.442695
        %v4624 = vpow.pop %v4623
        %v4625 = vmul.f32 %v4600, 1.442695
        %v4626 = vpow.pop %v4625
        %v4627 = vmul.f32 %v4601, 1.442695
        %v4628 = vpow.pop %v4627
        %v4629 = vmul.f32 %v4602, 1.442695
        %v4630 = vpow.pop %v4629
        %v4631 = vmul.f32 %v4603, 1.442695
        %v4632 = vpow.pop %v4631
        %v4633 = vmul.f32 %v4604, 1.442695
        %v4634 = vpow.pop %v4633
        %v4635 = vmul.f32 %v4605, 1.442695
        %v4636 = vpow.pop %v4635
        %v4637 = vmul.f32 %v4606, 1.442695
        %v4638 = vpow.pop %v4637
        %v4639 = vsub.f32 1.0, %v4608
        %v4640 = vsub.f32 1.0, %v4610
        %v4641 = vsub.f32 1.0, %v4612
        %v4642 = vsub.f32 1.0, %v4614
        %v4643 = vsub.f32 1.0, %v4616
        %v4644 = vsub.f32 1.0, %v4618
        %v4645 = vsub.f32 1.0, %v4620
        %v4646 = vsub.f32 1.0, %v4622
        %v4647 = vsub.f32 1.0, %v4624
        %v4648 = vsub.f32 1.0, %v4626
        %v4649 = vsub.f32 1.0, %v4628
        %v4650 = vsub.f32 1.0, %v4630
        %v4651 = vsub.f32 1.0, %v4632
        %v4652 = vsub.f32 1.0, %v4634
        %v4653 = vsub.f32 1.0, %v4636
        %v4654 = vsub.f32 1.0, %v4638
        %v4655 = vlaneseq
        %v4656 = vand.u32 %v4655, 127
        %v4657 = vadd.s32 %v4656, 128
        %v4658 = vadd.s32 %v4656, 256
        %v4659 = vadd.s32 %v4656, 384
        %v4660 = vadd.s32 %v4656, 512
        %v4661 = vadd.s32 %v4656, 640
        %v4662 = vadd.s32 %v4656, 768
        %v4663 = vadd.s32 %v4656, 896
        %v4664 = vadd.s32 %v4656, 1024
        %v4665 = vadd.s32 %v4656, 1152
        %v4666 = vadd.s32 %v4656, 1280
        %v4667 = vadd.s32 %v4656, 1408
        %v4668 = vadd.s32 %v4656, 1536
        %v4669 = vadd.s32 %v4656, 1664
        %v4670 = vadd.s32 %v4656, 1792
        %v4671 = vadd.s32 %v4656, 1920
        %vm4672 = vcmp.ge.s32.totalorder %v4656, 128
        %vm4673 = vcmp.ge.s32.totalorder %v4657, 128
        %vm4674 = vcmp.ge.s32.totalorder %v4658, 128
        %vm4675 = vcmp.ge.s32.totalorder %v4659, 128
        %vm4676 = vcmp.ge.s32.totalorder %v4660, 128
        %vm4677 = vcmp.ge.s32.totalorder %v4661, 128
        %vm4678 = vcmp.ge.s32.totalorder %v4662, 128
        %vm4679 = vcmp.ge.s32.totalorder %v4663, 128
        %vm4680 = vcmp.ge.s32.totalorder %v4664, 128
        %vm4681 = vcmp.ge.s32.totalorder %v4665, 128
        %vm4682 = vcmp.ge.s32.totalorder %v4666, 128
        %vm4683 = vcmp.ge.s32.totalorder %v4667, 128
        %vm4684 = vcmp.ge.s32.totalorder %v4668, 128
        %vm4685 = vcmp.ge.s32.totalorder %v4669, 128
        %vm4686 = vcmp.ge.s32.totalorder %v4670, 128
        %vm4687 = vcmp.ge.s32.totalorder %v4671, 128
        %v4688 = vsel %vm4672, %v4606, 0.0
        %v4689 = vsel %vm4673, %v4591, 0.0
        %v4690 = vsel %vm4674, %v4592, 0.0
        %v4691 = vsel %vm4675, %v4593, 0.0
        %v4692 = vsel %vm4676, %v4594, 0.0
        %v4693 = vsel %vm4677, %v4595, 0.0
        %v4694 = vsel %vm4678, %v4596, 0.0
        %v4695 = vsel %vm4679, %v4597, 0.0
        %v4696 = vsel %vm4680, %v4598, 0.0
        %v4697 = vsel %vm4681, %v4599, 0.0
        %v4698 = vsel %vm4682, %v4600, 0.0
        %v4699 = vsel %vm4683, %v4601, 0.0
        %v4700 = vsel %vm4684, %v4602, 0.0
        %v4701 = vsel %vm4685, %v4603, 0.0
        %v4702 = vsel %vm4686, %v4604, 0.0
        %v4703 = vsel %vm4687, %v4605, 0.0
        %v4704 = vadd.f32 %v4591, %v4688
        %v4705 = vadd.f32 %v4592, %v4689
        %v4706 = vadd.f32 %v4593, %v4690
        %v4707 = vadd.f32 %v4594, %v4691
        %v4708 = vadd.f32 %v4595, %v4692
        %v4709 = vadd.f32 %v4596, %v4693
        %v4710 = vadd.f32 %v4597, %v4694
        %v4711 = vadd.f32 %v4598, %v4695
        %v4712 = vadd.f32 %v4599, %v4696
        %v4713 = vadd.f32 %v4600, %v4697
        %v4714 = vadd.f32 %v4601, %v4698
        %v4715 = vadd.f32 %v4602, %v4699
        %v4716 = vadd.f32 %v4603, %v4700
        %v4717 = vadd.f32 %v4604, %v4701
        %v4718 = vadd.f32 %v4605, %v4702
        %v4719 = vadd.f32 %v4606, %v4703
        %vm4720 = vcmp.ge.s32.totalorder %v4656, 256
        %vm4721 = vcmp.ge.s32.totalorder %v4657, 256
        %vm4722 = vcmp.ge.s32.totalorder %v4658, 256
        %vm4723 = vcmp.ge.s32.totalorder %v4659, 256
        %vm4724 = vcmp.ge.s32.totalorder %v4660, 256
        %vm4725 = vcmp.ge.s32.totalorder %v4661, 256
        %vm4726 = vcmp.ge.s32.totalorder %v4662, 256
        %vm4727 = vcmp.ge.s32.totalorder %v4663, 256
        %vm4728 = vcmp.ge.s32.totalorder %v4664, 256
        %vm4729 = vcmp.ge.s32.totalorder %v4665, 256
        %vm4730 = vcmp.ge.s32.totalorder %v4666, 256
        %vm4731 = vcmp.ge.s32.totalorder %v4667, 256
        %vm4732 = vcmp.ge.s32.totalorder %v4668, 256
        %vm4733 = vcmp.ge.s32.totalorder %v4669, 256
        %vm4734 = vcmp.ge.s32.totalorder %v4670, 256
        %vm4735 = vcmp.ge.s32.totalorder %v4671, 256
        %v4736 = vsel %vm4720, %v4718, 0.0
        %v4737 = vsel %vm4721, %v4719, 0.0
        %v4738 = vsel %vm4722, %v4704, 0.0
        %v4739 = vsel %vm4723, %v4705, 0.0
        %v4740 = vsel %vm4724, %v4706, 0.0
        %v4741 = vsel %vm4725, %v4707, 0.0
        %v4742 = vsel %vm4726, %v4708, 0.0
        %v4743 = vsel %vm4727, %v4709, 0.0
        %v4744 = vsel %vm4728, %v4710, 0.0
        %v4745 = vsel %vm4729, %v4711, 0.0
        %v4746 = vsel %vm4730, %v4712, 0.0
        %v4747 = vsel %vm4731, %v4713, 0.0
        %v4748 = vsel %vm4732, %v4714, 0.0
        %v4749 = vsel %vm4733, %v4715, 0.0
        %v4750 = vsel %vm4734, %v4716, 0.0
        %v4751 = vsel %vm4735, %v4717, 0.0
        %v4752 = vadd.f32 %v4704, %v4736
        %v4753 = vadd.f32 %v4705, %v4737
        %v4754 = vadd.f32 %v4706, %v4738
        %v4755 = vadd.f32 %v4707, %v4739
        %v4756 = vadd.f32 %v4708, %v4740
        %v4757 = vadd.f32 %v4709, %v4741
        %v4758 = vadd.f32 %v4710, %v4742
        %v4759 = vadd.f32 %v4711, %v4743
        %v4760 = vadd.f32 %v4712, %v4744
        %v4761 = vadd.f32 %v4713, %v4745
        %v4762 = vadd.f32 %v4714, %v4746
        %v4763 = vadd.f32 %v4715, %v4747
        %v4764 = vadd.f32 %v4716, %v4748
        %v4765 = vadd.f32 %v4717, %v4749
        %v4766 = vadd.f32 %v4718, %v4750
        %v4767 = vadd.f32 %v4719, %v4751
        %vm4768 = vcmp.ge.s32.totalorder %v4656, 512
        %vm4769 = vcmp.ge.s32.totalorder %v4657, 512
        %vm4770 = vcmp.ge.s32.totalorder %v4658, 512
        %vm4771 = vcmp.ge.s32.totalorder %v4659, 512
        %vm4772 = vcmp.ge.s32.totalorder %v4660, 512
        %vm4773 = vcmp.ge.s32.totalorder %v4661, 512
        %vm4774 = vcmp.ge.s32.totalorder %v4662, 512
        %vm4775 = vcmp.ge.s32.totalorder %v4663, 512
        %vm4776 = vcmp.ge.s32.totalorder %v4664, 512
        %vm4777 = vcmp.ge.s32.totalorder %v4665, 512
        %vm4778 = vcmp.ge.s32.totalorder %v4666, 512
        %vm4779 = vcmp.ge.s32.totalorder %v4667, 512
        %vm4780 = vcmp.ge.s32.totalorder %v4668, 512
        %vm4781 = vcmp.ge.s32.totalorder %v4669, 512
        %vm4782 = vcmp.ge.s32.totalorder %v4670, 512
        %vm4783 = vcmp.ge.s32.totalorder %v4671, 512
        %v4784 = vsel %vm4768, %v4764, 0.0
        %v4785 = vsel %vm4769, %v4765, 0.0
        %v4786 = vsel %vm4770, %v4766, 0.0
        %v4787 = vsel %vm4771, %v4767, 0.0
        %v4788 = vsel %vm4772, %v4752, 0.0
        %v4789 = vsel %vm4773, %v4753, 0.0
        %v4790 = vsel %vm4774, %v4754, 0.0
        %v4791 = vsel %vm4775, %v4755, 0.0
        %v4792 = vsel %vm4776, %v4756, 0.0
        %v4793 = vsel %vm4777, %v4757, 0.0
        %v4794 = vsel %vm4778, %v4758, 0.0
        %v4795 = vsel %vm4779, %v4759, 0.0
        %v4796 = vsel %vm4780, %v4760, 0.0
        %v4797 = vsel %vm4781, %v4761, 0.0
        %v4798 = vsel %vm4782, %v4762, 0.0
        %v4799 = vsel %vm4783, %v4763, 0.0
        %v4800 = vadd.f32 %v4752, %v4784
        %v4801 = vadd.f32 %v4753, %v4785
        %v4802 = vadd.f32 %v4754, %v4786
        %v4803 = vadd.f32 %v4755, %v4787
        %v4804 = vadd.f32 %v4756, %v4788
        %v4805 = vadd.f32 %v4757, %v4789
        %v4806 = vadd.f32 %v4758, %v4790
        %v4807 = vadd.f32 %v4759, %v4791
        %v4808 = vadd.f32 %v4760, %v4792
        %v4809 = vadd.f32 %v4761, %v4793
        %v4810 = vadd.f32 %v4762, %v4794
        %v4811 = vadd.f32 %v4763, %v4795
        %v4812 = vadd.f32 %v4764, %v4796
        %v4813 = vadd.f32 %v4765, %v4797
        %v4814 = vadd.f32 %v4766, %v4798
        %v4815 = vadd.f32 %v4767, %v4799
        %vm4816 = vcmp.ge.s32.totalorder %v4656, 1024
        %vm4817 = vcmp.ge.s32.totalorder %v4657, 1024
        %vm4818 = vcmp.ge.s32.totalorder %v4658, 1024
        %vm4819 = vcmp.ge.s32.totalorder %v4659, 1024
        %vm4820 = vcmp.ge.s32.totalorder %v4660, 1024
        %vm4821 = vcmp.ge.s32.totalorder %v4661, 1024
        %vm4822 = vcmp.ge.s32.totalorder %v4662, 1024
        %vm4823 = vcmp.ge.s32.totalorder %v4663, 1024
        %vm4824 = vcmp.ge.s32.totalorder %v4664, 1024
        %vm4825 = vcmp.ge.s32.totalorder %v4665, 1024
        %vm4826 = vcmp.ge.s32.totalorder %v4666, 1024
        %vm4827 = vcmp.ge.s32.totalorder %v4667, 1024
        %vm4828 = vcmp.ge.s32.totalorder %v4668, 1024
        %vm4829 = vcmp.ge.s32.totalorder %v4669, 1024
        %vm4830 = vcmp.ge.s32.totalorder %v4670, 1024
        %vm4831 = vcmp.ge.s32.totalorder %v4671, 1024
        %v4832 = vsel %vm4816, %v4808, 0.0
        %v4833 = vsel %vm4817, %v4809, 0.0
        %v4834 = vsel %vm4818, %v4810, 0.0
        %v4835 = vsel %vm4819, %v4811, 0.0
        %v4836 = vsel %vm4820, %v4812, 0.0
        %v4837 = vsel %vm4821, %v4813, 0.0
        %v4838 = vsel %vm4822, %v4814, 0.0
        %v4839 = vsel %vm4823, %v4815, 0.0
        %v4840 = vsel %vm4824, %v4800, 0.0
        %v4841 = vsel %vm4825, %v4801, 0.0
        %v4842 = vsel %vm4826, %v4802, 0.0
        %v4843 = vsel %vm4827, %v4803, 0.0
        %v4844 = vsel %vm4828, %v4804, 0.0
        %v4845 = vsel %vm4829, %v4805, 0.0
        %v4846 = vsel %vm4830, %v4806, 0.0
        %v4847 = vsel %vm4831, %v4807, 0.0
        %v4848 = vadd.f32 %v4800, %v4832
        %v4849 = vadd.f32 %v4801, %v4833
        %v4850 = vadd.f32 %v4802, %v4834
        %v4851 = vadd.f32 %v4803, %v4835
        %v4852 = vadd.f32 %v4804, %v4836
        %v4853 = vadd.f32 %v4805, %v4837
        %v4854 = vadd.f32 %v4806, %v4838
        %v4855 = vadd.f32 %v4807, %v4839
        %v4856 = vadd.f32 %v4808, %v4840
        %v4857 = vadd.f32 %v4809, %v4841
        %v4858 = vadd.f32 %v4810, %v4842
        %v4859 = vadd.f32 %v4811, %v4843
        %v4860 = vadd.f32 %v4812, %v4844
        %v4861 = vadd.f32 %v4813, %v4845
        %v4862 = vadd.f32 %v4814, %v4846
        %v4863 = vadd.f32 %v4815, %v4847
        %v4864 = vsub.f32 %v4848, %v4591
        %v4865 = vsub.f32 %v4849, %v4592
        %v4866 = vsub.f32 %v4850, %v4593
        %v4867 = vsub.f32 %v4851, %v4594
        %v4868 = vsub.f32 %v4852, %v4595
        %v4869 = vsub.f32 %v4853, %v4596
        %v4870 = vsub.f32 %v4854, %v4597
        %v4871 = vsub.f32 %v4855, %v4598
        %v4872 = vsub.f32 %v4856, %v4599
        %v4873 = vsub.f32 %v4857, %v4600
        %v4874 = vsub.f32 %v4858, %v4601
        %v4875 = vsub.f32 %v4859, %v4602
        %v4876 = vsub.f32 %v4860, %v4603
        %v4877 = vsub.f32 %v4861, %v4604
        %v4878 = vsub.f32 %v4862, %v4605
        %v4879 = vsub.f32 %v4863, %v4606
        %v4880 = vmul.f32 %v4864, 1.442695
        %v4881 = vpow.pop %v4880
        %v4882 = vmul.f32 %v4865, 1.442695
        %v4883 = vpow.pop %v4882
        %v4884 = vmul.f32 %v4866, 1.442695
        %v4885 = vpow.pop %v4884
        %v4886 = vmul.f32 %v4867, 1.442695
        %v4887 = vpow.pop %v4886
        %v4888 = vmul.f32 %v4868, 1.442695
        %v4889 = vpow.pop %v4888
        %v4890 = vmul.f32 %v4869, 1.442695
        %v4891 = vpow.pop %v4890
        %v4892 = vmul.f32 %v4870, 1.442695
        %v4893 = vpow.pop %v4892
        %v4894 = vmul.f32 %v4871, 1.442695
        %v4895 = vpow.pop %v4894
        %v4896 = vmul.f32 %v4872, 1.442695
        %v4897 = vpow.pop %v4896
        %v4898 = vmul.f32 %v4873, 1.442695
        %v4899 = vpow.pop %v4898
        %v4900 = vmul.f32 %v4874, 1.442695
        %v4901 = vpow.pop %v4900
        %v4902 = vmul.f32 %v4875, 1.442695
        %v4903 = vpow.pop %v4902
        %v4904 = vmul.f32 %v4876, 1.442695
        %v4905 = vpow.pop %v4904
        %v4906 = vmul.f32 %v4877, 1.442695
        %v4907 = vpow.pop %v4906
        %v4908 = vmul.f32 %v4878, 1.442695
        %v4909 = vpow.pop %v4908
        %v4910 = vmul.f32 %v4879, 1.442695
        %v4911 = vpow.pop %v4910
        %v4912 = vmul.f32 %v4639, %v4881
        %v4913 = vmul.f32 %v4640, %v4883
        %v4914 = vmul.f32 %v4641, %v4885
        %v4915 = vmul.f32 %v4642, %v4887
        %v4916 = vmul.f32 %v4643, %v4889
        %v4917 = vmul.f32 %v4644, %v4891
        %v4918 = vmul.f32 %v4645, %v4893
        %v4919 = vmul.f32 %v4646, %v4895
        %v4920 = vmul.f32 %v4647, %v4897
        %v4921 = vmul.f32 %v4648, %v4899
        %v4922 = vmul.f32 %v4649, %v4901
        %v4923 = vmul.f32 %v4650, %v4903
        %v4924 = vmul.f32 %v4651, %v4905
        %v4925 = vmul.f32 %v4652, %v4907
        %v4926 = vmul.f32 %v4653, %v4909
        %v4927 = vmul.f32 %v4654, %v4911
        %v4928 = vlaneseq
        %v4929 = vshrl.u32 %v4928, 7
        %v4930 = vsub.s32 0, %v4929
        %v4931 = vrot.slane %v4912, %v4930
        %v4932 = vlaneseq
        %v4933 = vshrl.u32 %v4932, 7
        %v4934 = vsub.s32 0, %v4933
        %v4935 = vrot.slane %v4913, %v4934
        %v4936 = vlaneseq
        %v4937 = vshrl.u32 %v4936, 7
        %v4938 = vsub.s32 0, %v4937
        %v4939 = vrot.slane %v4914, %v4938
        %v4940 = vlaneseq
        %v4941 = vshrl.u32 %v4940, 7
        %v4942 = vsub.s32 0, %v4941
        %v4943 = vrot.slane %v4915, %v4942
        %v4944 = vlaneseq
        %v4945 = vshrl.u32 %v4944, 7
        %v4946 = vsub.s32 0, %v4945
        %v4947 = vrot.slane %v4916, %v4946
        %v4948 = vlaneseq
        %v4949 = vshrl.u32 %v4948, 7
        %v4950 = vsub.s32 0, %v4949
        %v4951 = vrot.slane %v4917, %v4950
        %v4952 = vlaneseq
        %v4953 = vshrl.u32 %v4952, 7
        %v4954 = vsub.s32 0, %v4953
        %v4955 = vrot.slane %v4918, %v4954
        %v4956 = vlaneseq
        %v4957 = vshrl.u32 %v4956, 7
        %v4958 = vsub.s32 0, %v4957
        %v4959 = vrot.slane %v4919, %v4958
        %v4960 = vlaneseq
        %v4961 = vshrl.u32 %v4960, 7
        %v4962 = vsub.s32 0, %v4961
        %v4963 = vrot.slane %v4920, %v4962
        %v4964 = vlaneseq
        %v4965 = vshrl.u32 %v4964, 7
        %v4966 = vsub.s32 0, %v4965
        %v4967 = vrot.slane %v4921, %v4966
        %v4968 = vlaneseq
        %v4969 = vshrl.u32 %v4968, 7
        %v4970 = vsub.s32 0, %v4969
        %v4971 = vrot.slane %v4922, %v4970
        %v4972 = vlaneseq
        %v4973 = vshrl.u32 %v4972, 7
        %v4974 = vsub.s32 0, %v4973
        %v4975 = vrot.slane %v4923, %v4974
        %v4976 = vlaneseq
        %v4977 = vshrl.u32 %v4976, 7
        %v4978 = vsub.s32 0, %v4977
        %v4979 = vrot.slane %v4924, %v4978
        %v4980 = vlaneseq
        %v4981 = vshrl.u32 %v4980, 7
        %v4982 = vsub.s32 0, %v4981
        %v4983 = vrot.slane %v4925, %v4982
        %v4984 = vlaneseq
        %v4985 = vshrl.u32 %v4984, 7
        %v4986 = vsub.s32 0, %v4985
        %v4987 = vrot.slane %v4926, %v4986
        %v4988 = vlaneseq
        %v4989 = vshrl.u32 %v4988, 7
        %v4990 = vsub.s32 0, %v4989
        %v4991 = vrot.slane %v4927, %v4990
        %v4992 = vmul.f32 %v4460, %v4931
        %v4993 = vmul.f32 %v4462, %v4935
        %v4994 = vmul.f32 %v4464, %v4939
        %v4995 = vmul.f32 %v4466, %v4943
        %v4996 = vmul.f32 %v4468, %v4947
        %v4997 = vmul.f32 %v4470, %v4951
        %v4998 = vmul.f32 %v4472, %v4955
        %v4999 = vmul.f32 %v4474, %v4959
        %v5000 = vmul.f32 %v4476, %v4963
        %v5001 = vmul.f32 %v4478, %v4967
        %v5002 = vmul.f32 %v4480, %v4971
        %v5003 = vmul.f32 %v4482, %v4975
        %v5004 = vmul.f32 %v4484, %v4979
        %v5005 = vmul.f32 %v4486, %v4983
        %v5006 = vmul.f32 %v4488, %v4987
        %v5007 = vmul.f32 %v4490, %v4991
        %v5008 = vadd.f32 %v4992, %v4993
        %v5009 = vadd.f32 %v4994, %v4995
        %v5010 = vadd.f32 %v4996, %v4997
        %v5011 = vadd.f32 %v4998, %v4999
        %v5012 = vadd.f32 %v5000, %v5001
        %v5013 = vadd.f32 %v5002, %v5003
        %v5014 = vadd.f32 %v5004, %v5005
        %v5015 = vadd.f32 %v5006, %v5007
        %v5016 = vadd.f32 %v5008, %v5009
        %v5017 = vadd.f32 %v5010, %v5011
        %v5018 = vadd.f32 %v5012, %v5013
        %v5019 = vadd.f32 %v5014, %v5015
        %v5020 = vadd.f32 %v5016, %v5017
        %v5021 = vadd.f32 %v5018, %v5019
        %v5022 = vadd.f32 %v5020, %v5021
        %5023 = vst [vmem:[%s681] sm:$0x7] %v5022
        %v5040 = vcombine.low %v2293, %v2294
        %v5041 = vcombine.low %v2295, %v2296
        %v5042 = vcombine.low %v2297, %v2298
        %v5043 = vcombine.low %v2299, %v2300
        %v5045 = vunpack.c.l.s4 1966171168
        %v5046 = vunpack.c.0.s8 %v5045
        %v5047 = vlaneseq
        %v5048 = vshrl.u32 %v5047, 7
        %v5049 = vsub.s32 %v5046, %v5048
        %v5050 = vrot.slane %v5040, %v5049
        %v5052 = vunpack.c.l.s4 1966171168
        %v5053 = vunpack.c.0.s8 %v5052
        %v5054 = vlaneseq
        %v5055 = vshrl.u32 %v5054, 7
        %v5056 = vsub.s32 %v5053, %v5055
        %v5057 = vrot.slane %v5041, %v5056
        %v5059 = vunpack.c.l.s4 1966171168
        %v5060 = vunpack.c.0.s8 %v5059
        %v5061 = vlaneseq
        %v5062 = vshrl.u32 %v5061, 7
        %v5063 = vsub.s32 %v5060, %v5062
        %v5064 = vrot.slane %v5042, %v5063
        %v5066 = vunpack.c.l.s4 1966171168
        %v5067 = vunpack.c.0.s8 %v5066
        %v5068 = vlaneseq
        %v5069 = vshrl.u32 %v5068, 7
        %v5070 = vsub.s32 %v5067, %v5069
        %v5071 = vrot.slane %v5043, %v5070
        %v5072 = vcombine.low %v5050, %v5057
        %v5073 = vcombine.low %v5064, %v5071
        %v5075 = vunpack.c.l.s4 1966171168
        %v5076 = vunpack.c.0.s8 %v5075
        %v5077 = vlaneseq
        %v5078 = vshrl.u32 %v5077, 7
        %v5079 = vsub.s32 %v5076, %v5078
        %v5080 = vrot.slane %v5072, %v5079
        %v5082 = vunpack.c.l.s4 1966171168
        %v5083 = vunpack.c.0.s8 %v5082
        %v5084 = vlaneseq
        %v5085 = vshrl.u32 %v5084, 7
        %v5086 = vsub.s32 %v5083, %v5085
        %v5087 = vrot.slane %v5073, %v5086
        %v5088 = vcombine.low %v5080, %v5087
        %v5089 = vcombine.low %v2301, %v2302
        %v5090 = vcombine.low %v2303, %v2304
        %v5091 = vcombine.low %v2305, %v2306
        %v5092 = vcombine.low %v2307, %v2308
        %v5094 = vunpack.c.l.s4 1966171168
        %v5095 = vunpack.c.0.s8 %v5094
        %v5096 = vlaneseq
        %v5097 = vshrl.u32 %v5096, 7
        %v5098 = vsub.s32 %v5095, %v5097
        %v5099 = vrot.slane %v5089, %v5098
        %v5101 = vunpack.c.l.s4 1966171168
        %v5102 = vunpack.c.0.s8 %v5101
        %v5103 = vlaneseq
        %v5104 = vshrl.u32 %v5103, 7
        %v5105 = vsub.s32 %v5102, %v5104
        %v5106 = vrot.slane %v5090, %v5105
        %v5108 = vunpack.c.l.s4 1966171168
        %v5109 = vunpack.c.0.s8 %v5108
        %v5110 = vlaneseq
        %v5111 = vshrl.u32 %v5110, 7
        %v5112 = vsub.s32 %v5109, %v5111
        %v5113 = vrot.slane %v5091, %v5112
        %v5115 = vunpack.c.l.s4 1966171168
        %v5116 = vunpack.c.0.s8 %v5115
        %v5117 = vlaneseq
        %v5118 = vshrl.u32 %v5117, 7
        %v5119 = vsub.s32 %v5116, %v5118
        %v5120 = vrot.slane %v5092, %v5119
        %v5121 = vcombine.low %v5099, %v5106
        %v5122 = vcombine.low %v5113, %v5120
        %v5124 = vunpack.c.l.s4 1966171168
        %v5125 = vunpack.c.0.s8 %v5124
        %v5126 = vlaneseq
        %v5127 = vshrl.u32 %v5126, 7
        %v5128 = vsub.s32 %v5125, %v5127
        %v5129 = vrot.slane %v5121, %v5128
        %v5131 = vunpack.c.l.s4 1966171168
        %v5132 = vunpack.c.0.s8 %v5131
        %v5133 = vlaneseq
        %v5134 = vshrl.u32 %v5133, 7
        %v5135 = vsub.s32 %v5132, %v5134
        %v5136 = vrot.slane %v5122, %v5135
        %v5137 = vcombine.low %v5129, %v5136
        %5140 = vst [vmem:[%s698] sm:$0xff] %v5088
        %5141 = vst [vmem:[%s698 + $0x8] sm:$0xff] %v5137
        %s5142 = sand.u32 %s391, 1
        %s5143 = scalar_lea.sflag [#allocation5], %s5142
        %s5144 = sand.u32 %s391, 1
        %s5145 = smul.addr %s5144, 4
        %s5146 = scalar_lea.vmem [#allocation4], %s5145
        %s5147 = smul.u32 16, %s32
        %p5148 = scmp.lt.s32.totalorder %s5147, 31
        %s5149 = scalar_select %p5148, %s5147, 31
        %s5150 = scalar_lea.vmem %s17, %s5149
        // Predicated region
        $region131: #{instant_ngp_forward.1} parent=121 // pred_check
          %p5151 = pneg %p401
        $region132: #{instant_ngp_forward.1} parent=121 // pred_check_branch
          %5153 = sbr.rel (%p5151) target = $region134
        $region133: #{instant_ngp_forward.1} parent=121 // pred_region
          %s5155 = ssub.s32 64, 64
          %5156 = vsyncadd %s5143, %s5155
          %s5157 = smul.addr %s32, 64
          %s5158 = scalar_lea.hbm %s16, %s5157
          %s5160 = sshll.u32 %s5146, 4
          %s5161 = int_to_ptr.vmem [resolvable:$true] %s5160
          %5163 = dma.vmem_to_hbm [thread:$0]  %s5161, 64, %s5158, %s5143
        $region134: #{instant_ngp_forward.1} parent=121 // pred_fallthru
          _
        // Predicated region
        $region135: #{instant_ngp_forward.1} parent=121 // pred_check
          %p5164 = pneg %p427
        $region136: #{instant_ngp_forward.1} parent=121 // pred_check_branch
          %5166 = sbr.rel (%p5164) target = $region138
        $region137: #{instant_ngp_forward.1} parent=121 // pred_region
          %s5167 = smul.u32 16, %s32
        $region138: #{instant_ngp_forward.1} parent=121 // pred_fallthru
          _
      $region122: #{instant_ngp_forward.1} parent=5 // pred_fallthru
        _
      %p5168 = scmp.le.s32.totalorder 2, %s27
      // Predicated region
      $region139: #{instant_ngp_forward.1} parent=5 // pred_check
        %p5169 = pneg %p5168
      $region140: #{instant_ngp_forward.1} parent=5 // pred_check_branch
        %5171 = sbr.rel (%p5169) target = $region142
      $region141: #{instant_ngp_forward.1} parent=5 // pred_region
        %s5172 = ssub.s32 %s27, 2
        // Predicated region
        $region143: #{instant_ngp_forward.1} parent=141 // pred_check
          %p5173 = pneg %p407
        $region144: #{instant_ngp_forward.1} parent=141 // pred_check_branch
          %5175 = sbr.rel (%p5173) target = $region146
        $region145: #{instant_ngp_forward.1} parent=141 // pred_region
          %s5176 = sand.u32 %s392, 1
          %s5177 = scalar_lea.sflag [#allocation5], %s5176
          %s5178 = sand.u32 %s392, 1
          %s5179 = smul.addr %s5178, 4
          %s5180 = scalar_lea.vmem [#allocation4], %s5179
          %5181 = dma.done %s5177, 64
        $region146: #{instant_ngp_forward.1} parent=141 // pred_fallthru
          _
        // Predicated region
        $region147: #{instant_ngp_forward.1} parent=141 // pred_check
          %p5182 = pneg %p433
        $region148: #{instant_ngp_forward.1} parent=141 // pred_check_branch
          %5184 = sbr.rel (%p5182) target = $region150
        $region149: #{instant_ngp_forward.1} parent=141 // pred_region
          %s5185 = smul.u32 16, %s33
          %p5186 = scmp.lt.s32.totalorder %s5185, 31
          %s5187 = scalar_select %p5186, %s5185, 31
          %s5188 = scalar_lea.vmem %s17, %s5187
        $region150: #{instant_ngp_forward.1} parent=141 // pred_fallthru
          _
      $region142: #{instant_ngp_forward.1} parent=5 // pred_fallthru
        _
    $region6: #{instant_ngp_forward.1} parent=1 // loop_footer
      %s31 = sadd.s32 1, %s27
    $region7: #{instant_ngp_forward.1} parent=1 // loop_footer_branch
      %26 = sbr.rel target = $region3
    $region8: #{instant_ngp_forward.1} parent=1 // loop_exit
      _
    %5189 = vsyncpa [#allocation5], 1
    %s5190 = scalar_lea.sflag [#allocation5], 1
    %5191 = vsyncpa %s5190, 1

</llo_original>
